<compile_context>
chip_gen: v6e
topology: v6e:2x2x1
jax: 0.10.0
libtpu: 0.0.40
codegen_flags: <defaults>
</compile_context>

<pallas_src>
import math

import numpy as np
import jax
import jax.numpy as jnp
from jax.experimental import pallas as pl
from jax.experimental.pallas import tpu as pltpu

# ----------------------- config (small but structurally faithful) ------------
B = 2              # batch per forward
C = 3              # RGB (Normalize has 3-channel stats)
IMG = 16           # spatial size
PATCH = 8          # dino_vits8 patch size
GRIDP = IMG // PATCH
NPATCH = GRIDP * GRIDP
T = NPATCH + 1     # tokens incl. CLS
CPP = C * PATCH * PATCH          # 192 pixels per patch
KPAD = 256                       # lane-dense padded contraction dim (1 CLS col + 192 + zeros)
D = 64             # embed dim  (ViT-S: 384)
HEADS = 4          # ViT-S: 6
DH = D // HEADS
DEPTH = 2          # ViT-S: 12
MLP = 4 * D
LN_EPS = 1e-6
NIMG = 2 * B       # input batch + target batch processed by one kernel
NT = NIMG * T      # all tokens of all images in one slab


# ----------------------------- in-kernel helpers -----------------------------
def _ln(x, g, b):
    """LayerNorm over the last dim, f32 statistics (v5e-safe)."""
    mu = jnp.mean(x, axis=-1, keepdims=True)
    xc = x - mu
    var = jnp.mean(xc * xc, axis=-1, keepdims=True)
    return xc * jax.lax.rsqrt(var + LN_EPS) * g + b


def _gelu(x):
    # tanh-form GELU: the tanh goes to the EUP (free slot); differs from torch's exact-erf
    # GELU by ~1e-3 relative, acceptable for this loss scalar.
    c = math.sqrt(2.0 / math.pi)
    return 0.5 * x * (1.0 + jnp.tanh(c * (x + 0.044715 * x * x * x)))


def _mm(a, w):
    """bf16 MXU operands, f32 accumulation."""
    return jnp.dot(a.astype(jnp.bfloat16), w.astype(jnp.bfloat16),
                   preferred_element_type=jnp.float32)


# ------------------------------- fused kernel --------------------------------
def _vit_dino_kernel(tok_ref, mask_ref, pw_ref, biaspos_ref,
                     ln1g_ref, ln1b_ref, qkvw_ref, qkvb_ref, projw_ref, projb_ref,
                     ln2g_ref, ln2b_ref, fc1w_ref, fc1b_ref, fc2w_ref, fc2b_ref,
                     lng_ref, lnb_ref,
                     loss_ref):
    scale = 1.0 / math.sqrt(DH)

    # ---- patch embed + CLS token + positional embedding: one matmul over all images ----
    # tok row i*T is a one-hot CLS selector; Normalize is folded into pw / biaspos.
    x = _mm(tok_ref[...], pw_ref[...]) + biaspos_ref[...]          # (NT, D) f32
    mask = mask_ref[...]                                           # (NT, NT): 0 / -1e9

    for l in range(DEPTH):
        # ---------------- multi-head self-attention (block-diagonal over images) --------
        h = _ln(x, ln1g_ref[l], ln1b_ref[l])
        qkv = _mm(h, qkvw_ref[l]) + qkvb_ref[l]                    # (NT, 3D) in one matmul
        heads = []
        for hd in range(HEADS):
            q = qkv[:, hd * DH:(hd + 1) * DH]                      # static lane slices
            k = qkv[:, D + hd * DH:D + (hd + 1) * DH]
            v = qkv[:, 2 * D + hd * DH:2 * D + (hd + 1) * DH]
            # (NT, NT) scores; dim-1 contraction on k (tiny here; at real scale pre-store
            # k transposed to keep the XLU out of the inner loop).
            s = jax.lax.dot_general(q.astype(jnp.bfloat16), k.astype(jnp.bfloat16),
                                    (((1,), (1,)), ((), ())),
                                    preferred_element_type=jnp.float32) * scale + mask
            s = s - jnp.max(s, axis=-1, keepdims=True)
            p = jnp.exp(s)
            p = p * pl.reciprocal(jnp.sum(p, axis=-1, keepdims=True), approx=True)
            heads.append(_mm(p, v))                                # (NT, DH)
        o_cat = jnp.concatenate(heads, axis=-1)                    # (NT, D)
        x = x + _mm(o_cat, projw_ref[l]) + projb_ref[l]            # one proj matmul
        # ---------------------------- MLP ---------------------------
        h = _ln(x, ln2g_ref[l], ln2b_ref[l])
        h = _gelu(_mm(h, fc1w_ref[l]) + fc1b_ref[l])
        h = _mm(h, fc2w_ref[l]) + fc2b_ref[l]
        x = x + h

    # final LayerNorm on the CLS rows only (the loss consumes only the CLS embeddings)
    cls_rows = jnp.concatenate([x[i * T:i * T + 1, :] for i in range(NIMG)], axis=0)
    cls = _ln(cls_rows, lng_ref[...], lnb_ref[...])                # (NIMG, D)

    # MSE between input-batch and target-batch CLS embeddings (F.mse_loss, mean reduction)
    d = cls[0:B, :] - cls[B:NIMG, :]                               # (B, D)
    ssd = jnp.sum(d * d, axis=-1, keepdims=True)                   # (B, 1)
    loss_ref[...] = jnp.sum(ssd, axis=0, keepdims=True) * (1.0 / (B * D))


# ------------------------------ kernel wrapper --------------------------------
def _full_spec(shape):
    zeros = (0,) * len(shape)
    return pl.BlockSpec(shape, lambda *_: zeros)   # full array, single block


def pallas_vit_dino_loss(tokens, fp):
    in_specs = [
        _full_spec((NT, KPAD)),                               # all tokens, one slab
        _full_spec((NT, NT)),                                 # block-diagonal attention mask
        _full_spec((KPAD, D)),                                # pw_aug (CLS row + folded patch W)
        _full_spec((NT, D)),                                  # pos embed + folded patch bias
        _full_spec((DEPTH, 1, D)),                            # ln1_g
        _full_spec((DEPTH, 1, D)),                            # ln1_b
        _full_spec((DEPTH, D, 3 * D)),                        # qkv_w (one wide matmul / layer)
        _full_spec((DEPTH, 1, 3 * D)),                        # qkv_b
        _full_spec((DEPTH, D, D)),                            # proj_w
        _full_spec((DEPTH, 1, D)),                            # proj_b
        _full_spec((DEPTH, 1, D)),                            # ln2_g
        _full_spec((DEPTH, 1, D)),                            # ln2_b
        _full_spec((DEPTH, D, MLP)),                          # fc1_w
        _full_spec((DEPTH, 1, MLP)),                          # fc1_b
        _full_spec((DEPTH, MLP, D)),                          # fc2_w
        _full_spec((DEPTH, 1, D)),                            # fc2_b
        _full_spec((1, D)),                                   # final ln_g
        _full_spec((1, D)),                                   # final ln_b
    ]
    loss = pl.pallas_call(
        _vit_dino_kernel,
        grid=(1,),                                            # everything fused in one step
        in_specs=in_specs,
        out_specs=pl.BlockSpec((1, 1), lambda *_: (0, 0)),
        out_shape=jax.ShapeDtypeStruct((1, 1), jnp.float32),
        compiler_params=pltpu.CompilerParams(
            dimension_semantics=("arbitrary",)),              # single step; semantics moot
    )(tokens, fp["mask"], fp["pw_aug"], fp["biaspos"],
      fp["ln1_g"], fp["ln1_b"], fp["qkv_w"], fp["qkv_b"], fp["proj_w"], fp["proj_b"],
      fp["ln2_g"], fp["ln2_b"], fp["fc1_w"], fp["fc1_b"], fp["fc2_w"], fp["fc2_b"],
      fp["ln_g"], fp["ln_b"])
    return loss[0, 0]


# --------------------------------- model glue ---------------------------------
def make_tokens(img):
    """(b, C, IMG, IMG) raw image -> (b, T, KPAD) augmented patch matrix (pure layout glue).

    Column 0 is a one-hot CLS selector; columns 1..CPP hold raw (un-normalized) patch pixels
    in (c, kh, kw) order; the tail is zero padding to a lane-dense contraction dim (256).
    """
    b = img.shape[0]
    x = img.reshape(b, C, GRIDP, PATCH, GRIDP, PATCH)
    x = x.transpose(0, 2, 4, 1, 3, 5).reshape(b, NPATCH, CPP)
    patch_rows = jnp.pad(x, ((0, 0), (0, 0), (1, KPAD - CPP - 1)))
    cls_row = jnp.zeros((b, 1, KPAD), img.dtype).at[:, :, 0].set(1.0)
    return jnp.concatenate([cls_row, patch_rows], axis=1)


def vit_dino_loss(inp, tgt, fused_params):
    """MSE(vit(normalize(inp)).cls, vit(normalize(tgt)).cls) — single fused kernel launch."""
    tokens = jnp.concatenate([make_tokens(inp), make_tokens(tgt)], axis=0)   # (NIMG, T, KPAD)
    tokens = tokens.reshape(NT, KPAD)                                        # one slab
    return pallas_vit_dino_loss(tokens, fused_params)


# -------------------------- parameter init / preparation -----------------------
def init_params(key):
    def dense(k, shape, scale=0.02):
        return scale * jax.random.normal(k, shape, jnp.float32)

    keys = jax.random.split(key, 3 + DEPTH)
    params = {
        "patch_w": dense(keys[0], (CPP, D)),
        "patch_b": jnp.zeros((D,), jnp.float32),
        "cls_token": dense(keys[1], (1, 1, D)),
        "pos_embed": dense(keys[2], (1, T, D)),
        "ln_g": jnp.ones((D,), jnp.float32),
        "ln_b": jnp.zeros((D,), jnp.float32),
        "blocks": [],
    }
    for d in range(DEPTH):
        bk = jax.random.split(keys[3 + d], 4)
        params["blocks"].append({
            "ln1_g": jnp.ones((D,), jnp.float32), "ln1_b": jnp.zeros((D,), jnp.float32),
            "qkv_w": dense(bk[0], (D, 3 * D)), "qkv_b": jnp.zeros((3 * D,), jnp.float32),
            "proj_w": dense(bk[1], (D, D)), "proj_b": jnp.zeros((D,), jnp.float32),
            "ln2_g": jnp.ones((D,), jnp.float32), "ln2_b": jnp.zeros((D,), jnp.float32),
            "fc1_w": dense(bk[2], (D, MLP)), "fc1_b": jnp.zeros((MLP,), jnp.float32),
            "fc2_w": dense(bk[3], (MLP, D)), "fc2_b": jnp.zeros((D,), jnp.float32),
        })
    return params


def prepare_params(p):
    """One-time prep: fold Normalize into the patch embed, build the augmented CLS+patch
    weight, pre-tile the pos/bias term over all NIMG images, build the block-diagonal
    attention mask, stack per-depth weights, cast matmul weights to bf16."""
    mean = 2.0 * np.array([0.485, 0.456, 0.406]) - 1.0      # transforms.Normalize(2m-1, 2s)
    std = 2.0 * np.array([0.229, 0.224, 0.225])
    m_vec = jnp.asarray(np.repeat(mean, PATCH * PATCH), jnp.float32)        # (CPP,)
    s_vec = jnp.asarray(np.repeat(1.0 / std, PATCH * PATCH), jnp.float32)   # (CPP,)
    # conv(W, (x-m)*s) + b  ==  conv(diag(s)W, x) + (b - (m*s) @ W)
    w_fold = s_vec[:, None] * p["patch_w"]                                  # (CPP, D)
    b_fold = p["patch_b"] - (m_vec * s_vec) @ p["patch_w"]                  # (D,)

    pw_aug = jnp.zeros((KPAD, D), jnp.float32)
    pw_aug = pw_aug.at[0].set(p["cls_token"].reshape(D))      # CLS selector row
    pw_aug = pw_aug.at[1:CPP + 1].set(w_fold)

    pos = p["pos_embed"].reshape(T, D)
    biaspos = pos + jnp.concatenate(
        [jnp.zeros((1, D), jnp.float32), jnp.broadcast_to(b_fold, (NPATCH, D))], axis=0)
    biaspos = jnp.tile(biaspos, (NIMG, 1))                                  # (NT, D)

    # block-diagonal attention mask: each image attends only within its own T tokens
    img_id = np.arange(NT) // T
    mask = np.where(img_id[:, None] == img_id[None, :], 0.0, -1e9).astype(np.float32)

    def stack(name):
        return jnp.stack([blk[name] for blk in p["blocks"]], axis=0)

    bf16 = lambda a: a.astype(jnp.bfloat16)
    return {
        "mask": jnp.asarray(mask),
        "pw_aug": bf16(pw_aug),
        "biaspos": biaspos,
        "ln1_g": stack("ln1_g").reshape(DEPTH, 1, D),
        "ln1_b": stack("ln1_b").reshape(DEPTH, 1, D),
        "qkv_w": bf16(stack("qkv_w")),                         # (DEPTH, D, 3D), one matmul/layer
        "qkv_b": stack("qkv_b").reshape(DEPTH, 1, 3 * D),
        "proj_w": bf16(stack("proj_w")),                       # (DEPTH, D, D)
        "proj_b": stack("proj_b").reshape(DEPTH, 1, D),
        "ln2_g": stack("ln2_g").reshape(DEPTH, 1, D),
        "ln2_b": stack("ln2_b").reshape(DEPTH, 1, D),
        "fc1_w": bf16(stack("fc1_w")),
        "fc1_b": stack("fc1_b").reshape(DEPTH, 1, MLP),
        "fc2_w": bf16(stack("fc2_w")),
        "fc2_b": stack("fc2_b").reshape(DEPTH, 1, D),
        "ln_g": p["ln_g"].reshape(1, D),
        "ln_b": p["ln_b"].reshape(1, D),
    }


# ------------------------------------ main -------------------------------------
if __name__ == "__main__":
    key = jax.random.PRNGKey(0)
    kp, ki, kt = jax.random.split(key, 3)
    params = init_params(kp)
    fused = prepare_params(params)      # one-time (like loading a checkpoint)

    # inputs live in [-1, 1] (that is what the 2*mean-1 / 2*std scaling implies)
    inp = jax.random.uniform(ki, (B, C, IMG, IMG), jnp.float32, -1.0, 1.0)
    tgt = jax.random.uniform(kt, (B, C, IMG, IMG), jnp.float32, -1.0, 1.0)

    loss_fn = jax.jit(vit_dino_loss)
    loss = jax.block_until_ready(loss_fn(inp, tgt, fused))
    assert jnp.isfinite(loss), f"non-finite loss: {loss}"
    print("KERNEL_OK")
</pallas_src>

<mosaic_0001>
module attributes {stable_mosaic.version = 11 : i64} {
  func.func @_vit_dino_kernel(%arg0: i32, %arg1: memref<20x256xf32, #tpu.memory_space<vmem>>, %arg2: memref<20x20xf32, #tpu.memory_space<vmem>>, %arg3: memref<256x64xbf16, #tpu.memory_space<vmem>>, %arg4: memref<20x64xf32, #tpu.memory_space<vmem>>, %arg5: memref<2x1x64xf32, #tpu.memory_space<vmem>>, %arg6: memref<2x1x64xf32, #tpu.memory_space<vmem>>, %arg7: memref<2x64x192xbf16, #tpu.memory_space<vmem>>, %arg8: memref<2x1x192xf32, #tpu.memory_space<vmem>>, %arg9: memref<2x64x64xbf16, #tpu.memory_space<vmem>>, %arg10: memref<2x1x64xf32, #tpu.memory_space<vmem>>, %arg11: memref<2x1x64xf32, #tpu.memory_space<vmem>>, %arg12: memref<2x1x64xf32, #tpu.memory_space<vmem>>, %arg13: memref<2x64x256xbf16, #tpu.memory_space<vmem>>, %arg14: memref<2x1x256xf32, #tpu.memory_space<vmem>>, %arg15: memref<2x256x64xbf16, #tpu.memory_space<vmem>>, %arg16: memref<2x1x64xf32, #tpu.memory_space<vmem>>, %arg17: memref<1x64xf32, #tpu.memory_space<vmem>>, %arg18: memref<1x64xf32, #tpu.memory_space<vmem>>, %arg19: memref<1x1xf32, #tpu.memory_space<vmem>>) attributes {dimension_semantics = [#tpu.dimension_semantics<arbitrary>], iteration_bounds = array<i64: 1>, scalar_prefetch = 0 : i64, scratch_operands = 0 : i64, tpu.core_type = #tpu.core_type<tc>, window_params = [{pipeline_mode = #tpu.pipeline_mode<synchronous>, transform_indices = @transform_0, window_bounds = array<i64: 20, 256>}, {pipeline_mode = #tpu.pipeline_mode<synchronous>, transform_indices = @transform_1, window_bounds = array<i64: 20, 20>}, {pipeline_mode = #tpu.pipeline_mode<synchronous>, transform_indices = @transform_2, window_bounds = array<i64: 256, 64>}, {pipeline_mode = #tpu.pipeline_mode<synchronous>, transform_indices = @transform_3, window_bounds = array<i64: 20, 64>}, {pipeline_mode = #tpu.pipeline_mode<synchronous>, transform_indices = @transform_4, window_bounds = array<i64: 2, 1, 64>}, {pipeline_mode = #tpu.pipeline_mode<synchronous>, transform_indices = @transform_5, window_bounds = array<i64: 2, 1, 64>}, {pipeline_mode = #tpu.pipeline_mode<synchronous>, transform_indices = @transform_6, window_bounds = array<i64: 2, 64, 192>}, {pipeline_mode = #tpu.pipeline_mode<synchronous>, transform_indices = @transform_7, window_bounds = array<i64: 2, 1, 192>}, {pipeline_mode = #tpu.pipeline_mode<synchronous>, transform_indices = @transform_8, window_bounds = array<i64: 2, 64, 64>}, {pipeline_mode = #tpu.pipeline_mode<synchronous>, transform_indices = @transform_9, window_bounds = array<i64: 2, 1, 64>}, {pipeline_mode = #tpu.pipeline_mode<synchronous>, transform_indices = @transform_10, window_bounds = array<i64: 2, 1, 64>}, {pipeline_mode = #tpu.pipeline_mode<synchronous>, transform_indices = @transform_11, window_bounds = array<i64: 2, 1, 64>}, {pipeline_mode = #tpu.pipeline_mode<synchronous>, transform_indices = @transform_12, window_bounds = array<i64: 2, 64, 256>}, {pipeline_mode = #tpu.pipeline_mode<synchronous>, transform_indices = @transform_13, window_bounds = array<i64: 2, 1, 256>}, {pipeline_mode = #tpu.pipeline_mode<synchronous>, transform_indices = @transform_14, window_bounds = array<i64: 2, 256, 64>}, {pipeline_mode = #tpu.pipeline_mode<synchronous>, transform_indices = @transform_15, window_bounds = array<i64: 2, 1, 64>}, {pipeline_mode = #tpu.pipeline_mode<synchronous>, transform_indices = @transform_16, window_bounds = array<i64: 1, 64>}, {pipeline_mode = #tpu.pipeline_mode<synchronous>, transform_indices = @transform_17, window_bounds = array<i64: 1, 64>}, {pipeline_mode = #tpu.pipeline_mode<synchronous>, transform_indices = @transform_18, window_bounds = array<i64: 1, 1>}]} {
    %c0 = arith.constant 0 : index
    %c0_0 = arith.constant 0 : index
    %0 = vector.load %arg1[%c0, %c0_0] : memref<20x256xf32, #tpu.memory_space<vmem>>, vector<20x256xf32>
    %c0_1 = arith.constant 0 : index
    %c0_2 = arith.constant 0 : index
    %1 = vector.load %arg3[%c0_1, %c0_2] : memref<256x64xbf16, #tpu.memory_space<vmem>>, vector<256x64xbf16>
    %2 = arith.truncf %0 : vector<20x256xf32> to vector<20x256xbf16>
    %cst = arith.constant dense<0.000000e+00> : vector<20x64xf32>
    %3 = tpu.matmul %2, %1, %cst {dimension_numbers = #tpu.dot_dimension_numbers<[1], [0], [0], [1], [0, 0, 1, 1], [], []>} : vector<20x256xbf16>, vector<256x64xbf16>, vector<20x64xf32> -> vector<20x64xf32>
    %c0_3 = arith.constant 0 : index
    %c0_4 = arith.constant 0 : index
    %4 = vector.load %arg4[%c0_3, %c0_4] : memref<20x64xf32, #tpu.memory_space<vmem>>, vector<20x64xf32>
    %5 = arith.addf %3, %4 : vector<20x64xf32>
    %c0_5 = arith.constant 0 : index
    %c0_6 = arith.constant 0 : index
    %6 = vector.load %arg2[%c0_5, %c0_6] : memref<20x20xf32, #tpu.memory_space<vmem>>, vector<20x20xf32>
    %c0_7 = arith.constant 0 : index
    %c0_8 = arith.constant 0 : index
    %c0_9 = arith.constant 0 : index
    %7 = vector.load %arg5[%c0_7, %c0_8, %c0_9] : memref<2x1x64xf32, #tpu.memory_space<vmem>>, vector<1x1x64xf32>
    %8 = vector.shape_cast %7 : vector<1x1x64xf32> to vector<1x64xf32>
    %c0_10 = arith.constant 0 : index
    %c0_11 = arith.constant 0 : index
    %c0_12 = arith.constant 0 : index
    %9 = vector.load %arg6[%c0_10, %c0_11, %c0_12] : memref<2x1x64xf32, #tpu.memory_space<vmem>>, vector<1x1x64xf32>
    %10 = vector.shape_cast %9 : vector<1x1x64xf32> to vector<1x64xf32>
    %cst_13 = arith.constant dense<0.000000e+00> : vector<20xf32>
    %11 = vector.multi_reduction <add>, %5, %cst_13 [1] : vector<20x64xf32> to vector<20xf32>
    %12 = vector.shape_cast %11 : vector<20xf32> to vector<20x1xf32>
    %cst_14 = arith.constant 6.400000e+01 : f32
    %13 = vector.broadcast %cst_14 : f32 to vector<20x1xf32>
    %14 = arith.divf %12, %13 : vector<20x1xf32>
    %15 = vector.broadcast %14 : vector<20x1xf32> to vector<20x64xf32>
    %16 = arith.subf %5, %15 : vector<20x64xf32>
    %17 = arith.mulf %16, %16 : vector<20x64xf32>
    %cst_15 = arith.constant dense<0.000000e+00> : vector<20xf32>
    %18 = vector.multi_reduction <add>, %17, %cst_15 [1] : vector<20x64xf32> to vector<20xf32>
    %19 = vector.shape_cast %18 : vector<20xf32> to vector<20x1xf32>
    %cst_16 = arith.constant 6.400000e+01 : f32
    %20 = vector.broadcast %cst_16 : f32 to vector<20x1xf32>
    %21 = arith.divf %19, %20 : vector<20x1xf32>
    %cst_17 = arith.constant 9.99999997E-7 : f32
    %22 = vector.broadcast %cst_17 : f32 to vector<20x1xf32>
    %23 = arith.addf %21, %22 : vector<20x1xf32>
    %24 = math.rsqrt %23 : vector<20x1xf32>
    %25 = vector.broadcast %24 : vector<20x1xf32> to vector<20x64xf32>
    %26 = arith.mulf %16, %25 : vector<20x64xf32>
    %27 = vector.broadcast %8 : vector<1x64xf32> to vector<20x64xf32>
    %28 = arith.mulf %26, %27 : vector<20x64xf32>
    %29 = vector.broadcast %10 : vector<1x64xf32> to vector<20x64xf32>
    %30 = arith.addf %28, %29 : vector<20x64xf32>
    %c0_18 = arith.constant 0 : index
    %c0_19 = arith.constant 0 : index
    %c0_20 = arith.constant 0 : index
    %31 = vector.load %arg7[%c0_18, %c0_19, %c0_20] : memref<2x64x192xbf16, #tpu.memory_space<vmem>>, vector<1x64x192xbf16>
    %32 = vector.shape_cast %31 : vector<1x64x192xbf16> to vector<64x192xbf16>
    %33 = arith.truncf %30 : vector<20x64xf32> to vector<20x64xbf16>
    %cst_21 = arith.constant dense<0.000000e+00> : vector<20x192xf32>
    %34 = tpu.matmul %33, %32, %cst_21 {dimension_numbers = #tpu.dot_dimension_numbers<[1], [0], [0], [1], [0, 0, 1, 1], [], []>} : vector<20x64xbf16>, vector<64x192xbf16>, vector<20x192xf32> -> vector<20x192xf32>
    %c0_22 = arith.constant 0 : index
    %c0_23 = arith.constant 0 : index
    %c0_24 = arith.constant 0 : index
    %35 = vector.load %arg8[%c0_22, %c0_23, %c0_24] : memref<2x1x192xf32, #tpu.memory_space<vmem>>, vector<1x1x192xf32>
    %36 = vector.shape_cast %35 : vector<1x1x192xf32> to vector<1x192xf32>
    %37 = vector.broadcast %36 : vector<1x192xf32> to vector<20x192xf32>
    %38 = arith.addf %34, %37 : vector<20x192xf32>
    %39 = vector.extract_strided_slice %38 {offsets = [0, 0], sizes = [20, 16], strides = [1, 1]} : vector<20x192xf32> to vector<20x16xf32>
    %40 = vector.extract_strided_slice %38 {offsets = [0, 64], sizes = [20, 16], strides = [1, 1]} : vector<20x192xf32> to vector<20x16xf32>
    %41 = vector.extract_strided_slice %38 {offsets = [0, 128], sizes = [20, 16], strides = [1, 1]} : vector<20x192xf32> to vector<20x16xf32>
    %42 = arith.truncf %39 : vector<20x16xf32> to vector<20x16xbf16>
    %43 = arith.truncf %40 : vector<20x16xf32> to vector<20x16xbf16>
    %cst_25 = arith.constant dense<0.000000e+00> : vector<20x20xf32>
    %44 = tpu.matmul %42, %43, %cst_25 {dimension_numbers = #tpu.dot_dimension_numbers<[1], [1], [0], [0], [0, 0, 1, 0], [], []>} : vector<20x16xbf16>, vector<20x16xbf16>, vector<20x20xf32> -> vector<20x20xf32>
    %cst_26 = arith.constant 2.500000e-01 : f32
    %45 = vector.broadcast %cst_26 : f32 to vector<20x20xf32>
    %46 = arith.mulf %44, %45 : vector<20x20xf32>
    %47 = arith.addf %46, %6 : vector<20x20xf32>
    %cst_27 = arith.constant dense<0xFF800000> : vector<20xf32>
    %48 = vector.multi_reduction <maximumf>, %47, %cst_27 [1] : vector<20x20xf32> to vector<20xf32>
    %49 = vector.shape_cast %48 : vector<20xf32> to vector<20x1xf32>
    %50 = vector.broadcast %49 : vector<20x1xf32> to vector<20x20xf32>
    %51 = arith.subf %47, %50 : vector<20x20xf32>
    %52 = math.exp %51 : vector<20x20xf32>
    %cst_28 = arith.constant dense<0.000000e+00> : vector<20xf32>
    %53 = vector.multi_reduction <add>, %52, %cst_28 [1] : vector<20x20xf32> to vector<20xf32>
    %54 = vector.shape_cast %53 : vector<20xf32> to vector<20x1xf32>
    %55 = tpu.reciprocal %54 {approx = true} : vector<20x1xf32> -> vector<20x1xf32>
    %56 = vector.broadcast %55 : vector<20x1xf32> to vector<20x20xf32>
    %57 = arith.mulf %52, %56 : vector<20x20xf32>
    %58 = arith.truncf %57 : vector<20x20xf32> to vector<20x20xbf16>
    %59 = arith.truncf %41 : vector<20x16xf32> to vector<20x16xbf16>
    %cst_29 = arith.constant dense<0.000000e+00> : vector<20x16xf32>
    %60 = tpu.matmul %58, %59, %cst_29 {dimension_numbers = #tpu.dot_dimension_numbers<[1], [0], [0], [1], [0, 0, 1, 1], [], []>} : vector<20x20xbf16>, vector<20x16xbf16>, vector<20x16xf32> -> vector<20x16xf32>
    %61 = vector.extract_strided_slice %38 {offsets = [0, 16], sizes = [20, 16], strides = [1, 1]} : vector<20x192xf32> to vector<20x16xf32>
    %62 = vector.extract_strided_slice %38 {offsets = [0, 80], sizes = [20, 16], strides = [1, 1]} : vector<20x192xf32> to vector<20x16xf32>
    %63 = vector.extract_strided_slice %38 {offsets = [0, 144], sizes = [20, 16], strides = [1, 1]} : vector<20x192xf32> to vector<20x16xf32>
    %64 = arith.truncf %61 : vector<20x16xf32> to vector<20x16xbf16>
    %65 = arith.truncf %62 : vector<20x16xf32> to vector<20x16xbf16>
    %cst_30 = arith.constant dense<0.000000e+00> : vector<20x20xf32>
    %66 = tpu.matmul %64, %65, %cst_30 {dimension_numbers = #tpu.dot_dimension_numbers<[1], [1], [0], [0], [0, 0, 1, 0], [], []>} : vector<20x16xbf16>, vector<20x16xbf16>, vector<20x20xf32> -> vector<20x20xf32>
    %cst_31 = arith.constant 2.500000e-01 : f32
    %67 = vector.broadcast %cst_31 : f32 to vector<20x20xf32>
    %68 = arith.mulf %66, %67 : vector<20x20xf32>
    %69 = arith.addf %68, %6 : vector<20x20xf32>
    %cst_32 = arith.constant dense<0xFF800000> : vector<20xf32>
    %70 = vector.multi_reduction <maximumf>, %69, %cst_32 [1] : vector<20x20xf32> to vector<20xf32>
    %71 = vector.shape_cast %70 : vector<20xf32> to vector<20x1xf32>
    %72 = vector.broadcast %71 : vector<20x1xf32> to vector<20x20xf32>
    %73 = arith.subf %69, %72 : vector<20x20xf32>
    %74 = math.exp %73 : vector<20x20xf32>
    %cst_33 = arith.constant dense<0.000000e+00> : vector<20xf32>
    %75 = vector.multi_reduction <add>, %74, %cst_33 [1] : vector<20x20xf32> to vector<20xf32>
    %76 = vector.shape_cast %75 : vector<20xf32> to vector<20x1xf32>
    %77 = tpu.reciprocal %76 {approx = true} : vector<20x1xf32> -> vector<20x1xf32>
    %78 = vector.broadcast %77 : vector<20x1xf32> to vector<20x20xf32>
    %79 = arith.mulf %74, %78 : vector<20x20xf32>
    %80 = arith.truncf %79 : vector<20x20xf32> to vector<20x20xbf16>
    %81 = arith.truncf %63 : vector<20x16xf32> to vector<20x16xbf16>
    %cst_34 = arith.constant dense<0.000000e+00> : vector<20x16xf32>
    %82 = tpu.matmul %80, %81, %cst_34 {dimension_numbers = #tpu.dot_dimension_numbers<[1], [0], [0], [1], [0, 0, 1, 1], [], []>} : vector<20x20xbf16>, vector<20x16xbf16>, vector<20x16xf32> -> vector<20x16xf32>
    %83 = vector.extract_strided_slice %38 {offsets = [0, 32], sizes = [20, 16], strides = [1, 1]} : vector<20x192xf32> to vector<20x16xf32>
    %84 = vector.extract_strided_slice %38 {offsets = [0, 96], sizes = [20, 16], strides = [1, 1]} : vector<20x192xf32> to vector<20x16xf32>
    %85 = vector.extract_strided_slice %38 {offsets = [0, 160], sizes = [20, 16], strides = [1, 1]} : vector<20x192xf32> to vector<20x16xf32>
    %86 = arith.truncf %83 : vector<20x16xf32> to vector<20x16xbf16>
    %87 = arith.truncf %84 : vector<20x16xf32> to vector<20x16xbf16>
    %cst_35 = arith.constant dense<0.000000e+00> : vector<20x20xf32>
    %88 = tpu.matmul %86, %87, %cst_35 {dimension_numbers = #tpu.dot_dimension_numbers<[1], [1], [0], [0], [0, 0, 1, 0], [], []>} : vector<20x16xbf16>, vector<20x16xbf16>, vector<20x20xf32> -> vector<20x20xf32>
    %cst_36 = arith.constant 2.500000e-01 : f32
    %89 = vector.broadcast %cst_36 : f32 to vector<20x20xf32>
    %90 = arith.mulf %88, %89 : vector<20x20xf32>
    %91 = arith.addf %90, %6 : vector<20x20xf32>
    %cst_37 = arith.constant dense<0xFF800000> : vector<20xf32>
    %92 = vector.multi_reduction <maximumf>, %91, %cst_37 [1] : vector<20x20xf32> to vector<20xf32>
    %93 = vector.shape_cast %92 : vector<20xf32> to vector<20x1xf32>
    %94 = vector.broadcast %93 : vector<20x1xf32> to vector<20x20xf32>
    %95 = arith.subf %91, %94 : vector<20x20xf32>
    %96 = math.exp %95 : vector<20x20xf32>
    %cst_38 = arith.constant dense<0.000000e+00> : vector<20xf32>
    %97 = vector.multi_reduction <add>, %96, %cst_38 [1] : vector<20x20xf32> to vector<20xf32>
    %98 = vector.shape_cast %97 : vector<20xf32> to vector<20x1xf32>
    %99 = tpu.reciprocal %98 {approx = true} : vector<20x1xf32> -> vector<20x1xf32>
    %100 = vector.broadcast %99 : vector<20x1xf32> to vector<20x20xf32>
    %101 = arith.mulf %96, %100 : vector<20x20xf32>
    %102 = arith.truncf %101 : vector<20x20xf32> to vector<20x20xbf16>
    %103 = arith.truncf %85 : vector<20x16xf32> to vector<20x16xbf16>
    %cst_39 = arith.constant dense<0.000000e+00> : vector<20x16xf32>
    %104 = tpu.matmul %102, %103, %cst_39 {dimension_numbers = #tpu.dot_dimension_numbers<[1], [0], [0], [1], [0, 0, 1, 1], [], []>} : vector<20x20xbf16>, vector<20x16xbf16>, vector<20x16xf32> -> vector<20x16xf32>
    %105 = vector.extract_strided_slice %38 {offsets = [0, 48], sizes = [20, 16], strides = [1, 1]} : vector<20x192xf32> to vector<20x16xf32>
    %106 = vector.extract_strided_slice %38 {offsets = [0, 112], sizes = [20, 16], strides = [1, 1]} : vector<20x192xf32> to vector<20x16xf32>
    %107 = vector.extract_strided_slice %38 {offsets = [0, 176], sizes = [20, 16], strides = [1, 1]} : vector<20x192xf32> to vector<20x16xf32>
    %108 = arith.truncf %105 : vector<20x16xf32> to vector<20x16xbf16>
    %109 = arith.truncf %106 : vector<20x16xf32> to vector<20x16xbf16>
    %cst_40 = arith.constant dense<0.000000e+00> : vector<20x20xf32>
    %110 = tpu.matmul %108, %109, %cst_40 {dimension_numbers = #tpu.dot_dimension_numbers<[1], [1], [0], [0], [0, 0, 1, 0], [], []>} : vector<20x16xbf16>, vector<20x16xbf16>, vector<20x20xf32> -> vector<20x20xf32>
    %cst_41 = arith.constant 2.500000e-01 : f32
    %111 = vector.broadcast %cst_41 : f32 to vector<20x20xf32>
    %112 = arith.mulf %110, %111 : vector<20x20xf32>
    %113 = arith.addf %112, %6 : vector<20x20xf32>
    %cst_42 = arith.constant dense<0xFF800000> : vector<20xf32>
    %114 = vector.multi_reduction <maximumf>, %113, %cst_42 [1] : vector<20x20xf32> to vector<20xf32>
    %115 = vector.shape_cast %114 : vector<20xf32> to vector<20x1xf32>
    %116 = vector.broadcast %115 : vector<20x1xf32> to vector<20x20xf32>
    %117 = arith.subf %113, %116 : vector<20x20xf32>
    %118 = math.exp %117 : vector<20x20xf32>
    %cst_43 = arith.constant dense<0.000000e+00> : vector<20xf32>
    %119 = vector.multi_reduction <add>, %118, %cst_43 [1] : vector<20x20xf32> to vector<20xf32>
    %120 = vector.shape_cast %119 : vector<20xf32> to vector<20x1xf32>
    %121 = tpu.reciprocal %120 {approx = true} : vector<20x1xf32> -> vector<20x1xf32>
    %122 = vector.broadcast %121 : vector<20x1xf32> to vector<20x20xf32>
    %123 = arith.mulf %118, %122 : vector<20x20xf32>
    %124 = arith.truncf %123 : vector<20x20xf32> to vector<20x20xbf16>
    %125 = arith.truncf %107 : vector<20x16xf32> to vector<20x16xbf16>
    %cst_44 = arith.constant dense<0.000000e+00> : vector<20x16xf32>
    %126 = tpu.matmul %124, %125, %cst_44 {dimension_numbers = #tpu.dot_dimension_numbers<[1], [0], [0], [1], [0, 0, 1, 1], [], []>} : vector<20x20xbf16>, vector<20x16xbf16>, vector<20x16xf32> -> vector<20x16xf32>
    %127 = tpu.concatenate %60, %82, %104, %126 in 1 : vector<20x16xf32>, vector<20x16xf32>, vector<20x16xf32>, vector<20x16xf32> -> vector<20x64xf32>
    %c0_45 = arith.constant 0 : index
    %c0_46 = arith.constant 0 : index
    %c0_47 = arith.constant 0 : index
    %128 = vector.load %arg9[%c0_45, %c0_46, %c0_47] : memref<2x64x64xbf16, #tpu.memory_space<vmem>>, vector<1x64x64xbf16>
    %129 = vector.shape_cast %128 : vector<1x64x64xbf16> to vector<64x64xbf16>
    %130 = arith.truncf %127 : vector<20x64xf32> to vector<20x64xbf16>
    %cst_48 = arith.constant dense<0.000000e+00> : vector<20x64xf32>
    %131 = tpu.matmul %130, %129, %cst_48 {dimension_numbers = #tpu.dot_dimension_numbers<[1], [0], [0], [1], [0, 0, 1, 1], [], []>} : vector<20x64xbf16>, vector<64x64xbf16>, vector<20x64xf32> -> vector<20x64xf32>
    %132 = arith.addf %5, %131 : vector<20x64xf32>
    %c0_49 = arith.constant 0 : index
    %c0_50 = arith.constant 0 : index
    %c0_51 = arith.constant 0 : index
    %133 = vector.load %arg10[%c0_49, %c0_50, %c0_51] : memref<2x1x64xf32, #tpu.memory_space<vmem>>, vector<1x1x64xf32>
    %134 = vector.shape_cast %133 : vector<1x1x64xf32> to vector<1x64xf32>
    %135 = vector.broadcast %134 : vector<1x64xf32> to vector<20x64xf32>
    %136 = arith.addf %132, %135 : vector<20x64xf32>
    %c0_52 = arith.constant 0 : index
    %c0_53 = arith.constant 0 : index
    %c0_54 = arith.constant 0 : index
    %137 = vector.load %arg11[%c0_52, %c0_53, %c0_54] : memref<2x1x64xf32, #tpu.memory_space<vmem>>, vector<1x1x64xf32>
    %138 = vector.shape_cast %137 : vector<1x1x64xf32> to vector<1x64xf32>
    %c0_55 = arith.constant 0 : index
    %c0_56 = arith.constant 0 : index
    %c0_57 = arith.constant 0 : index
    %139 = vector.load %arg12[%c0_55, %c0_56, %c0_57] : memref<2x1x64xf32, #tpu.memory_space<vmem>>, vector<1x1x64xf32>
    %140 = vector.shape_cast %139 : vector<1x1x64xf32> to vector<1x64xf32>
    %cst_58 = arith.constant dense<0.000000e+00> : vector<20xf32>
    %141 = vector.multi_reduction <add>, %136, %cst_58 [1] : vector<20x64xf32> to vector<20xf32>
    %142 = vector.shape_cast %141 : vector<20xf32> to vector<20x1xf32>
    %cst_59 = arith.constant 6.400000e+01 : f32
    %143 = vector.broadcast %cst_59 : f32 to vector<20x1xf32>
    %144 = arith.divf %142, %143 : vector<20x1xf32>
    %145 = vector.broadcast %144 : vector<20x1xf32> to vector<20x64xf32>
    %146 = arith.subf %136, %145 : vector<20x64xf32>
    %147 = arith.mulf %146, %146 : vector<20x64xf32>
    %cst_60 = arith.constant dense<0.000000e+00> : vector<20xf32>
    %148 = vector.multi_reduction <add>, %147, %cst_60 [1] : vector<20x64xf32> to vector<20xf32>
    %149 = vector.shape_cast %148 : vector<20xf32> to vector<20x1xf32>
    %cst_61 = arith.constant 6.400000e+01 : f32
    %150 = vector.broadcast %cst_61 : f32 to vector<20x1xf32>
    %151 = arith.divf %149, %150 : vector<20x1xf32>
    %cst_62 = arith.constant 9.99999997E-7 : f32
    %152 = vector.broadcast %cst_62 : f32 to vector<20x1xf32>
    %153 = arith.addf %151, %152 : vector<20x1xf32>
    %154 = math.rsqrt %153 : vector<20x1xf32>
    %155 = vector.broadcast %154 : vector<20x1xf32> to vector<20x64xf32>
    %156 = arith.mulf %146, %155 : vector<20x64xf32>
    %157 = vector.broadcast %138 : vector<1x64xf32> to vector<20x64xf32>
    %158 = arith.mulf %156, %157 : vector<20x64xf32>
    %159 = vector.broadcast %140 : vector<1x64xf32> to vector<20x64xf32>
    %160 = arith.addf %158, %159 : vector<20x64xf32>
    %c0_63 = arith.constant 0 : index
    %c0_64 = arith.constant 0 : index
    %c0_65 = arith.constant 0 : index
    %161 = vector.load %arg13[%c0_63, %c0_64, %c0_65] : memref<2x64x256xbf16, #tpu.memory_space<vmem>>, vector<1x64x256xbf16>
    %162 = vector.shape_cast %161 : vector<1x64x256xbf16> to vector<64x256xbf16>
    %163 = arith.truncf %160 : vector<20x64xf32> to vector<20x64xbf16>
    %cst_66 = arith.constant dense<0.000000e+00> : vector<20x256xf32>
    %164 = tpu.matmul %163, %162, %cst_66 {dimension_numbers = #tpu.dot_dimension_numbers<[1], [0], [0], [1], [0, 0, 1, 1], [], []>} : vector<20x64xbf16>, vector<64x256xbf16>, vector<20x256xf32> -> vector<20x256xf32>
    %c0_67 = arith.constant 0 : index
    %c0_68 = arith.constant 0 : index
    %c0_69 = arith.constant 0 : index
    %165 = vector.load %arg14[%c0_67, %c0_68, %c0_69] : memref<2x1x256xf32, #tpu.memory_space<vmem>>, vector<1x1x256xf32>
    %166 = vector.shape_cast %165 : vector<1x1x256xf32> to vector<1x256xf32>
    %167 = vector.broadcast %166 : vector<1x256xf32> to vector<20x256xf32>
    %168 = arith.addf %164, %167 : vector<20x256xf32>
    %cst_70 = arith.constant 5.000000e-01 : f32
    %169 = vector.broadcast %cst_70 : f32 to vector<20x256xf32>
    %170 = arith.mulf %169, %168 : vector<20x256xf32>
    %cst_71 = arith.constant 4.471500e-02 : f32
    %171 = vector.broadcast %cst_71 : f32 to vector<20x256xf32>
    %172 = arith.mulf %171, %168 : vector<20x256xf32>
    %173 = arith.mulf %172, %168 : vector<20x256xf32>
    %174 = arith.mulf %173, %168 : vector<20x256xf32>
    %175 = arith.addf %168, %174 : vector<20x256xf32>
    %cst_72 = arith.constant 0.797884583 : f32
    %176 = vector.broadcast %cst_72 : f32 to vector<20x256xf32>
    %177 = arith.mulf %176, %175 : vector<20x256xf32>
    %178 = math.tanh %177 : vector<20x256xf32>
    %cst_73 = arith.constant 1.000000e+00 : f32
    %179 = vector.broadcast %cst_73 : f32 to vector<20x256xf32>
    %180 = arith.addf %179, %178 : vector<20x256xf32>
    %181 = arith.mulf %170, %180 : vector<20x256xf32>
    %c0_74 = arith.constant 0 : index
    %c0_75 = arith.constant 0 : index
    %c0_76 = arith.constant 0 : index
    %182 = vector.load %arg15[%c0_74, %c0_75, %c0_76] : memref<2x256x64xbf16, #tpu.memory_space<vmem>>, vector<1x256x64xbf16>
    %183 = vector.shape_cast %182 : vector<1x256x64xbf16> to vector<256x64xbf16>
    %184 = arith.truncf %181 : vector<20x256xf32> to vector<20x256xbf16>
    %cst_77 = arith.constant dense<0.000000e+00> : vector<20x64xf32>
    %185 = tpu.matmul %184, %183, %cst_77 {dimension_numbers = #tpu.dot_dimension_numbers<[1], [0], [0], [1], [0, 0, 1, 1], [], []>} : vector<20x256xbf16>, vector<256x64xbf16>, vector<20x64xf32> -> vector<20x64xf32>
    %c0_78 = arith.constant 0 : index
    %c0_79 = arith.constant 0 : index
    %c0_80 = arith.constant 0 : index
    %186 = vector.load %arg16[%c0_78, %c0_79, %c0_80] : memref<2x1x64xf32, #tpu.memory_space<vmem>>, vector<1x1x64xf32>
    %187 = vector.shape_cast %186 : vector<1x1x64xf32> to vector<1x64xf32>
    %188 = vector.broadcast %187 : vector<1x64xf32> to vector<20x64xf32>
    %189 = arith.addf %185, %188 : vector<20x64xf32>
    %190 = arith.addf %136, %189 : vector<20x64xf32>
    %c1 = arith.constant 1 : index
    %c0_81 = arith.constant 0 : index
    %c0_82 = arith.constant 0 : index
    %191 = vector.load %arg5[%c1, %c0_81, %c0_82] : memref<2x1x64xf32, #tpu.memory_space<vmem>>, vector<1x1x64xf32>
    %192 = vector.shape_cast %191 : vector<1x1x64xf32> to vector<1x64xf32>
    %c1_83 = arith.constant 1 : index
    %c0_84 = arith.constant 0 : index
    %c0_85 = arith.constant 0 : index
    %193 = vector.load %arg6[%c1_83, %c0_84, %c0_85] : memref<2x1x64xf32, #tpu.memory_space<vmem>>, vector<1x1x64xf32>
    %194 = vector.shape_cast %193 : vector<1x1x64xf32> to vector<1x64xf32>
    %cst_86 = arith.constant dense<0.000000e+00> : vector<20xf32>
    %195 = vector.multi_reduction <add>, %190, %cst_86 [1] : vector<20x64xf32> to vector<20xf32>
    %196 = vector.shape_cast %195 : vector<20xf32> to vector<20x1xf32>
    %cst_87 = arith.constant 6.400000e+01 : f32
    %197 = vector.broadcast %cst_87 : f32 to vector<20x1xf32>
    %198 = arith.divf %196, %197 : vector<20x1xf32>
    %199 = vector.broadcast %198 : vector<20x1xf32> to vector<20x64xf32>
    %200 = arith.subf %190, %199 : vector<20x64xf32>
    %201 = arith.mulf %200, %200 : vector<20x64xf32>
    %cst_88 = arith.constant dense<0.000000e+00> : vector<20xf32>
    %202 = vector.multi_reduction <add>, %201, %cst_88 [1] : vector<20x64xf32> to vector<20xf32>
    %203 = vector.shape_cast %202 : vector<20xf32> to vector<20x1xf32>
    %cst_89 = arith.constant 6.400000e+01 : f32
    %204 = vector.broadcast %cst_89 : f32 to vector<20x1xf32>
    %205 = arith.divf %203, %204 : vector<20x1xf32>
    %cst_90 = arith.constant 9.99999997E-7 : f32
    %206 = vector.broadcast %cst_90 : f32 to vector<20x1xf32>
    %207 = arith.addf %205, %206 : vector<20x1xf32>
    %208 = math.rsqrt %207 : vector<20x1xf32>
    %209 = vector.broadcast %208 : vector<20x1xf32> to vector<20x64xf32>
    %210 = arith.mulf %200, %209 : vector<20x64xf32>
    %211 = vector.broadcast %192 : vector<1x64xf32> to vector<20x64xf32>
    %212 = arith.mulf %210, %211 : vector<20x64xf32>
    %213 = vector.broadcast %194 : vector<1x64xf32> to vector<20x64xf32>
    %214 = arith.addf %212, %213 : vector<20x64xf32>
    %c1_91 = arith.constant 1 : index
    %c0_92 = arith.constant 0 : index
    %c0_93 = arith.constant 0 : index
    %215 = vector.load %arg7[%c1_91, %c0_92, %c0_93] : memref<2x64x192xbf16, #tpu.memory_space<vmem>>, vector<1x64x192xbf16>
    %216 = vector.shape_cast %215 : vector<1x64x192xbf16> to vector<64x192xbf16>
    %217 = arith.truncf %214 : vector<20x64xf32> to vector<20x64xbf16>
    %cst_94 = arith.constant dense<0.000000e+00> : vector<20x192xf32>
    %218 = tpu.matmul %217, %216, %cst_94 {dimension_numbers = #tpu.dot_dimension_numbers<[1], [0], [0], [1], [0, 0, 1, 1], [], []>} : vector<20x64xbf16>, vector<64x192xbf16>, vector<20x192xf32> -> vector<20x192xf32>
    %c1_95 = arith.constant 1 : index
    %c0_96 = arith.constant 0 : index
    %c0_97 = arith.constant 0 : index
    %219 = vector.load %arg8[%c1_95, %c0_96, %c0_97] : memref<2x1x192xf32, #tpu.memory_space<vmem>>, vector<1x1x192xf32>
    %220 = vector.shape_cast %219 : vector<1x1x192xf32> to vector<1x192xf32>
    %221 = vector.broadcast %220 : vector<1x192xf32> to vector<20x192xf32>
    %222 = arith.addf %218, %221 : vector<20x192xf32>
    %223 = vector.extract_strided_slice %222 {offsets = [0, 0], sizes = [20, 16], strides = [1, 1]} : vector<20x192xf32> to vector<20x16xf32>
    %224 = vector.extract_strided_slice %222 {offsets = [0, 64], sizes = [20, 16], strides = [1, 1]} : vector<20x192xf32> to vector<20x16xf32>
    %225 = vector.extract_strided_slice %222 {offsets = [0, 128], sizes = [20, 16], strides = [1, 1]} : vector<20x192xf32> to vector<20x16xf32>
    %226 = arith.truncf %223 : vector<20x16xf32> to vector<20x16xbf16>
    %227 = arith.truncf %224 : vector<20x16xf32> to vector<20x16xbf16>
    %cst_98 = arith.constant dense<0.000000e+00> : vector<20x20xf32>
    %228 = tpu.matmul %226, %227, %cst_98 {dimension_numbers = #tpu.dot_dimension_numbers<[1], [1], [0], [0], [0, 0, 1, 0], [], []>} : vector<20x16xbf16>, vector<20x16xbf16>, vector<20x20xf32> -> vector<20x20xf32>
    %cst_99 = arith.constant 2.500000e-01 : f32
    %229 = vector.broadcast %cst_99 : f32 to vector<20x20xf32>
    %230 = arith.mulf %228, %229 : vector<20x20xf32>
    %231 = arith.addf %230, %6 : vector<20x20xf32>
    %cst_100 = arith.constant dense<0xFF800000> : vector<20xf32>
    %232 = vector.multi_reduction <maximumf>, %231, %cst_100 [1] : vector<20x20xf32> to vector<20xf32>
    %233 = vector.shape_cast %232 : vector<20xf32> to vector<20x1xf32>
    %234 = vector.broadcast %233 : vector<20x1xf32> to vector<20x20xf32>
    %235 = arith.subf %231, %234 : vector<20x20xf32>
    %236 = math.exp %235 : vector<20x20xf32>
    %cst_101 = arith.constant dense<0.000000e+00> : vector<20xf32>
    %237 = vector.multi_reduction <add>, %236, %cst_101 [1] : vector<20x20xf32> to vector<20xf32>
    %238 = vector.shape_cast %237 : vector<20xf32> to vector<20x1xf32>
    %239 = tpu.reciprocal %238 {approx = true} : vector<20x1xf32> -> vector<20x1xf32>
    %240 = vector.broadcast %239 : vector<20x1xf32> to vector<20x20xf32>
    %241 = arith.mulf %236, %240 : vector<20x20xf32>
    %242 = arith.truncf %241 : vector<20x20xf32> to vector<20x20xbf16>
    %243 = arith.truncf %225 : vector<20x16xf32> to vector<20x16xbf16>
    %cst_102 = arith.constant dense<0.000000e+00> : vector<20x16xf32>
    %244 = tpu.matmul %242, %243, %cst_102 {dimension_numbers = #tpu.dot_dimension_numbers<[1], [0], [0], [1], [0, 0, 1, 1], [], []>} : vector<20x20xbf16>, vector<20x16xbf16>, vector<20x16xf32> -> vector<20x16xf32>
    %245 = vector.extract_strided_slice %222 {offsets = [0, 16], sizes = [20, 16], strides = [1, 1]} : vector<20x192xf32> to vector<20x16xf32>
    %246 = vector.extract_strided_slice %222 {offsets = [0, 80], sizes = [20, 16], strides = [1, 1]} : vector<20x192xf32> to vector<20x16xf32>
    %247 = vector.extract_strided_slice %222 {offsets = [0, 144], sizes = [20, 16], strides = [1, 1]} : vector<20x192xf32> to vector<20x16xf32>
    %248 = arith.truncf %245 : vector<20x16xf32> to vector<20x16xbf16>
    %249 = arith.truncf %246 : vector<20x16xf32> to vector<20x16xbf16>
    %cst_103 = arith.constant dense<0.000000e+00> : vector<20x20xf32>
    %250 = tpu.matmul %248, %249, %cst_103 {dimension_numbers = #tpu.dot_dimension_numbers<[1], [1], [0], [0], [0, 0, 1, 0], [], []>} : vector<20x16xbf16>, vector<20x16xbf16>, vector<20x20xf32> -> vector<20x20xf32>
    %cst_104 = arith.constant 2.500000e-01 : f32
    %251 = vector.broadcast %cst_104 : f32 to vector<20x20xf32>
    %252 = arith.mulf %250, %251 : vector<20x20xf32>
    %253 = arith.addf %252, %6 : vector<20x20xf32>
    %cst_105 = arith.constant dense<0xFF800000> : vector<20xf32>
    %254 = vector.multi_reduction <maximumf>, %253, %cst_105 [1] : vector<20x20xf32> to vector<20xf32>
    %255 = vector.shape_cast %254 : vector<20xf32> to vector<20x1xf32>
    %256 = vector.broadcast %255 : vector<20x1xf32> to vector<20x20xf32>
    %257 = arith.subf %253, %256 : vector<20x20xf32>
    %258 = math.exp %257 : vector<20x20xf32>
    %cst_106 = arith.constant dense<0.000000e+00> : vector<20xf32>
    %259 = vector.multi_reduction <add>, %258, %cst_106 [1] : vector<20x20xf32> to vector<20xf32>
    %260 = vector.shape_cast %259 : vector<20xf32> to vector<20x1xf32>
    %261 = tpu.reciprocal %260 {approx = true} : vector<20x1xf32> -> vector<20x1xf32>
    %262 = vector.broadcast %261 : vector<20x1xf32> to vector<20x20xf32>
    %263 = arith.mulf %258, %262 : vector<20x20xf32>
    %264 = arith.truncf %263 : vector<20x20xf32> to vector<20x20xbf16>
    %265 = arith.truncf %247 : vector<20x16xf32> to vector<20x16xbf16>
    %cst_107 = arith.constant dense<0.000000e+00> : vector<20x16xf32>
    %266 = tpu.matmul %264, %265, %cst_107 {dimension_numbers = #tpu.dot_dimension_numbers<[1], [0], [0], [1], [0, 0, 1, 1], [], []>} : vector<20x20xbf16>, vector<20x16xbf16>, vector<20x16xf32> -> vector<20x16xf32>
    %267 = vector.extract_strided_slice %222 {offsets = [0, 32], sizes = [20, 16], strides = [1, 1]} : vector<20x192xf32> to vector<20x16xf32>
    %268 = vector.extract_strided_slice %222 {offsets = [0, 96], sizes = [20, 16], strides = [1, 1]} : vector<20x192xf32> to vector<20x16xf32>
    %269 = vector.extract_strided_slice %222 {offsets = [0, 160], sizes = [20, 16], strides = [1, 1]} : vector<20x192xf32> to vector<20x16xf32>
    %270 = arith.truncf %267 : vector<20x16xf32> to vector<20x16xbf16>
    %271 = arith.truncf %268 : vector<20x16xf32> to vector<20x16xbf16>
    %cst_108 = arith.constant dense<0.000000e+00> : vector<20x20xf32>
    %272 = tpu.matmul %270, %271, %cst_108 {dimension_numbers = #tpu.dot_dimension_numbers<[1], [1], [0], [0], [0, 0, 1, 0], [], []>} : vector<20x16xbf16>, vector<20x16xbf16>, vector<20x20xf32> -> vector<20x20xf32>
    %cst_109 = arith.constant 2.500000e-01 : f32
    %273 = vector.broadcast %cst_109 : f32 to vector<20x20xf32>
    %274 = arith.mulf %272, %273 : vector<20x20xf32>
    %275 = arith.addf %274, %6 : vector<20x20xf32>
    %cst_110 = arith.constant dense<0xFF800000> : vector<20xf32>
    %276 = vector.multi_reduction <maximumf>, %275, %cst_110 [1] : vector<20x20xf32> to vector<20xf32>
    %277 = vector.shape_cast %276 : vector<20xf32> to vector<20x1xf32>
    %278 = vector.broadcast %277 : vector<20x1xf32> to vector<20x20xf32>
    %279 = arith.subf %275, %278 : vector<20x20xf32>
    %280 = math.exp %279 : vector<20x20xf32>
    %cst_111 = arith.constant dense<0.000000e+00> : vector<20xf32>
    %281 = vector.multi_reduction <add>, %280, %cst_111 [1] : vector<20x20xf32> to vector<20xf32>
    %282 = vector.shape_cast %281 : vector<20xf32> to vector<20x1xf32>
    %283 = tpu.reciprocal %282 {approx = true} : vector<20x1xf32> -> vector<20x1xf32>
    %284 = vector.broadcast %283 : vector<20x1xf32> to vector<20x20xf32>
    %285 = arith.mulf %280, %284 : vector<20x20xf32>
    %286 = arith.truncf %285 : vector<20x20xf32> to vector<20x20xbf16>
    %287 = arith.truncf %269 : vector<20x16xf32> to vector<20x16xbf16>
    %cst_112 = arith.constant dense<0.000000e+00> : vector<20x16xf32>
    %288 = tpu.matmul %286, %287, %cst_112 {dimension_numbers = #tpu.dot_dimension_numbers<[1], [0], [0], [1], [0, 0, 1, 1], [], []>} : vector<20x20xbf16>, vector<20x16xbf16>, vector<20x16xf32> -> vector<20x16xf32>
    %289 = vector.extract_strided_slice %222 {offsets = [0, 48], sizes = [20, 16], strides = [1, 1]} : vector<20x192xf32> to vector<20x16xf32>
    %290 = vector.extract_strided_slice %222 {offsets = [0, 112], sizes = [20, 16], strides = [1, 1]} : vector<20x192xf32> to vector<20x16xf32>
    %291 = vector.extract_strided_slice %222 {offsets = [0, 176], sizes = [20, 16], strides = [1, 1]} : vector<20x192xf32> to vector<20x16xf32>
    %292 = arith.truncf %289 : vector<20x16xf32> to vector<20x16xbf16>
    %293 = arith.truncf %290 : vector<20x16xf32> to vector<20x16xbf16>
    %cst_113 = arith.constant dense<0.000000e+00> : vector<20x20xf32>
    %294 = tpu.matmul %292, %293, %cst_113 {dimension_numbers = #tpu.dot_dimension_numbers<[1], [1], [0], [0], [0, 0, 1, 0], [], []>} : vector<20x16xbf16>, vector<20x16xbf16>, vector<20x20xf32> -> vector<20x20xf32>
    %cst_114 = arith.constant 2.500000e-01 : f32
    %295 = vector.broadcast %cst_114 : f32 to vector<20x20xf32>
    %296 = arith.mulf %294, %295 : vector<20x20xf32>
    %297 = arith.addf %296, %6 : vector<20x20xf32>
    %cst_115 = arith.constant dense<0xFF800000> : vector<20xf32>
    %298 = vector.multi_reduction <maximumf>, %297, %cst_115 [1] : vector<20x20xf32> to vector<20xf32>
    %299 = vector.shape_cast %298 : vector<20xf32> to vector<20x1xf32>
    %300 = vector.broadcast %299 : vector<20x1xf32> to vector<20x20xf32>
    %301 = arith.subf %297, %300 : vector<20x20xf32>
    %302 = math.exp %301 : vector<20x20xf32>
    %cst_116 = arith.constant dense<0.000000e+00> : vector<20xf32>
    %303 = vector.multi_reduction <add>, %302, %cst_116 [1] : vector<20x20xf32> to vector<20xf32>
    %304 = vector.shape_cast %303 : vector<20xf32> to vector<20x1xf32>
    %305 = tpu.reciprocal %304 {approx = true} : vector<20x1xf32> -> vector<20x1xf32>
    %306 = vector.broadcast %305 : vector<20x1xf32> to vector<20x20xf32>
    %307 = arith.mulf %302, %306 : vector<20x20xf32>
    %308 = arith.truncf %307 : vector<20x20xf32> to vector<20x20xbf16>
    %309 = arith.truncf %291 : vector<20x16xf32> to vector<20x16xbf16>
    %cst_117 = arith.constant dense<0.000000e+00> : vector<20x16xf32>
    %310 = tpu.matmul %308, %309, %cst_117 {dimension_numbers = #tpu.dot_dimension_numbers<[1], [0], [0], [1], [0, 0, 1, 1], [], []>} : vector<20x20xbf16>, vector<20x16xbf16>, vector<20x16xf32> -> vector<20x16xf32>
    %311 = tpu.concatenate %244, %266, %288, %310 in 1 : vector<20x16xf32>, vector<20x16xf32>, vector<20x16xf32>, vector<20x16xf32> -> vector<20x64xf32>
    %c1_118 = arith.constant 1 : index
    %c0_119 = arith.constant 0 : index
    %c0_120 = arith.constant 0 : index
    %312 = vector.load %arg9[%c1_118, %c0_119, %c0_120] : memref<2x64x64xbf16, #tpu.memory_space<vmem>>, vector<1x64x64xbf16>
    %313 = vector.shape_cast %312 : vector<1x64x64xbf16> to vector<64x64xbf16>
    %314 = arith.truncf %311 : vector<20x64xf32> to vector<20x64xbf16>
    %cst_121 = arith.constant dense<0.000000e+00> : vector<20x64xf32>
    %315 = tpu.matmul %314, %313, %cst_121 {dimension_numbers = #tpu.dot_dimension_numbers<[1], [0], [0], [1], [0, 0, 1, 1], [], []>} : vector<20x64xbf16>, vector<64x64xbf16>, vector<20x64xf32> -> vector<20x64xf32>
    %316 = arith.addf %190, %315 : vector<20x64xf32>
    %c1_122 = arith.constant 1 : index
    %c0_123 = arith.constant 0 : index
    %c0_124 = arith.constant 0 : index
    %317 = vector.load %arg10[%c1_122, %c0_123, %c0_124] : memref<2x1x64xf32, #tpu.memory_space<vmem>>, vector<1x1x64xf32>
    %318 = vector.shape_cast %317 : vector<1x1x64xf32> to vector<1x64xf32>
    %319 = vector.broadcast %318 : vector<1x64xf32> to vector<20x64xf32>
    %320 = arith.addf %316, %319 : vector<20x64xf32>
    %c1_125 = arith.constant 1 : index
    %c0_126 = arith.constant 0 : index
    %c0_127 = arith.constant 0 : index
    %321 = vector.load %arg11[%c1_125, %c0_126, %c0_127] : memref<2x1x64xf32, #tpu.memory_space<vmem>>, vector<1x1x64xf32>
    %322 = vector.shape_cast %321 : vector<1x1x64xf32> to vector<1x64xf32>
    %c1_128 = arith.constant 1 : index
    %c0_129 = arith.constant 0 : index
    %c0_130 = arith.constant 0 : index
    %323 = vector.load %arg12[%c1_128, %c0_129, %c0_130] : memref<2x1x64xf32, #tpu.memory_space<vmem>>, vector<1x1x64xf32>
    %324 = vector.shape_cast %323 : vector<1x1x64xf32> to vector<1x64xf32>
    %cst_131 = arith.constant dense<0.000000e+00> : vector<20xf32>
    %325 = vector.multi_reduction <add>, %320, %cst_131 [1] : vector<20x64xf32> to vector<20xf32>
    %326 = vector.shape_cast %325 : vector<20xf32> to vector<20x1xf32>
    %cst_132 = arith.constant 6.400000e+01 : f32
    %327 = vector.broadcast %cst_132 : f32 to vector<20x1xf32>
    %328 = arith.divf %326, %327 : vector<20x1xf32>
    %329 = vector.broadcast %328 : vector<20x1xf32> to vector<20x64xf32>
    %330 = arith.subf %320, %329 : vector<20x64xf32>
    %331 = arith.mulf %330, %330 : vector<20x64xf32>
    %cst_133 = arith.constant dense<0.000000e+00> : vector<20xf32>
    %332 = vector.multi_reduction <add>, %331, %cst_133 [1] : vector<20x64xf32> to vector<20xf32>
    %333 = vector.shape_cast %332 : vector<20xf32> to vector<20x1xf32>
    %cst_134 = arith.constant 6.400000e+01 : f32
    %334 = vector.broadcast %cst_134 : f32 to vector<20x1xf32>
    %335 = arith.divf %333, %334 : vector<20x1xf32>
    %cst_135 = arith.constant 9.99999997E-7 : f32
    %336 = vector.broadcast %cst_135 : f32 to vector<20x1xf32>
    %337 = arith.addf %335, %336 : vector<20x1xf32>
    %338 = math.rsqrt %337 : vector<20x1xf32>
    %339 = vector.broadcast %338 : vector<20x1xf32> to vector<20x64xf32>
    %340 = arith.mulf %330, %339 : vector<20x64xf32>
    %341 = vector.broadcast %322 : vector<1x64xf32> to vector<20x64xf32>
    %342 = arith.mulf %340, %341 : vector<20x64xf32>
    %343 = vector.broadcast %324 : vector<1x64xf32> to vector<20x64xf32>
    %344 = arith.addf %342, %343 : vector<20x64xf32>
    %c1_136 = arith.constant 1 : index
    %c0_137 = arith.constant 0 : index
    %c0_138 = arith.constant 0 : index
    %345 = vector.load %arg13[%c1_136, %c0_137, %c0_138] : memref<2x64x256xbf16, #tpu.memory_space<vmem>>, vector<1x64x256xbf16>
    %346 = vector.shape_cast %345 : vector<1x64x256xbf16> to vector<64x256xbf16>
    %347 = arith.truncf %344 : vector<20x64xf32> to vector<20x64xbf16>
    %cst_139 = arith.constant dense<0.000000e+00> : vector<20x256xf32>
    %348 = tpu.matmul %347, %346, %cst_139 {dimension_numbers = #tpu.dot_dimension_numbers<[1], [0], [0], [1], [0, 0, 1, 1], [], []>} : vector<20x64xbf16>, vector<64x256xbf16>, vector<20x256xf32> -> vector<20x256xf32>
    %c1_140 = arith.constant 1 : index
    %c0_141 = arith.constant 0 : index
    %c0_142 = arith.constant 0 : index
    %349 = vector.load %arg14[%c1_140, %c0_141, %c0_142] : memref<2x1x256xf32, #tpu.memory_space<vmem>>, vector<1x1x256xf32>
    %350 = vector.shape_cast %349 : vector<1x1x256xf32> to vector<1x256xf32>
    %351 = vector.broadcast %350 : vector<1x256xf32> to vector<20x256xf32>
    %352 = arith.addf %348, %351 : vector<20x256xf32>
    %cst_143 = arith.constant 5.000000e-01 : f32
    %353 = vector.broadcast %cst_143 : f32 to vector<20x256xf32>
    %354 = arith.mulf %353, %352 : vector<20x256xf32>
    %cst_144 = arith.constant 4.471500e-02 : f32
    %355 = vector.broadcast %cst_144 : f32 to vector<20x256xf32>
    %356 = arith.mulf %355, %352 : vector<20x256xf32>
    %357 = arith.mulf %356, %352 : vector<20x256xf32>
    %358 = arith.mulf %357, %352 : vector<20x256xf32>
    %359 = arith.addf %352, %358 : vector<20x256xf32>
    %cst_145 = arith.constant 0.797884583 : f32
    %360 = vector.broadcast %cst_145 : f32 to vector<20x256xf32>
    %361 = arith.mulf %360, %359 : vector<20x256xf32>
    %362 = math.tanh %361 : vector<20x256xf32>
    %cst_146 = arith.constant 1.000000e+00 : f32
    %363 = vector.broadcast %cst_146 : f32 to vector<20x256xf32>
    %364 = arith.addf %363, %362 : vector<20x256xf32>
    %365 = arith.mulf %354, %364 : vector<20x256xf32>
    %c1_147 = arith.constant 1 : index
    %c0_148 = arith.constant 0 : index
    %c0_149 = arith.constant 0 : index
    %366 = vector.load %arg15[%c1_147, %c0_148, %c0_149] : memref<2x256x64xbf16, #tpu.memory_space<vmem>>, vector<1x256x64xbf16>
    %367 = vector.shape_cast %366 : vector<1x256x64xbf16> to vector<256x64xbf16>
    %368 = arith.truncf %365 : vector<20x256xf32> to vector<20x256xbf16>
    %cst_150 = arith.constant dense<0.000000e+00> : vector<20x64xf32>
    %369 = tpu.matmul %368, %367, %cst_150 {dimension_numbers = #tpu.dot_dimension_numbers<[1], [0], [0], [1], [0, 0, 1, 1], [], []>} : vector<20x256xbf16>, vector<256x64xbf16>, vector<20x64xf32> -> vector<20x64xf32>
    %c1_151 = arith.constant 1 : index
    %c0_152 = arith.constant 0 : index
    %c0_153 = arith.constant 0 : index
    %370 = vector.load %arg16[%c1_151, %c0_152, %c0_153] : memref<2x1x64xf32, #tpu.memory_space<vmem>>, vector<1x1x64xf32>
    %371 = vector.shape_cast %370 : vector<1x1x64xf32> to vector<1x64xf32>
    %372 = vector.broadcast %371 : vector<1x64xf32> to vector<20x64xf32>
    %373 = arith.addf %369, %372 : vector<20x64xf32>
    %374 = arith.addf %320, %373 : vector<20x64xf32>
    %375 = vector.extract_strided_slice %374 {offsets = [0, 0], sizes = [1, 64], strides = [1, 1]} : vector<20x64xf32> to vector<1x64xf32>
    %376 = vector.extract_strided_slice %374 {offsets = [5, 0], sizes = [1, 64], strides = [1, 1]} : vector<20x64xf32> to vector<1x64xf32>
    %377 = vector.extract_strided_slice %374 {offsets = [10, 0], sizes = [1, 64], strides = [1, 1]} : vector<20x64xf32> to vector<1x64xf32>
    %378 = vector.extract_strided_slice %374 {offsets = [15, 0], sizes = [1, 64], strides = [1, 1]} : vector<20x64xf32> to vector<1x64xf32>
    %379 = tpu.concatenate %375, %376, %377, %378 in 0 : vector<1x64xf32>, vector<1x64xf32>, vector<1x64xf32>, vector<1x64xf32> -> vector<4x64xf32>
    %c0_154 = arith.constant 0 : index
    %c0_155 = arith.constant 0 : index
    %380 = vector.load %arg17[%c0_154, %c0_155] : memref<1x64xf32, #tpu.memory_space<vmem>>, vector<1x64xf32>
    %c0_156 = arith.constant 0 : index
    %c0_157 = arith.constant 0 : index
    %381 = vector.load %arg18[%c0_156, %c0_157] : memref<1x64xf32, #tpu.memory_space<vmem>>, vector<1x64xf32>
    %cst_158 = arith.constant dense<0.000000e+00> : vector<4xf32>
    %382 = vector.multi_reduction <add>, %379, %cst_158 [1] : vector<4x64xf32> to vector<4xf32>
    %383 = vector.shape_cast %382 : vector<4xf32> to vector<4x1xf32>
    %cst_159 = arith.constant 6.400000e+01 : f32
    %384 = vector.broadcast %cst_159 : f32 to vector<4x1xf32>
    %385 = arith.divf %383, %384 : vector<4x1xf32>
    %386 = vector.broadcast %385 : vector<4x1xf32> to vector<4x64xf32>
    %387 = arith.subf %379, %386 : vector<4x64xf32>
    %388 = arith.mulf %387, %387 : vector<4x64xf32>
    %cst_160 = arith.constant dense<0.000000e+00> : vector<4xf32>
    %389 = vector.multi_reduction <add>, %388, %cst_160 [1] : vector<4x64xf32> to vector<4xf32>
    %390 = vector.shape_cast %389 : vector<4xf32> to vector<4x1xf32>
    %cst_161 = arith.constant 6.400000e+01 : f32
    %391 = vector.broadcast %cst_161 : f32 to vector<4x1xf32>
    %392 = arith.divf %390, %391 : vector<4x1xf32>
    %cst_162 = arith.constant 9.99999997E-7 : f32
    %393 = vector.broadcast %cst_162 : f32 to vector<4x1xf32>
    %394 = arith.addf %392, %393 : vector<4x1xf32>
    %395 = math.rsqrt %394 : vector<4x1xf32>
    %396 = vector.broadcast %395 : vector<4x1xf32> to vector<4x64xf32>
    %397 = arith.mulf %387, %396 : vector<4x64xf32>
    %398 = vector.broadcast %380 : vector<1x64xf32> to vector<4x64xf32>
    %399 = arith.mulf %397, %398 : vector<4x64xf32>
    %400 = vector.broadcast %381 : vector<1x64xf32> to vector<4x64xf32>
    %401 = arith.addf %399, %400 : vector<4x64xf32>
    %402 = vector.extract_strided_slice %401 {offsets = [0, 0], sizes = [2, 64], strides = [1, 1]} : vector<4x64xf32> to vector<2x64xf32>
    %403 = vector.extract_strided_slice %401 {offsets = [2, 0], sizes = [2, 64], strides = [1, 1]} : vector<4x64xf32> to vector<2x64xf32>
    %404 = arith.subf %402, %403 : vector<2x64xf32>
    %405 = arith.mulf %404, %404 : vector<2x64xf32>
    %cst_163 = arith.constant dense<0.000000e+00> : vector<2xf32>
    %406 = vector.multi_reduction <add>, %405, %cst_163 [1] : vector<2x64xf32> to vector<2xf32>
    %407 = vector.shape_cast %406 : vector<2xf32> to vector<2x1xf32>
    %cst_164 = arith.constant dense<0.000000e+00> : vector<1xf32>
    %408 = vector.multi_reduction <add>, %407, %cst_164 [0] : vector<2x1xf32> to vector<1xf32>
    %409 = vector.shape_cast %408 : vector<1xf32> to vector<1x1xf32>
    %cst_165 = arith.constant 7.812500e-03 : f32
    %410 = vector.broadcast %cst_165 : f32 to vector<1x1xf32>
    %411 = arith.mulf %409, %410 : vector<1x1xf32>
    %c0_166 = arith.constant 0 : index
    %c0_167 = arith.constant 0 : index
    %412 = vector.load %arg19[%c0_166, %c0_167] : memref<1x1xf32, #tpu.memory_space<vmem>>, vector<1x1xf32>
    tpu.vector_store %arg19[%c0_166, %c0_167], %411 {strides = array<i32>} : memref<1x1xf32, #tpu.memory_space<vmem>>, vector<1x1xf32>,
    return
  }
  func.func @transform_0(%arg0: i32) -> (i32, i32) {
    %c0_i32 = arith.constant 0 : i32
    %c0_i32_0 = arith.constant 0 : i32
    %c0_i32_1 = arith.constant 0 : i32
    return %c0_i32, %c0_i32_0 : i32, i32
  }
  func.func @transform_1(%arg0: i32) -> (i32, i32) {
    %c0_i32 = arith.constant 0 : i32
    %c0_i32_0 = arith.constant 0 : i32
    %c0_i32_1 = arith.constant 0 : i32
    return %c0_i32, %c0_i32_0 : i32, i32
  }
  func.func @transform_2(%arg0: i32) -> (i32, i32) {
    %c0_i32 = arith.constant 0 : i32
    %c0_i32_0 = arith.constant 0 : i32
    %c0_i32_1 = arith.constant 0 : i32
    return %c0_i32, %c0_i32_0 : i32, i32
  }
  func.func @transform_3(%arg0: i32) -> (i32, i32) {
    %c0_i32 = arith.constant 0 : i32
    %c0_i32_0 = arith.constant 0 : i32
    %c0_i32_1 = arith.constant 0 : i32
    return %c0_i32, %c0_i32_0 : i32, i32
  }
  func.func @transform_4(%arg0: i32) -> (i32, i32, i32) {
    %c0_i32 = arith.constant 0 : i32
    %c0_i32_0 = arith.constant 0 : i32
    %c0_i32_1 = arith.constant 0 : i32
    %c0_i32_2 = arith.constant 0 : i32
    return %c0_i32, %c0_i32_0, %c0_i32_1 : i32, i32, i32
  }
  func.func @transform_5(%arg0: i32) -> (i32, i32, i32) {
    %c0_i32 = arith.constant 0 : i32
    %c0_i32_0 = arith.constant 0 : i32
    %c0_i32_1 = arith.constant 0 : i32
    %c0_i32_2 = arith.constant 0 : i32
    return %c0_i32, %c0_i32_0, %c0_i32_1 : i32, i32, i32
  }
  func.func @transform_6(%arg0: i32) -> (i32, i32, i32) {
    %c0_i32 = arith.constant 0 : i32
    %c0_i32_0 = arith.constant 0 : i32
    %c0_i32_1 = arith.constant 0 : i32
    %c0_i32_2 = arith.constant 0 : i32
    return %c0_i32, %c0_i32_0, %c0_i32_1 : i32, i32, i32
  }
  func.func @transform_7(%arg0: i32) -> (i32, i32, i32) {
    %c0_i32 = arith.constant 0 : i32
    %c0_i32_0 = arith.constant 0 : i32
    %c0_i32_1 = arith.constant 0 : i32
    %c0_i32_2 = arith.constant 0 : i32
    return %c0_i32, %c0_i32_0, %c0_i32_1 : i32, i32, i32
  }
  func.func @transform_8(%arg0: i32) -> (i32, i32, i32) {
    %c0_i32 = arith.constant 0 : i32
    %c0_i32_0 = arith.constant 0 : i32
    %c0_i32_1 = arith.constant 0 : i32
    %c0_i32_2 = arith.constant 0 : i32
    return %c0_i32, %c0_i32_0, %c0_i32_1 : i32, i32, i32
  }
  func.func @transform_9(%arg0: i32) -> (i32, i32, i32) {
    %c0_i32 = arith.constant 0 : i32
    %c0_i32_0 = arith.constant 0 : i32
    %c0_i32_1 = arith.constant 0 : i32
    %c0_i32_2 = arith.constant 0 : i32
    return %c0_i32, %c0_i32_0, %c0_i32_1 : i32, i32, i32
  }
  func.func @transform_10(%arg0: i32) -> (i32, i32, i32) {
    %c0_i32 = arith.constant 0 : i32
    %c0_i32_0 = arith.constant 0 : i32
    %c0_i32_1 = arith.constant 0 : i32
    %c0_i32_2 = arith.constant 0 : i32
    return %c0_i32, %c0_i32_0, %c0_i32_1 : i32, i32, i32
  }
  func.func @transform_11(%arg0: i32) -> (i32, i32, i32) {
    %c0_i32 = arith.constant 0 : i32
    %c0_i32_0 = arith.constant 0 : i32
    %c0_i32_1 = arith.constant 0 : i32
    %c0_i32_2 = arith.constant 0 : i32
    return %c0_i32, %c0_i32_0, %c0_i32_1 : i32, i32, i32
  }
  func.func @transform_12(%arg0: i32) -> (i32, i32, i32) {
    %c0_i32 = arith.constant 0 : i32
    %c0_i32_0 = arith.constant 0 : i32
    %c0_i32_1 = arith.constant 0 : i32
    %c0_i32_2 = arith.constant 0 : i32
    return %c0_i32, %c0_i32_0, %c0_i32_1 : i32, i32, i32
  }
  func.func @transform_13(%arg0: i32) -> (i32, i32, i32) {
    %c0_i32 = arith.constant 0 : i32
    %c0_i32_0 = arith.constant 0 : i32
    %c0_i32_1 = arith.constant 0 : i32
    %c0_i32_2 = arith.constant 0 : i32
    return %c0_i32, %c0_i32_0, %c0_i32_1 : i32, i32, i32
  }
  func.func @transform_14(%arg0: i32) -> (i32, i32, i32) {
    %c0_i32 = arith.constant 0 : i32
    %c0_i32_0 = arith.constant 0 : i32
    %c0_i32_1 = arith.constant 0 : i32
    %c0_i32_2 = arith.constant 0 : i32
    return %c0_i32, %c0_i32_0, %c0_i32_1 : i32, i32, i32
  }
  func.func @transform_15(%arg0: i32) -> (i32, i32, i32) {
    %c0_i32 = arith.constant 0 : i32
    %c0_i32_0 = arith.constant 0 : i32
    %c0_i32_1 = arith.constant 0 : i32
    %c0_i32_2 = arith.constant 0 : i32
    return %c0_i32, %c0_i32_0, %c0_i32_1 : i32, i32, i32
  }
  func.func @transform_16(%arg0: i32) -> (i32, i32) {
    %c0_i32 = arith.constant 0 : i32
    %c0_i32_0 = arith.constant 0 : i32
    %c0_i32_1 = arith.constant 0 : i32
    return %c0_i32, %c0_i32_0 : i32, i32
  }
  func.func @transform_17(%arg0: i32) -> (i32, i32) {
    %c0_i32 = arith.constant 0 : i32
    %c0_i32_0 = arith.constant 0 : i32
    %c0_i32_1 = arith.constant 0 : i32
    return %c0_i32, %c0_i32_0 : i32, i32
  }
  func.func @transform_18(%arg0: i32) -> (i32, i32) {
    %c0_i32 = arith.constant 0 : i32
    %c0_i32_0 = arith.constant 0 : i32
    %c0_i32_1 = arith.constant 0 : i32
    return %c0_i32, %c0_i32_0 : i32, i32
  }
}

</mosaic_0001>

<llo_original>
// kernel: vit_dino_loss.1
$region0: #{vit_dino_loss.1}
  #allocation0 [shape = 'u32[]', space=smem, size = 0x4, offset = 0x4, fixed_abs, tag = 'smem constant byte address 0x4 - core index']
  #allocation1 [shape = 'u32[144,128]{1,0:T(1,128)}', space=vmem, size = 0x12000, scoped, tag = 'internal scratch']
  %s0 = inlined_call_operand.vmem [shape: f32[20,256], index: 0, kind: input, shape index: {}]
  %s1 = inlined_call_operand.vmem [shape: f32[20,20], index: 1, kind: input, shape index: {}]
  %s2 = inlined_call_operand.vmem [shape: bf16[256,64], index: 2, kind: input, shape index: {}]
  %s3 = inlined_call_operand.vmem [shape: f32[20,64], index: 3, kind: input, shape index: {}]
  %s4 = inlined_call_operand.vmem [shape: f32[2,1,64], index: 4, kind: input, shape index: {}]
  %s5 = inlined_call_operand.vmem [shape: f32[2,1,64], index: 5, kind: input, shape index: {}]
  %s6 = inlined_call_operand.vmem [shape: bf16[2,64,192], index: 6, kind: input, shape index: {}]
  %s7 = inlined_call_operand.vmem [shape: f32[2,1,192], index: 7, kind: input, shape index: {}]
  %s8 = inlined_call_operand.vmem [shape: bf16[2,64,64], index: 8, kind: input, shape index: {}]
  %s9 = inlined_call_operand.vmem [shape: f32[2,1,64], index: 9, kind: input, shape index: {}]
  %s10 = inlined_call_operand.vmem [shape: f32[2,1,64], index: 10, kind: input, shape index: {}]
  %s11 = inlined_call_operand.vmem [shape: f32[2,1,64], index: 11, kind: input, shape index: {}]
  %s12 = inlined_call_operand.vmem [shape: bf16[2,64,256], index: 12, kind: input, shape index: {}]
  %s13 = inlined_call_operand.vmem [shape: f32[2,1,256], index: 13, kind: input, shape index: {}]
  %s14 = inlined_call_operand.vmem [shape: bf16[2,256,64], index: 14, kind: input, shape index: {}]
  %s15 = inlined_call_operand.vmem [shape: f32[2,1,64], index: 15, kind: input, shape index: {}]
  %s16 = inlined_call_operand.vmem [shape: f32[1,64], index: 16, kind: input, shape index: {}]
  %s17 = inlined_call_operand.vmem [shape: f32[1,64], index: 17, kind: input, shape index: {}]
  %s18 = inlined_call_operand.hbm [shape: f32[1,1], index: 18, kind: output, shape index: {}]
  %s19 = sld [smem:[#allocation0]]
  $region82: #{vit_dino_loss.1} parent=0
    _
  %s21 = ssub.s32 1, %s19
  %s22 = scalar_select 0, %s21, %s19
  $region1: #{vit_dino_loss.1} parent=0
    #allocation2 [shape = 'u8[512]{0}', space=vmem, size = 0x400, scoped, tag = 'output window, operand 0, single buffered']
    #allocation3 [shape = 's32[1]{0}', space=sflag, size = 0x4, scoped, tag = 'scoped memory for vit_dino_loss.1']
    %23 = vsyncpa [#allocation3], 0
    // Predicated region
    $region2: #{vit_dino_loss.1} parent=1 // pred_check
      _
    $region3: #{vit_dino_loss.1} parent=1 // pred_check_branch
      %25 = sbr.rel (0) target = $region5
    $region4: #{vit_dino_loss.1} parent=1 // pred_region
      _
    $region5: #{vit_dino_loss.1} parent=1 // pred_fallthru
      _
    // Predicated region
    $region6: #{vit_dino_loss.1} parent=1 // pred_check
      _
    $region7: #{vit_dino_loss.1} parent=1 // pred_check_branch
      %27 = sbr.rel (0) target = $region9
    $region8: #{vit_dino_loss.1} parent=1 // pred_region
      _
    $region9: #{vit_dino_loss.1} parent=1 // pred_fallthru
      _
    // Predicated region
    $region10: #{vit_dino_loss.1} parent=1 // pred_check
      _
    $region11: #{vit_dino_loss.1} parent=1 // pred_check_branch
      %29 = sbr.rel (0) target = $region13
    $region12: #{vit_dino_loss.1} parent=1 // pred_region
      _
    $region13: #{vit_dino_loss.1} parent=1 // pred_fallthru
      _
    // Predicated region
    $region14: #{vit_dino_loss.1} parent=1 // pred_check
      _
    $region15: #{vit_dino_loss.1} parent=1 // pred_check_branch
      %31 = sbr.rel (0) target = $region17
    $region16: #{vit_dino_loss.1} parent=1 // pred_region
      _
    $region17: #{vit_dino_loss.1} parent=1 // pred_fallthru
      _
    // Predicated region
    $region18: #{vit_dino_loss.1} parent=1 // pred_check
      _
    $region19: #{vit_dino_loss.1} parent=1 // pred_check_branch
      %33 = sbr.rel (0) target = $region21
    $region20: #{vit_dino_loss.1} parent=1 // pred_region
      _
    $region21: #{vit_dino_loss.1} parent=1 // pred_fallthru
      _
    // Predicated region
    $region22: #{vit_dino_loss.1} parent=1 // pred_check
      _
    $region23: #{vit_dino_loss.1} parent=1 // pred_check_branch
      %35 = sbr.rel (0) target = $region25
    $region24: #{vit_dino_loss.1} parent=1 // pred_region
      _
    $region25: #{vit_dino_loss.1} parent=1 // pred_fallthru
      _
    // Predicated region
    $region26: #{vit_dino_loss.1} parent=1 // pred_check
      _
    $region27: #{vit_dino_loss.1} parent=1 // pred_check_branch
      %37 = sbr.rel (0) target = $region29
    $region28: #{vit_dino_loss.1} parent=1 // pred_region
      _
    $region29: #{vit_dino_loss.1} parent=1 // pred_fallthru
      _
    // Predicated region
    $region30: #{vit_dino_loss.1} parent=1 // pred_check
      _
    $region31: #{vit_dino_loss.1} parent=1 // pred_check_branch
      %39 = sbr.rel (0) target = $region33
    $region32: #{vit_dino_loss.1} parent=1 // pred_region
      _
    $region33: #{vit_dino_loss.1} parent=1 // pred_fallthru
      _
    // Predicated region
    $region34: #{vit_dino_loss.1} parent=1 // pred_check
      _
    $region35: #{vit_dino_loss.1} parent=1 // pred_check_branch
      %41 = sbr.rel (0) target = $region37
    $region36: #{vit_dino_loss.1} parent=1 // pred_region
      _
    $region37: #{vit_dino_loss.1} parent=1 // pred_fallthru
      _
    // Predicated region
    $region38: #{vit_dino_loss.1} parent=1 // pred_check
      _
    $region39: #{vit_dino_loss.1} parent=1 // pred_check_branch
      %43 = sbr.rel (0) target = $region41
    $region40: #{vit_dino_loss.1} parent=1 // pred_region
      _
    $region41: #{vit_dino_loss.1} parent=1 // pred_fallthru
      _
    // Predicated region
    $region42: #{vit_dino_loss.1} parent=1 // pred_check
      _
    $region43: #{vit_dino_loss.1} parent=1 // pred_check_branch
      %45 = sbr.rel (0) target = $region45
    $region44: #{vit_dino_loss.1} parent=1 // pred_region
      _
    $region45: #{vit_dino_loss.1} parent=1 // pred_fallthru
      _
    // Predicated region
    $region46: #{vit_dino_loss.1} parent=1 // pred_check
      _
    $region47: #{vit_dino_loss.1} parent=1 // pred_check_branch
      %47 = sbr.rel (0) target = $region49
    $region48: #{vit_dino_loss.1} parent=1 // pred_region
      _
    $region49: #{vit_dino_loss.1} parent=1 // pred_fallthru
      _
    // Predicated region
    $region50: #{vit_dino_loss.1} parent=1 // pred_check
      _
    $region51: #{vit_dino_loss.1} parent=1 // pred_check_branch
      %49 = sbr.rel (0) target = $region53
    $region52: #{vit_dino_loss.1} parent=1 // pred_region
      _
    $region53: #{vit_dino_loss.1} parent=1 // pred_fallthru
      _
    // Predicated region
    $region54: #{vit_dino_loss.1} parent=1 // pred_check
      _
    $region55: #{vit_dino_loss.1} parent=1 // pred_check_branch
      %51 = sbr.rel (0) target = $region57
    $region56: #{vit_dino_loss.1} parent=1 // pred_region
      _
    $region57: #{vit_dino_loss.1} parent=1 // pred_fallthru
      _
    // Predicated region
    $region58: #{vit_dino_loss.1} parent=1 // pred_check
      _
    $region59: #{vit_dino_loss.1} parent=1 // pred_check_branch
      %53 = sbr.rel (0) target = $region61
    $region60: #{vit_dino_loss.1} parent=1 // pred_region
      _
    $region61: #{vit_dino_loss.1} parent=1 // pred_fallthru
      _
    // Predicated region
    $region62: #{vit_dino_loss.1} parent=1 // pred_check
      _
    $region63: #{vit_dino_loss.1} parent=1 // pred_check_branch
      %55 = sbr.rel (0) target = $region65
    $region64: #{vit_dino_loss.1} parent=1 // pred_region
      _
    $region65: #{vit_dino_loss.1} parent=1 // pred_fallthru
      _
    // Predicated region
    $region66: #{vit_dino_loss.1} parent=1 // pred_check
      _
    $region67: #{vit_dino_loss.1} parent=1 // pred_check_branch
      %57 = sbr.rel (0) target = $region69
    $region68: #{vit_dino_loss.1} parent=1 // pred_region
      _
    $region69: #{vit_dino_loss.1} parent=1 // pred_fallthru
      _
    // Predicated region
    $region70: #{vit_dino_loss.1} parent=1 // pred_check
      _
    $region71: #{vit_dino_loss.1} parent=1 // pred_check_branch
      %59 = sbr.rel (0) target = $region73
    $region72: #{vit_dino_loss.1} parent=1 // pred_region
      _
    $region73: #{vit_dino_loss.1} parent=1 // pred_fallthru
      _
    %v61 = vld [vmem:[%s0] sm:$0xff]
    %v62 = vld [vmem:[%s0 + $0x8] sm:$0xff]
    %v63 = vld [vmem:[%s0 + $0x10] sm:$0xff]
    %v64 = vld [vmem:[%s0 + $0x18] sm:$0xff]
    %v65 = vld [vmem:[%s0 + $0x20] sm:$0xf]
    %v66 = vld [vmem:[%s0 + $0x28] sm:$0xf]
    %v67 = vld [vmem:[%s2] sm:$0xf]
    %v68 = vld [vmem:[%s2 + $0x4] sm:$0xf]
    %v69 = vld [vmem:[%s2 + $0x8] sm:$0xf]
    %v70 = vld [vmem:[%s2 + $0xc] sm:$0xf]
    %v71 = vld [vmem:[%s2 + $0x10] sm:$0xf]
    %v72 = vld [vmem:[%s2 + $0x14] sm:$0xf]
    %v73 = vld [vmem:[%s2 + $0x18] sm:$0xf]
    %v74 = vld [vmem:[%s2 + $0x1c] sm:$0xf]
    %v75 = vld [vmem:[%s2 + $0x20] sm:$0xf]
    %v76 = vld [vmem:[%s2 + $0x24] sm:$0xf]
    %v77 = vld [vmem:[%s2 + $0x28] sm:$0xf]
    %v78 = vld [vmem:[%s2 + $0x2c] sm:$0xf]
    %v79 = vld [vmem:[%s2 + $0x30] sm:$0xf]
    %v80 = vld [vmem:[%s2 + $0x34] sm:$0xf]
    %v81 = vld [vmem:[%s2 + $0x38] sm:$0xf]
    %v82 = vld [vmem:[%s2 + $0x3c] sm:$0xf]
    %v83 = vld [vmem:[%s2 + $0x40] sm:$0xf]
    %v84 = vld [vmem:[%s2 + $0x44] sm:$0xf]
    %v85 = vld [vmem:[%s2 + $0x48] sm:$0xf]
    %v86 = vld [vmem:[%s2 + $0x4c] sm:$0xf]
    %v87 = vld [vmem:[%s2 + $0x50] sm:$0xf]
    %v88 = vld [vmem:[%s2 + $0x54] sm:$0xf]
    %v89 = vld [vmem:[%s2 + $0x58] sm:$0xf]
    %v90 = vld [vmem:[%s2 + $0x5c] sm:$0xf]
    %v91 = vld [vmem:[%s2 + $0x60] sm:$0xf]
    %v92 = vld [vmem:[%s2 + $0x64] sm:$0xf]
    %v93 = vld [vmem:[%s2 + $0x68] sm:$0xf]
    %v94 = vld [vmem:[%s2 + $0x6c] sm:$0xf]
    %v95 = vld [vmem:[%s2 + $0x70] sm:$0xf]
    %v96 = vld [vmem:[%s2 + $0x74] sm:$0xf]
    %v97 = vld [vmem:[%s2 + $0x78] sm:$0xf]
    %v98 = vld [vmem:[%s2 + $0x7c] sm:$0xf]
    %v99 = vpack.c.bf16 %v63, %v61
    %v100 = vpack.c.bf16 %v64, %v62
    %v101 = vpack.c.bf16 %v65, %v65
    %v102 = vpack.c.bf16 %v66, %v66
    %v103 = vld [vmem:[%s3] sm:$0xff]
    %v104 = vld [vmem:[%s3 + $0x8] sm:$0xff]
    %v105 = vld [vmem:[%s3 + $0x10] sm:$0xf]
    %v138 = vunpack.c.l.b16 %v67
    %v139 = vunpack.c.l.b16 %v68
    %v140 = vunpack.c.l.b16 %v69
    %v141 = vunpack.c.l.b16 %v70
    %v142 = vunpack.c.l.b16 %v71
    %v143 = vunpack.c.l.b16 %v72
    %v144 = vunpack.c.l.b16 %v73
    %v145 = vunpack.c.l.b16 %v74
    %v146 = vunpack.c.l.b16 %v75
    %v147 = vunpack.c.l.b16 %v76
    %v148 = vunpack.c.l.b16 %v77
    %v149 = vunpack.c.l.b16 %v78
    %v150 = vunpack.c.l.b16 %v79
    %v151 = vunpack.c.l.b16 %v80
    %v152 = vunpack.c.l.b16 %v81
    %v153 = vunpack.c.l.b16 %v82
    %v154 = vunpack.c.l.b16 %v83
    %v155 = vunpack.c.l.b16 %v84
    %v156 = vunpack.c.l.b16 %v85
    %v157 = vunpack.c.l.b16 %v86
    %v158 = vunpack.c.l.b16 %v87
    %v159 = vunpack.c.l.b16 %v88
    %v160 = vunpack.c.l.b16 %v89
    %v161 = vunpack.c.l.b16 %v90
    %v162 = vunpack.c.l.b16 %v91
    %v163 = vunpack.c.l.b16 %v92
    %v164 = vunpack.c.l.b16 %v93
    %v165 = vunpack.c.l.b16 %v94
    %v166 = vunpack.c.l.b16 %v95
    %v167 = vunpack.c.l.b16 %v96
    %v168 = vunpack.c.l.b16 %v97
    %v169 = vunpack.c.l.b16 %v98
    %v170 = vpack.c.b16 %v139, %v138
    %v171 = vpack.c.b16 %v141, %v140
    %v172 = vpack.c.b16 %v143, %v142
    %v173 = vpack.c.b16 %v145, %v144
    %v174 = vpack.c.b16 %v147, %v146
    %v175 = vpack.c.b16 %v149, %v148
    %v176 = vpack.c.b16 %v151, %v150
    %v177 = vpack.c.b16 %v153, %v152
    %v178 = vpack.c.b16 %v155, %v154
    %v179 = vpack.c.b16 %v157, %v156
    %v180 = vpack.c.b16 %v159, %v158
    %v181 = vpack.c.b16 %v161, %v160
    %v182 = vpack.c.b16 %v163, %v162
    %v183 = vpack.c.b16 %v165, %v164
    %v184 = vpack.c.b16 %v167, %v166
    %v185 = vpack.c.b16 %v169, %v168
    %202 = vmatprep.subr.bf16.mxu0 0
    %203 = vmatpush1.bf16.msra.mxu0 %v177
    %204 = vmatprep.subr.bf16.mxu0 0
    %205 = vmatpush1.bf16.msra.mxu0 %v176
    %206 = vmatprep.subr.bf16.mxu0 0
    %207 = vmatpush1.bf16.msra.mxu0 %v175
    %208 = vmatprep.subr.bf16.mxu0 0
    %209 = vmatpush1.bf16.msra.mxu0 %v174
    %210 = vmatprep.subr.bf16.mxu0 0
    %211 = vmatpush1.bf16.msra.mxu0 %v173
    %212 = vmatprep.subr.bf16.mxu0 0
    %213 = vmatpush1.bf16.msra.mxu0 %v172
    %214 = vmatprep.subr.bf16.mxu0 0
    %215 = vmatpush1.bf16.msra.mxu0 %v171
    %216 = vmatprep.subr.bf16.mxu0 0
    %217 = vmatpush1.bf16.msra.mxu0 %v170
    %218 = vmatprep.subr.bf16.mxu0 0
    %219 = vmatpush2.bf16.msra.mxu0 %v185
    %220 = vmatprep.subr.bf16.mxu0 0
    %221 = vmatpush2.bf16.msra.mxu0 %v184
    %222 = vmatprep.subr.bf16.mxu0 0
    %223 = vmatpush2.bf16.msra.mxu0 %v183
    %224 = vmatprep.subr.bf16.mxu0 0
    %225 = vmatpush2.bf16.msra.mxu0 %v182
    %226 = vmatprep.subr.bf16.mxu0 0
    %227 = vmatpush2.bf16.msra.mxu0 %v181
    %228 = vmatprep.subr.bf16.mxu0 0
    %229 = vmatpush2.bf16.msra.mxu0 %v180
    %230 = vmatprep.subr.bf16.mxu0 0
    %231 = vmatpush2.bf16.msra.mxu0 %v179
    %232 = vmatprep.subr.bf16.mxu0 0
    %233 = vmatpush2.bf16.msra.mxu0 %v178
    %234 = vmatprep.mubr.bf16.mxu0 %v100
    %235 = vmatmul.mubr.bf16.gmra.mxu0 %v99
    %v236 = vpop.f32.mrf.mxu0
    %v237 = vadd.f32 %v103, %v236
    %v238 = vpop.f32.mrf.mxu0
    %v239 = vpop.f32.mrf.mxu0
    %v240 = vadd.f32 %v104, %v239
    %v241 = vpop.f32.mrf.mxu0
    %242 = vmatprep.mubr.bf16.mxu0 %v102
    %243 = vmatmul.mubr.bf16.gmra.mxu0 %v101
    %v244 = vpop.f32.mrf.mxu0
    %v245 = vadd.f32 %v105, %v244
    %v246 = vpop.f32.mrf.mxu0
    %v247 = vpop.f32.mrf.mxu0
    %v248 = vpop.f32.mrf.mxu0
    %249 = vdwg.mxu0
    %v250 = vld [vmem:[%s1] sm:$0xff]
    %v251 = vld [vmem:[%s1 + $0x8] sm:$0xff]
    %v252 = vld [vmem:[%s1 + $0x10] sm:$0xf]
    %v253 = vld [vmem:[%s4] sm:$0x1]
    %v254 = vld [vmem:[%s5] sm:$0x1]
    %vm255 = vcmask 523264
    %v256 = vsel %vm255, %v237, 0.0
    %257 = vadd.xlane.f32.xlu0 %v256
    %v258 = vpop.xlane.xlu0 %257
    %v259 = vsel %vm255, %v240, 0.0
    %260 = vadd.xlane.f32.xlu0 %v259
    %v261 = vpop.xlane.xlu0 %260
    %vm262 = vcmask 519168
    %v263 = vsel %vm262, %v245, 0.0
    %264 = vadd.xlane.f32.xlu0 %v263
    %v265 = vpop.xlane.xlu0 %264
    %v266 = vrcp.pop 64.0
    %v267 = vmul.f32 %v258, %v266
    %v268 = vmul.f32 %v261, %v266
    %v269 = vmul.f32 %v265, %v266
    %v270 = vsub.f32 %v237, %v267
    %v271 = vsub.f32 %v240, %v268
    %v272 = vsub.f32 %v245, %v269
    %v273 = vmul.f32 %v270, %v270
    %v274 = vmul.f32 %v271, %v271
    %v275 = vmul.f32 %v272, %v272
    %v276 = vsel %vm255, %v273, 0.0
    %277 = vadd.xlane.f32.xlu0 %v276
    %v278 = vpop.xlane.xlu0 %277
    %v279 = vsel %vm255, %v274, 0.0
    %280 = vadd.xlane.f32.xlu0 %v279
    %v281 = vpop.xlane.xlu0 %280
    %v282 = vsel %vm262, %v275, 0.0
    %283 = vadd.xlane.f32.xlu0 %v282
    %v284 = vpop.xlane.xlu0 %283
    %v285 = vmul.f32 %v278, %v266
    %v286 = vmul.f32 %v281, %v266
    %v287 = vmul.f32 %v284, %v266
    %v288 = vadd.f32 %v285, 1e-06
    %v289 = vadd.f32 %v286, 1e-06
    %v290 = vadd.f32 %v287, 1e-06
    %v291 = vrsqrt.pop %v288
    %v292 = vrsqrt.pop %v289
    %v293 = vrsqrt.pop %v290
    %v294 = vmul.f32 %v270, %v291
    %v295 = vmul.f32 %v271, %v292
    %v296 = vmul.f32 %v272, %v293
    %v298 = vlaneseq
    %v299 = vshrl.u32 %v298, 7
    %v300 = vsub.s32 0, %v299
    %v301 = vrot.slane %v253, %v300
    %v303 = vmul.f32 %v294, %v301
    %v304 = vmul.f32 %v295, %v301
    %v305 = vmul.f32 %v296, %v301
    %v307 = vlaneseq
    %v308 = vshrl.u32 %v307, 7
    %v309 = vsub.s32 0, %v308
    %v310 = vrot.slane %v254, %v309
    %v312 = vadd.f32 %v303, %v310
    %v313 = vadd.f32 %v304, %v310
    %v314 = vadd.f32 %v305, %v310
    %v315 = vld [vmem:[%s6] sm:$0xff]
    %v316 = vld [vmem:[%s6 + $0x8] sm:$0xff]
    %v317 = vld [vmem:[%s6 + $0x10] sm:$0xff]
    %v318 = vld [vmem:[%s6 + $0x18] sm:$0xff]
    %v319 = vld [vmem:[%s6 + $0x20] sm:$0xff]
    %v320 = vld [vmem:[%s6 + $0x28] sm:$0xff]
    %v321 = vld [vmem:[%s6 + $0x30] sm:$0xff]
    %v322 = vld [vmem:[%s6 + $0x38] sm:$0xff]
    %v323 = vpack.c.bf16 %v313, %v312
    %v324 = vpack.c.bf16 %v314, %v314
    %v325 = vld [vmem:[%s7] sm:$0x3]
    %v327 = vlaneseq
    %v328 = vshrl.u32 %v327, 7
    %v329 = vsub.s32 0, %v328
    %v330 = vrot.slane %v325, %v329
    %v331 = vlaneseq
    %v332 = vshrl.u32 %v331, 7
    %v333 = vsub.s32 1, %v332
    %v334 = vrot.slane %v325, %v333
    %v345 = vunpack.c.l.b16 %v315
    %v346 = vunpack.c.h.b16 %v315
    %v347 = vunpack.c.l.b16 %v316
    %v348 = vunpack.c.h.b16 %v316
    %v349 = vunpack.c.l.b16 %v317
    %v350 = vunpack.c.h.b16 %v317
    %v351 = vunpack.c.l.b16 %v318
    %v352 = vunpack.c.h.b16 %v318
    %v353 = vunpack.c.l.b16 %v319
    %v354 = vunpack.c.h.b16 %v319
    %v355 = vunpack.c.l.b16 %v320
    %v356 = vunpack.c.h.b16 %v320
    %v357 = vunpack.c.l.b16 %v321
    %v358 = vunpack.c.h.b16 %v321
    %v359 = vunpack.c.l.b16 %v322
    %v360 = vunpack.c.h.b16 %v322
    %v361 = vpack.c.b16 %v347, %v345
    %v362 = vpack.c.b16 %v348, %v346
    %v363 = vpack.c.b16 %v351, %v349
    %v364 = vpack.c.b16 %v352, %v350
    %v365 = vpack.c.b16 %v355, %v353
    %v366 = vpack.c.b16 %v356, %v354
    %v367 = vpack.c.b16 %v359, %v357
    %v368 = vpack.c.b16 %v360, %v358
    %v378 = vsel %vm255, %v323, 0
    %v381 = vsel %vm255, %v324, 0
    %383 = vmatprep.subr.bf16.mxu0 0
    %384 = vmatpush1.bf16.msra.mxu0 0
    %385 = vmatprep.subr.bf16.mxu0 0
    %386 = vmatpush1.bf16.msra.mxu0 0
    %387 = vmatprep.subr.bf16.mxu0 0
    %388 = vmatpush1.bf16.msra.mxu0 0
    %389 = vmatprep.subr.bf16.mxu0 0
    %390 = vmatpush1.bf16.msra.mxu0 0
    %391 = vmatprep.subr.bf16.mxu0 %v368
    %392 = vmatpush1.bf16.msra.mxu0 %v367
    %393 = vmatprep.subr.bf16.mxu0 %v366
    %394 = vmatpush1.bf16.msra.mxu0 %v365
    %395 = vmatprep.subr.bf16.mxu0 %v364
    %396 = vmatpush1.bf16.msra.mxu0 %v363
    %397 = vmatprep.subr.bf16.mxu0 %v362
    %398 = vmatpush1.bf16.msra.mxu0 %v361
    %399 = vmatprep.subr.bf16.mxu0 0
    %400 = vmatpush2.bf16.msra.mxu0 0
    %401 = vmatprep.subr.bf16.mxu0 0
    %402 = vmatpush2.bf16.msra.mxu0 0
    %403 = vmatprep.subr.bf16.mxu0 0
    %404 = vmatpush2.bf16.msra.mxu0 0
    %405 = vmatprep.subr.bf16.mxu0 0
    %406 = vmatpush2.bf16.msra.mxu0 0
    %407 = vmatprep.subr.bf16.mxu0 0
    %408 = vmatpush2.bf16.msra.mxu0 0
    %409 = vmatprep.subr.bf16.mxu0 0
    %410 = vmatpush2.bf16.msra.mxu0 0
    %411 = vmatprep.subr.bf16.mxu0 0
    %412 = vmatpush2.bf16.msra.mxu0 0
    %413 = vmatprep.subr.bf16.mxu0 0
    %414 = vmatpush2.bf16.msra.mxu0 0
    %415 = vmatprep.mubr.bf16.mxu0 0
    %416 = vmatmul.mubr.bf16.gmra.mxu0 %v378
    %v417 = vpop.f32.mrf.mxu0
    %v418 = vadd.f32 %v330, %v417
    %v419 = vpop.f32.mrf.mxu0
    %v420 = vadd.f32 %v334, %v419
    %v421 = vpop.f32.mrf.mxu0
    %v422 = vadd.f32 %v330, %v421
    %v423 = vpop.f32.mrf.mxu0
    %v424 = vadd.f32 %v334, %v423
    %425 = vmatprep.mubr.bf16.mxu0 0
    %426 = vmatmul.mubr.bf16.gmra.mxu0 %v381
    %v427 = vpop.f32.mrf.mxu0
    %v428 = vadd.f32 %v330, %v427
    %v429 = vpop.f32.mrf.mxu0
    %v430 = vadd.f32 %v334, %v429
    %v431 = vpop.f32.mrf.mxu0
    %v432 = vpop.f32.mrf.mxu0
    %433 = vdwg.mxu0
    %v434 = vpack.c.bf16 %v422, %v418
    %v435 = vpack.c.bf16 %v428, %v428
    %438 = vrot.lane.b32.xlu0 %v434, 64
    %v439 = vpop.permute.xlu0 %438
    %440 = vrot.lane.b32.xlu0 %v435, 64
    %v441 = vpop.permute.xlu0 %440
    %vm442 = vcmask 130048
    %v444 = vsel %vm442, %v434, 0
    %v447 = vsel %vm442, %v435, 0
    %v450 = vsel %vm442, %v439, 0
    %v453 = vsel %vm442, %v441, 0
    %455 = vmatprep.subr.bf16.mxu0 0
    %456 = vmatpush1.bf16.xpose.msra.mxu0 0
    %457 = vmatprep.subr.bf16.mxu0 0
    %458 = vmatpush1.bf16.xpose.msra.mxu0 0
    %459 = vmatprep.subr.bf16.mxu0 0
    %460 = vmatpush1.bf16.xpose.msra.mxu0 0
    %461 = vmatprep.subr.bf16.mxu0 0
    %462 = vmatpush1.bf16.xpose.msra.mxu0 0
    %463 = vmatprep.subr.bf16.mxu0 0
    %464 = vmatpush1.bf16.xpose.msra.mxu0 0
    %465 = vmatprep.subr.bf16.mxu0 0
    %466 = vmatpush1.bf16.xpose.msra.mxu0 0
    %467 = vmatprep.subr.bf16.mxu0 0
    %468 = vmatpush1.bf16.xpose.msra.mxu0 %v453
    %469 = vmatprep.subr.bf16.mxu0 0
    %470 = vmatpush1.bf16.xpose.msra.mxu0 %v450
    %471 = vmatprep.subr.bf16.mxu0 0
    %472 = vmatpush2.bf16.xpose.msra.mxu0 0
    %473 = vmatprep.subr.bf16.mxu0 0
    %474 = vmatpush2.bf16.xpose.msra.mxu0 0
    %475 = vmatprep.subr.bf16.mxu0 0
    %476 = vmatpush2.bf16.xpose.msra.mxu0 0
    %477 = vmatprep.subr.bf16.mxu0 0
    %478 = vmatpush2.bf16.xpose.msra.mxu0 0
    %479 = vmatprep.subr.bf16.mxu0 0
    %480 = vmatpush2.bf16.xpose.msra.mxu0 0
    %481 = vmatprep.subr.bf16.mxu0 0
    %482 = vmatpush2.bf16.xpose.msra.mxu0 0
    %483 = vmatprep.subr.bf16.mxu0 0
    %484 = vmatpush2.bf16.xpose.msra.mxu0 0
    %485 = vmatprep.subr.bf16.mxu0 0
    %486 = vmatpush2.bf16.xpose.msra.mxu0 0
    %487 = vmatprep.mubr.bf16.mxu0 0
    %488 = vmatmul.mubr.bf16.gmra.mxu0 %v444
    %v489 = vpop.f32.mrf.mxu0
    %v490 = vadd.f32 0.0, %v489
    %v491 = vpop.f32.mrf.mxu0
    %v492 = vpop.f32.mrf.mxu0
    %v493 = vadd.f32 0.0, %v492
    %v494 = vpop.f32.mrf.mxu0
    %495 = vmatprep.mubr.bf16.mxu0 0
    %496 = vmatmul.mubr.bf16.gmra.mxu0 %v447
    %v497 = vpop.f32.mrf.mxu0
    %v498 = vadd.f32 0.0, %v497
    %v499 = vpop.f32.mrf.mxu0
    %v500 = vpop.f32.mrf.mxu0
    %v501 = vpop.f32.mrf.mxu0
    %502 = vdwg.mxu0
    %v503 = vmul.f32 %v490, 0.25
    %v504 = vmul.f32 %v493, 0.25
    %v505 = vmul.f32 %v498, 0.25
    %v506 = vadd.f32 %v503, %v250
    %v507 = vadd.f32 %v504, %v251
    %v508 = vadd.f32 %v505, %v252
    %vm509 = vcmask 162816
    %v510 = vsel %vm509, %v506, -inf
    %511 = vmax.xlane.f32.xlu0 %v510
    %v512 = vpop.xlane.xlu0 %511
    %v513 = vsel %vm509, %v507, -inf
    %514 = vmax.xlane.f32.xlu0 %v513
    %v515 = vpop.xlane.xlu0 %514
    %vm516 = vcmask 158720
    %v517 = vsel %vm516, %v508, -inf
    %518 = vmax.xlane.f32.xlu0 %v517
    %v519 = vpop.xlane.xlu0 %518
    %v520 = vsub.f32 %v506, %v512
    %v521 = vsub.f32 %v507, %v515
    %v522 = vsub.f32 %v508, %v519
    %v523 = vmul.f32 %v520, 1.442695
    %v524 = vpow.pop %v523
    %v525 = vmul.f32 %v521, 1.442695
    %v526 = vpow.pop %v525
    %v527 = vmul.f32 %v522, 1.442695
    %v528 = vpow.pop %v527
    %v529 = vsel %vm509, %v524, 0.0
    %530 = vadd.xlane.f32.xlu0 %v529
    %v531 = vpop.xlane.xlu0 %530
    %v532 = vsel %vm509, %v526, 0.0
    %533 = vadd.xlane.f32.xlu0 %v532
    %v534 = vpop.xlane.xlu0 %533
    %v535 = vsel %vm516, %v528, 0.0
    %536 = vadd.xlane.f32.xlu0 %v535
    %v537 = vpop.xlane.xlu0 %536
    %v538 = vrcp.pop %v531
    %v539 = vrcp.pop %v534
    %v540 = vrcp.pop %v537
    %v541 = vmul.f32 %v524, %v538
    %v542 = vmul.f32 %v526, %v539
    %v543 = vmul.f32 %v528, %v540
    %v544 = vpack.c.bf16 %v542, %v541
    %v545 = vpack.c.bf16 %v543, %v543
    %v546 = vpack.c.bf16 %v424, %v420
    %v547 = vpack.c.bf16 %v430, %v430
    %v549 = vsel %vm509, %v544, 0
    %v552 = vsel %vm509, %v545, 0
    %vm554 = vcmask 1041408
    %v556 = vsel %vm554, %v547, 0
    %558 = vmatprep.subr.bf16.mxu0 0
    %559 = vmatpush1.bf16.msra.mxu0 0
    %560 = vmatprep.subr.bf16.mxu0 0
    %561 = vmatpush1.bf16.msra.mxu0 0
    %562 = vmatprep.subr.bf16.mxu0 0
    %563 = vmatpush1.bf16.msra.mxu0 0
    %564 = vmatprep.subr.bf16.mxu0 0
    %565 = vmatpush1.bf16.msra.mxu0 0
    %566 = vmatprep.subr.bf16.mxu0 0
    %567 = vmatpush1.bf16.msra.mxu0 0
    %568 = vmatprep.subr.bf16.mxu0 0
    %569 = vmatpush1.bf16.msra.mxu0 0
    %570 = vmatprep.subr.bf16.mxu0 0
    %571 = vmatpush1.bf16.msra.mxu0 %v556
    %572 = vmatprep.subr.bf16.mxu0 0
    %573 = vmatpush1.bf16.msra.mxu0 %v546
    %574 = vmatprep.subr.bf16.mxu0 0
    %575 = vmatpush2.bf16.msra.mxu0 0
    %576 = vmatprep.subr.bf16.mxu0 0
    %577 = vmatpush2.bf16.msra.mxu0 0
    %578 = vmatprep.subr.bf16.mxu0 0
    %579 = vmatpush2.bf16.msra.mxu0 0
    %580 = vmatprep.subr.bf16.mxu0 0
    %581 = vmatpush2.bf16.msra.mxu0 0
    %582 = vmatprep.subr.bf16.mxu0 0
    %583 = vmatpush2.bf16.msra.mxu0 0
    %584 = vmatprep.subr.bf16.mxu0 0
    %585 = vmatpush2.bf16.msra.mxu0 0
    %586 = vmatprep.subr.bf16.mxu0 0
    %587 = vmatpush2.bf16.msra.mxu0 0
    %588 = vmatprep.subr.bf16.mxu0 0
    %589 = vmatpush2.bf16.msra.mxu0 0
    %590 = vmatprep.mubr.bf16.mxu0 0
    %591 = vmatmul.mubr.bf16.gmra.mxu0 %v549
    %v592 = vpop.f32.mrf.mxu0
    %v593 = vadd.f32 0.0, %v592
    %v594 = vpop.f32.mrf.mxu0
    %v595 = vpop.f32.mrf.mxu0
    %v596 = vadd.f32 0.0, %v595
    %v597 = vpop.f32.mrf.mxu0
    %598 = vmatprep.mubr.bf16.mxu0 0
    %599 = vmatmul.mubr.bf16.gmra.mxu0 %v552
    %v600 = vpop.f32.mrf.mxu0
    %v601 = vadd.f32 0.0, %v600
    %v602 = vpop.f32.mrf.mxu0
    %v603 = vpop.f32.mrf.mxu0
    %v604 = vpop.f32.mrf.mxu0
    %605 = vdwg.mxu0
    %606 = vrot.lane.b32.xlu0 %v434, 112
    %v607 = vpop.permute.xlu0 %606
    %608 = vrot.lane.b32.xlu0 %v435, 112
    %v609 = vpop.permute.xlu0 %608
    %610 = vrot.lane.b32.xlu0 %v434, 48
    %v611 = vpop.permute.xlu0 %610
    %612 = vrot.lane.b32.xlu0 %v435, 48
    %v613 = vpop.permute.xlu0 %612
    %v615 = vsel %vm442, %v607, 0
    %v618 = vsel %vm442, %v609, 0
    %v621 = vsel %vm442, %v611, 0
    %v624 = vsel %vm442, %v613, 0
    %626 = vmatprep.subr.bf16.mxu0 0
    %627 = vmatpush1.bf16.xpose.msra.mxu0 0
    %628 = vmatprep.subr.bf16.mxu0 0
    %629 = vmatpush1.bf16.xpose.msra.mxu0 0
    %630 = vmatprep.subr.bf16.mxu0 0
    %631 = vmatpush1.bf16.xpose.msra.mxu0 0
    %632 = vmatprep.subr.bf16.mxu0 0
    %633 = vmatpush1.bf16.xpose.msra.mxu0 0
    %634 = vmatprep.subr.bf16.mxu0 0
    %635 = vmatpush1.bf16.xpose.msra.mxu0 0
    %636 = vmatprep.subr.bf16.mxu0 0
    %637 = vmatpush1.bf16.xpose.msra.mxu0 0
    %638 = vmatprep.subr.bf16.mxu0 0
    %639 = vmatpush1.bf16.xpose.msra.mxu0 %v624
    %640 = vmatprep.subr.bf16.mxu0 0
    %641 = vmatpush1.bf16.xpose.msra.mxu0 %v621
    %642 = vmatprep.subr.bf16.mxu0 0
    %643 = vmatpush2.bf16.xpose.msra.mxu0 0
    %644 = vmatprep.subr.bf16.mxu0 0
    %645 = vmatpush2.bf16.xpose.msra.mxu0 0
    %646 = vmatprep.subr.bf16.mxu0 0
    %647 = vmatpush2.bf16.xpose.msra.mxu0 0
    %648 = vmatprep.subr.bf16.mxu0 0
    %649 = vmatpush2.bf16.xpose.msra.mxu0 0
    %650 = vmatprep.subr.bf16.mxu0 0
    %651 = vmatpush2.bf16.xpose.msra.mxu0 0
    %652 = vmatprep.subr.bf16.mxu0 0
    %653 = vmatpush2.bf16.xpose.msra.mxu0 0
    %654 = vmatprep.subr.bf16.mxu0 0
    %655 = vmatpush2.bf16.xpose.msra.mxu0 0
    %656 = vmatprep.subr.bf16.mxu0 0
    %657 = vmatpush2.bf16.xpose.msra.mxu0 0
    %658 = vmatprep.mubr.bf16.mxu0 0
    %659 = vmatmul.mubr.bf16.gmra.mxu0 %v615
    %v660 = vpop.f32.mrf.mxu0
    %v661 = vadd.f32 0.0, %v660
    %v662 = vpop.f32.mrf.mxu0
    %v663 = vpop.f32.mrf.mxu0
    %v664 = vadd.f32 0.0, %v663
    %v665 = vpop.f32.mrf.mxu0
    %666 = vmatprep.mubr.bf16.mxu0 0
    %667 = vmatmul.mubr.bf16.gmra.mxu0 %v618
    %v668 = vpop.f32.mrf.mxu0
    %v669 = vadd.f32 0.0, %v668
    %v670 = vpop.f32.mrf.mxu0
    %v671 = vpop.f32.mrf.mxu0
    %v672 = vpop.f32.mrf.mxu0
    %673 = vdwg.mxu0
    %v674 = vmul.f32 %v661, 0.25
    %v675 = vmul.f32 %v664, 0.25
    %v676 = vmul.f32 %v669, 0.25
    %v677 = vadd.f32 %v674, %v250
    %v678 = vadd.f32 %v675, %v251
    %v679 = vadd.f32 %v676, %v252
    %v680 = vsel %vm509, %v677, -inf
    %681 = vmax.xlane.f32.xlu0 %v680
    %v682 = vpop.xlane.xlu0 %681
    %v683 = vsel %vm509, %v678, -inf
    %684 = vmax.xlane.f32.xlu0 %v683
    %v685 = vpop.xlane.xlu0 %684
    %v686 = vsel %vm516, %v679, -inf
    %687 = vmax.xlane.f32.xlu0 %v686
    %v688 = vpop.xlane.xlu0 %687
    %v689 = vsub.f32 %v677, %v682
    %v690 = vsub.f32 %v678, %v685
    %v691 = vsub.f32 %v679, %v688
    %v692 = vmul.f32 %v689, 1.442695
    %v693 = vpow.pop %v692
    %v694 = vmul.f32 %v690, 1.442695
    %v695 = vpow.pop %v694
    %v696 = vmul.f32 %v691, 1.442695
    %v697 = vpow.pop %v696
    %v698 = vsel %vm509, %v693, 0.0
    %699 = vadd.xlane.f32.xlu0 %v698
    %v700 = vpop.xlane.xlu0 %699
    %v701 = vsel %vm509, %v695, 0.0
    %702 = vadd.xlane.f32.xlu0 %v701
    %v703 = vpop.xlane.xlu0 %702
    %v704 = vsel %vm516, %v697, 0.0
    %705 = vadd.xlane.f32.xlu0 %v704
    %v706 = vpop.xlane.xlu0 %705
    %v707 = vrcp.pop %v700
    %v708 = vrcp.pop %v703
    %v709 = vrcp.pop %v706
    %v710 = vmul.f32 %v693, %v707
    %v711 = vmul.f32 %v695, %v708
    %v712 = vmul.f32 %v697, %v709
    %v713 = vpack.c.bf16 %v711, %v710
    %v714 = vpack.c.bf16 %v712, %v712
    %717 = vrot.lane.b32.xlu0 %v546, 112
    %v718 = vpop.permute.xlu0 %717
    %719 = vrot.lane.b32.xlu0 %v547, 112
    %v720 = vpop.permute.xlu0 %719
    %v723 = vsel %vm509, %v713, 0
    %v726 = vsel %vm509, %v714, 0
    %v729 = vsel %vm554, %v720, 0
    %731 = vmatprep.subr.bf16.mxu0 0
    %732 = vmatpush1.bf16.msra.mxu0 0
    %733 = vmatprep.subr.bf16.mxu0 0
    %734 = vmatpush1.bf16.msra.mxu0 0
    %735 = vmatprep.subr.bf16.mxu0 0
    %736 = vmatpush1.bf16.msra.mxu0 0
    %737 = vmatprep.subr.bf16.mxu0 0
    %738 = vmatpush1.bf16.msra.mxu0 0
    %739 = vmatprep.subr.bf16.mxu0 0
    %740 = vmatpush1.bf16.msra.mxu0 0
    %741 = vmatprep.subr.bf16.mxu0 0
    %742 = vmatpush1.bf16.msra.mxu0 0
    %743 = vmatprep.subr.bf16.mxu0 0
    %744 = vmatpush1.bf16.msra.mxu0 %v729
    %745 = vmatprep.subr.bf16.mxu0 0
    %746 = vmatpush1.bf16.msra.mxu0 %v718
    %747 = vmatprep.subr.bf16.mxu0 0
    %748 = vmatpush2.bf16.msra.mxu0 0
    %749 = vmatprep.subr.bf16.mxu0 0
    %750 = vmatpush2.bf16.msra.mxu0 0
    %751 = vmatprep.subr.bf16.mxu0 0
    %752 = vmatpush2.bf16.msra.mxu0 0
    %753 = vmatprep.subr.bf16.mxu0 0
    %754 = vmatpush2.bf16.msra.mxu0 0
    %755 = vmatprep.subr.bf16.mxu0 0
    %756 = vmatpush2.bf16.msra.mxu0 0
    %757 = vmatprep.subr.bf16.mxu0 0
    %758 = vmatpush2.bf16.msra.mxu0 0
    %759 = vmatprep.subr.bf16.mxu0 0
    %760 = vmatpush2.bf16.msra.mxu0 0
    %761 = vmatprep.subr.bf16.mxu0 0
    %762 = vmatpush2.bf16.msra.mxu0 0
    %763 = vmatprep.mubr.bf16.mxu0 0
    %764 = vmatmul.mubr.bf16.gmra.mxu0 %v723
    %v765 = vpop.f32.mrf.mxu0
    %v766 = vadd.f32 0.0, %v765
    %v767 = vpop.f32.mrf.mxu0
    %v768 = vpop.f32.mrf.mxu0
    %v769 = vadd.f32 0.0, %v768
    %v770 = vpop.f32.mrf.mxu0
    %771 = vmatprep.mubr.bf16.mxu0 0
    %772 = vmatmul.mubr.bf16.gmra.mxu0 %v726
    %v773 = vpop.f32.mrf.mxu0
    %v774 = vadd.f32 0.0, %v773
    %v775 = vpop.f32.mrf.mxu0
    %v776 = vpop.f32.mrf.mxu0
    %v777 = vpop.f32.mrf.mxu0
    %778 = vdwg.mxu0
    %779 = vrot.lane.b32.xlu0 %v434, 96
    %v780 = vpop.permute.xlu0 %779
    %781 = vrot.lane.b32.xlu0 %v435, 96
    %v782 = vpop.permute.xlu0 %781
    %783 = vrot.lane.b32.xlu0 %v434, 32
    %v784 = vpop.permute.xlu0 %783
    %785 = vrot.lane.b32.xlu0 %v435, 32
    %v786 = vpop.permute.xlu0 %785
    %v788 = vsel %vm442, %v780, 0
    %v791 = vsel %vm442, %v782, 0
    %v794 = vsel %vm442, %v784, 0
    %v797 = vsel %vm442, %v786, 0
    %799 = vmatprep.subr.bf16.mxu0 0
    %800 = vmatpush1.bf16.xpose.msra.mxu0 0
    %801 = vmatprep.subr.bf16.mxu0 0
    %802 = vmatpush1.bf16.xpose.msra.mxu0 0
    %803 = vmatprep.subr.bf16.mxu0 0
    %804 = vmatpush1.bf16.xpose.msra.mxu0 0
    %805 = vmatprep.subr.bf16.mxu0 0
    %806 = vmatpush1.bf16.xpose.msra.mxu0 0
    %807 = vmatprep.subr.bf16.mxu0 0
    %808 = vmatpush1.bf16.xpose.msra.mxu0 0
    %809 = vmatprep.subr.bf16.mxu0 0
    %810 = vmatpush1.bf16.xpose.msra.mxu0 0
    %811 = vmatprep.subr.bf16.mxu0 0
    %812 = vmatpush1.bf16.xpose.msra.mxu0 %v797
    %813 = vmatprep.subr.bf16.mxu0 0
    %814 = vmatpush1.bf16.xpose.msra.mxu0 %v794
    %815 = vmatprep.subr.bf16.mxu0 0
    %816 = vmatpush2.bf16.xpose.msra.mxu0 0
    %817 = vmatprep.subr.bf16.mxu0 0
    %818 = vmatpush2.bf16.xpose.msra.mxu0 0
    %819 = vmatprep.subr.bf16.mxu0 0
    %820 = vmatpush2.bf16.xpose.msra.mxu0 0
    %821 = vmatprep.subr.bf16.mxu0 0
    %822 = vmatpush2.bf16.xpose.msra.mxu0 0
    %823 = vmatprep.subr.bf16.mxu0 0
    %824 = vmatpush2.bf16.xpose.msra.mxu0 0
    %825 = vmatprep.subr.bf16.mxu0 0
    %826 = vmatpush2.bf16.xpose.msra.mxu0 0
    %827 = vmatprep.subr.bf16.mxu0 0
    %828 = vmatpush2.bf16.xpose.msra.mxu0 0
    %829 = vmatprep.subr.bf16.mxu0 0
    %830 = vmatpush2.bf16.xpose.msra.mxu0 0
    %831 = vmatprep.mubr.bf16.mxu0 0
    %832 = vmatmul.mubr.bf16.gmra.mxu0 %v788
    %v833 = vpop.f32.mrf.mxu0
    %v834 = vadd.f32 0.0, %v833
    %v835 = vpop.f32.mrf.mxu0
    %v836 = vpop.f32.mrf.mxu0
    %v837 = vadd.f32 0.0, %v836
    %v838 = vpop.f32.mrf.mxu0
    %839 = vmatprep.mubr.bf16.mxu0 0
    %840 = vmatmul.mubr.bf16.gmra.mxu0 %v791
    %v841 = vpop.f32.mrf.mxu0
    %v842 = vadd.f32 0.0, %v841
    %v843 = vpop.f32.mrf.mxu0
    %v844 = vpop.f32.mrf.mxu0
    %v845 = vpop.f32.mrf.mxu0
    %846 = vdwg.mxu0
    %v847 = vmul.f32 %v834, 0.25
    %v848 = vmul.f32 %v837, 0.25
    %v849 = vmul.f32 %v842, 0.25
    %v850 = vadd.f32 %v847, %v250
    %v851 = vadd.f32 %v848, %v251
    %v852 = vadd.f32 %v849, %v252
    %v853 = vsel %vm509, %v850, -inf
    %854 = vmax.xlane.f32.xlu0 %v853
    %v855 = vpop.xlane.xlu0 %854
    %v856 = vsel %vm509, %v851, -inf
    %857 = vmax.xlane.f32.xlu0 %v856
    %v858 = vpop.xlane.xlu0 %857
    %v859 = vsel %vm516, %v852, -inf
    %860 = vmax.xlane.f32.xlu0 %v859
    %v861 = vpop.xlane.xlu0 %860
    %v862 = vsub.f32 %v850, %v855
    %v863 = vsub.f32 %v851, %v858
    %v864 = vsub.f32 %v852, %v861
    %v865 = vmul.f32 %v862, 1.442695
    %v866 = vpow.pop %v865
    %v867 = vmul.f32 %v863, 1.442695
    %v868 = vpow.pop %v867
    %v869 = vmul.f32 %v864, 1.442695
    %v870 = vpow.pop %v869
    %v871 = vsel %vm509, %v866, 0.0
    %872 = vadd.xlane.f32.xlu0 %v871
    %v873 = vpop.xlane.xlu0 %872
    %v874 = vsel %vm509, %v868, 0.0
    %875 = vadd.xlane.f32.xlu0 %v874
    %v876 = vpop.xlane.xlu0 %875
    %v877 = vsel %vm516, %v870, 0.0
    %878 = vadd.xlane.f32.xlu0 %v877
    %v879 = vpop.xlane.xlu0 %878
    %v880 = vrcp.pop %v873
    %v881 = vrcp.pop %v876
    %v882 = vrcp.pop %v879
    %v883 = vmul.f32 %v866, %v880
    %v884 = vmul.f32 %v868, %v881
    %v885 = vmul.f32 %v870, %v882
    %v886 = vpack.c.bf16 %v884, %v883
    %v887 = vpack.c.bf16 %v885, %v885
    %888 = vrot.lane.b32.xlu0 %v546, 96
    %v889 = vpop.permute.xlu0 %888
    %890 = vrot.lane.b32.xlu0 %v547, 96
    %v891 = vpop.permute.xlu0 %890
    %v894 = vsel %vm509, %v886, 0
    %v897 = vsel %vm509, %v887, 0
    %v900 = vsel %vm554, %v891, 0
    %902 = vmatprep.subr.bf16.mxu0 0
    %903 = vmatpush1.bf16.msra.mxu0 0
    %904 = vmatprep.subr.bf16.mxu0 0
    %905 = vmatpush1.bf16.msra.mxu0 0
    %906 = vmatprep.subr.bf16.mxu0 0
    %907 = vmatpush1.bf16.msra.mxu0 0
    %908 = vmatprep.subr.bf16.mxu0 0
    %909 = vmatpush1.bf16.msra.mxu0 0
    %910 = vmatprep.subr.bf16.mxu0 0
    %911 = vmatpush1.bf16.msra.mxu0 0
    %912 = vmatprep.subr.bf16.mxu0 0
    %913 = vmatpush1.bf16.msra.mxu0 0
    %914 = vmatprep.subr.bf16.mxu0 0
    %915 = vmatpush1.bf16.msra.mxu0 %v900
    %916 = vmatprep.subr.bf16.mxu0 0
    %917 = vmatpush1.bf16.msra.mxu0 %v889
    %918 = vmatprep.subr.bf16.mxu0 0
    %919 = vmatpush2.bf16.msra.mxu0 0
    %920 = vmatprep.subr.bf16.mxu0 0
    %921 = vmatpush2.bf16.msra.mxu0 0
    %922 = vmatprep.subr.bf16.mxu0 0
    %923 = vmatpush2.bf16.msra.mxu0 0
    %924 = vmatprep.subr.bf16.mxu0 0
    %925 = vmatpush2.bf16.msra.mxu0 0
    %926 = vmatprep.subr.bf16.mxu0 0
    %927 = vmatpush2.bf16.msra.mxu0 0
    %928 = vmatprep.subr.bf16.mxu0 0
    %929 = vmatpush2.bf16.msra.mxu0 0
    %930 = vmatprep.subr.bf16.mxu0 0
    %931 = vmatpush2.bf16.msra.mxu0 0
    %932 = vmatprep.subr.bf16.mxu0 0
    %933 = vmatpush2.bf16.msra.mxu0 0
    %934 = vmatprep.mubr.bf16.mxu0 0
    %935 = vmatmul.mubr.bf16.gmra.mxu0 %v894
    %v936 = vpop.f32.mrf.mxu0
    %v937 = vadd.f32 0.0, %v936
    %v938 = vpop.f32.mrf.mxu0
    %v939 = vpop.f32.mrf.mxu0
    %v940 = vadd.f32 0.0, %v939
    %v941 = vpop.f32.mrf.mxu0
    %942 = vmatprep.mubr.bf16.mxu0 0
    %943 = vmatmul.mubr.bf16.gmra.mxu0 %v897
    %v944 = vpop.f32.mrf.mxu0
    %v945 = vadd.f32 0.0, %v944
    %v946 = vpop.f32.mrf.mxu0
    %v947 = vpop.f32.mrf.mxu0
    %v948 = vpop.f32.mrf.mxu0
    %949 = vdwg.mxu0
    %950 = vrot.lane.b32.xlu0 %v434, 80
    %v951 = vpop.permute.xlu0 %950
    %952 = vrot.lane.b32.xlu0 %v435, 80
    %v953 = vpop.permute.xlu0 %952
    %954 = vrot.lane.b32.xlu0 %v434, 16
    %v955 = vpop.permute.xlu0 %954
    %956 = vrot.lane.b32.xlu0 %v435, 16
    %v957 = vpop.permute.xlu0 %956
    %v959 = vsel %vm442, %v951, 0
    %v962 = vsel %vm442, %v953, 0
    %v965 = vsel %vm442, %v955, 0
    %v968 = vsel %vm442, %v957, 0
    %970 = vmatprep.subr.bf16.mxu0 0
    %971 = vmatpush1.bf16.xpose.msra.mxu0 0
    %972 = vmatprep.subr.bf16.mxu0 0
    %973 = vmatpush1.bf16.xpose.msra.mxu0 0
    %974 = vmatprep.subr.bf16.mxu0 0
    %975 = vmatpush1.bf16.xpose.msra.mxu0 0
    %976 = vmatprep.subr.bf16.mxu0 0
    %977 = vmatpush1.bf16.xpose.msra.mxu0 0
    %978 = vmatprep.subr.bf16.mxu0 0
    %979 = vmatpush1.bf16.xpose.msra.mxu0 0
    %980 = vmatprep.subr.bf16.mxu0 0
    %981 = vmatpush1.bf16.xpose.msra.mxu0 0
    %982 = vmatprep.subr.bf16.mxu0 0
    %983 = vmatpush1.bf16.xpose.msra.mxu0 %v968
    %984 = vmatprep.subr.bf16.mxu0 0
    %985 = vmatpush1.bf16.xpose.msra.mxu0 %v965
    %986 = vmatprep.subr.bf16.mxu0 0
    %987 = vmatpush2.bf16.xpose.msra.mxu0 0
    %988 = vmatprep.subr.bf16.mxu0 0
    %989 = vmatpush2.bf16.xpose.msra.mxu0 0
    %990 = vmatprep.subr.bf16.mxu0 0
    %991 = vmatpush2.bf16.xpose.msra.mxu0 0
    %992 = vmatprep.subr.bf16.mxu0 0
    %993 = vmatpush2.bf16.xpose.msra.mxu0 0
    %994 = vmatprep.subr.bf16.mxu0 0
    %995 = vmatpush2.bf16.xpose.msra.mxu0 0
    %996 = vmatprep.subr.bf16.mxu0 0
    %997 = vmatpush2.bf16.xpose.msra.mxu0 0
    %998 = vmatprep.subr.bf16.mxu0 0
    %999 = vmatpush2.bf16.xpose.msra.mxu0 0
    %1000 = vmatprep.subr.bf16.mxu0 0
    %1001 = vmatpush2.bf16.xpose.msra.mxu0 0
    %1002 = vmatprep.mubr.bf16.mxu0 0
    %1003 = vmatmul.mubr.bf16.gmra.mxu0 %v959
    %v1004 = vpop.f32.mrf.mxu0
    %v1005 = vadd.f32 0.0, %v1004
    %v1006 = vpop.f32.mrf.mxu0
    %v1007 = vpop.f32.mrf.mxu0
    %v1008 = vadd.f32 0.0, %v1007
    %v1009 = vpop.f32.mrf.mxu0
    %1010 = vmatprep.mubr.bf16.mxu0 0
    %1011 = vmatmul.mubr.bf16.gmra.mxu0 %v962
    %v1012 = vpop.f32.mrf.mxu0
    %v1013 = vadd.f32 0.0, %v1012
    %v1014 = vpop.f32.mrf.mxu0
    %v1015 = vpop.f32.mrf.mxu0
    %v1016 = vpop.f32.mrf.mxu0
    %1017 = vdwg.mxu0
    %v1018 = vmul.f32 %v1005, 0.25
    %v1019 = vmul.f32 %v1008, 0.25
    %v1020 = vmul.f32 %v1013, 0.25
    %v1021 = vadd.f32 %v1018, %v250
    %v1022 = vadd.f32 %v1019, %v251
    %v1023 = vadd.f32 %v1020, %v252
    %v1024 = vsel %vm509, %v1021, -inf
    %1025 = vmax.xlane.f32.xlu0 %v1024
    %v1026 = vpop.xlane.xlu0 %1025
    %v1027 = vsel %vm509, %v1022, -inf
    %1028 = vmax.xlane.f32.xlu0 %v1027
    %v1029 = vpop.xlane.xlu0 %1028
    %v1030 = vsel %vm516, %v1023, -inf
    %1031 = vmax.xlane.f32.xlu0 %v1030
    %v1032 = vpop.xlane.xlu0 %1031
    %v1033 = vsub.f32 %v1021, %v1026
    %v1034 = vsub.f32 %v1022, %v1029
    %v1035 = vsub.f32 %v1023, %v1032
    %v1036 = vmul.f32 %v1033, 1.442695
    %v1037 = vpow.pop %v1036
    %v1038 = vmul.f32 %v1034, 1.442695
    %v1039 = vpow.pop %v1038
    %v1040 = vmul.f32 %v1035, 1.442695
    %v1041 = vpow.pop %v1040
    %v1042 = vsel %vm509, %v1037, 0.0
    %1043 = vadd.xlane.f32.xlu0 %v1042
    %v1044 = vpop.xlane.xlu0 %1043
    %v1045 = vsel %vm509, %v1039, 0.0
    %1046 = vadd.xlane.f32.xlu0 %v1045
    %v1047 = vpop.xlane.xlu0 %1046
    %v1048 = vsel %vm516, %v1041, 0.0
    %1049 = vadd.xlane.f32.xlu0 %v1048
    %v1050 = vpop.xlane.xlu0 %1049
    %v1051 = vrcp.pop %v1044
    %v1052 = vrcp.pop %v1047
    %v1053 = vrcp.pop %v1050
    %v1054 = vmul.f32 %v1037, %v1051
    %v1055 = vmul.f32 %v1039, %v1052
    %v1056 = vmul.f32 %v1041, %v1053
    %v1057 = vpack.c.bf16 %v1055, %v1054
    %v1058 = vpack.c.bf16 %v1056, %v1056
    %1059 = vrot.lane.b32.xlu0 %v546, 80
    %v1060 = vpop.permute.xlu0 %1059
    %1061 = vrot.lane.b32.xlu0 %v547, 80
    %v1062 = vpop.permute.xlu0 %1061
    %v1065 = vsel %vm509, %v1057, 0
    %v1068 = vsel %vm509, %v1058, 0
    %v1071 = vsel %vm554, %v1062, 0
    %1073 = vmatprep.subr.bf16.mxu0 0
    %1074 = vmatpush1.bf16.msra.mxu0 0
    %1075 = vmatprep.subr.bf16.mxu0 0
    %1076 = vmatpush1.bf16.msra.mxu0 0
    %1077 = vmatprep.subr.bf16.mxu0 0
    %1078 = vmatpush1.bf16.msra.mxu0 0
    %1079 = vmatprep.subr.bf16.mxu0 0
    %1080 = vmatpush1.bf16.msra.mxu0 0
    %1081 = vmatprep.subr.bf16.mxu0 0
    %1082 = vmatpush1.bf16.msra.mxu0 0
    %1083 = vmatprep.subr.bf16.mxu0 0
    %1084 = vmatpush1.bf16.msra.mxu0 0
    %1085 = vmatprep.subr.bf16.mxu0 0
    %1086 = vmatpush1.bf16.msra.mxu0 %v1071
    %1087 = vmatprep.subr.bf16.mxu0 0
    %1088 = vmatpush1.bf16.msra.mxu0 %v1060
    %1089 = vmatprep.subr.bf16.mxu0 0
    %1090 = vmatpush2.bf16.msra.mxu0 0
    %1091 = vmatprep.subr.bf16.mxu0 0
    %1092 = vmatpush2.bf16.msra.mxu0 0
    %1093 = vmatprep.subr.bf16.mxu0 0
    %1094 = vmatpush2.bf16.msra.mxu0 0
    %1095 = vmatprep.subr.bf16.mxu0 0
    %1096 = vmatpush2.bf16.msra.mxu0 0
    %1097 = vmatprep.subr.bf16.mxu0 0
    %1098 = vmatpush2.bf16.msra.mxu0 0
    %1099 = vmatprep.subr.bf16.mxu0 0
    %1100 = vmatpush2.bf16.msra.mxu0 0
    %1101 = vmatprep.subr.bf16.mxu0 0
    %1102 = vmatpush2.bf16.msra.mxu0 0
    %1103 = vmatprep.subr.bf16.mxu0 0
    %1104 = vmatpush2.bf16.msra.mxu0 0
    %1105 = vmatprep.mubr.bf16.mxu0 0
    %1106 = vmatmul.mubr.bf16.gmra.mxu0 %v1065
    %v1107 = vpop.f32.mrf.mxu0
    %v1108 = vadd.f32 0.0, %v1107
    %v1109 = vpop.f32.mrf.mxu0
    %v1110 = vpop.f32.mrf.mxu0
    %v1111 = vadd.f32 0.0, %v1110
    %v1112 = vpop.f32.mrf.mxu0
    %1113 = vmatprep.mubr.bf16.mxu0 0
    %1114 = vmatmul.mubr.bf16.gmra.mxu0 %v1068
    %v1115 = vpop.f32.mrf.mxu0
    %v1116 = vadd.f32 0.0, %v1115
    %v1117 = vpop.f32.mrf.mxu0
    %v1118 = vpop.f32.mrf.mxu0
    %v1119 = vpop.f32.mrf.mxu0
    %1120 = vdwg.mxu0
    %1124 = vrot.lane.b32.xlu0 %v766, 16
    %v1125 = vpop.permute.xlu0 %1124
    %1126 = vrot.lane.b32.xlu0 %v769, 16
    %v1127 = vpop.permute.xlu0 %1126
    %1128 = vrot.lane.b32.xlu0 %v774, 16
    %v1129 = vpop.permute.xlu0 %1128
    %1136 = vrot.lane.b32.xlu0 %v937, 32
    %v1137 = vpop.permute.xlu0 %1136
    %1138 = vrot.lane.b32.xlu0 %v940, 32
    %v1139 = vpop.permute.xlu0 %1138
    %1140 = vrot.lane.b32.xlu0 %v945, 32
    %v1141 = vpop.permute.xlu0 %1140
    %1148 = vrot.lane.b32.xlu0 %v1108, 48
    %v1149 = vpop.permute.xlu0 %1148
    %1150 = vrot.lane.b32.xlu0 %v1111, 48
    %v1151 = vpop.permute.xlu0 %1150
    %1152 = vrot.lane.b32.xlu0 %v1116, 48
    %v1153 = vpop.permute.xlu0 %1152
    %v1157 = vsel %vm442, %v593, %v1125
    %v1158 = vsel %vm442, %v596, %v1127
    %v1159 = vsel %vm442, %v601, %v1129
    %vm1160 = vcmask 261120
    %v1161 = vsel %vm1160, %v1157, %v1137
    %v1162 = vsel %vm1160, %v1158, %v1139
    %v1163 = vsel %vm1160, %v1159, %v1141
    %vm1164 = vcmask 392192
    %v1165 = vsel %vm1164, %v1161, %v1149
    %v1166 = vsel %vm1164, %v1162, %v1151
    %v1167 = vsel %vm1164, %v1163, %v1153
    %v1168 = vld [vmem:[%s8] sm:$0xf]
    %v1169 = vld [vmem:[%s8 + $0x4] sm:$0xf]
    %v1170 = vld [vmem:[%s8 + $0x8] sm:$0xf]
    %v1171 = vld [vmem:[%s8 + $0xc] sm:$0xf]
    %v1172 = vld [vmem:[%s8 + $0x10] sm:$0xf]
    %v1173 = vld [vmem:[%s8 + $0x14] sm:$0xf]
    %v1174 = vld [vmem:[%s8 + $0x18] sm:$0xf]
    %v1175 = vld [vmem:[%s8 + $0x1c] sm:$0xf]
    %v1176 = vpack.c.bf16 %v1166, %v1165
    %v1177 = vpack.c.bf16 %v1167, %v1167
    %v1186 = vunpack.c.l.b16 %v1168
    %v1187 = vunpack.c.l.b16 %v1169
    %v1188 = vunpack.c.l.b16 %v1170
    %v1189 = vunpack.c.l.b16 %v1171
    %v1190 = vunpack.c.l.b16 %v1172
    %v1191 = vunpack.c.l.b16 %v1173
    %v1192 = vunpack.c.l.b16 %v1174
    %v1193 = vunpack.c.l.b16 %v1175
    %v1194 = vpack.c.b16 %v1187, %v1186
    %v1195 = vpack.c.b16 %v1189, %v1188
    %v1196 = vpack.c.b16 %v1191, %v1190
    %v1197 = vpack.c.b16 %v1193, %v1192
    %v1203 = vsel %vm255, %v1176, 0
    %v1206 = vsel %vm255, %v1177, 0
    %1208 = vmatprep.subr.bf16.mxu0 0
    %1209 = vmatpush1.bf16.msra.mxu0 0
    %1210 = vmatprep.subr.bf16.mxu0 0
    %1211 = vmatpush1.bf16.msra.mxu0 0
    %1212 = vmatprep.subr.bf16.mxu0 0
    %1213 = vmatpush1.bf16.msra.mxu0 0
    %1214 = vmatprep.subr.bf16.mxu0 0
    %1215 = vmatpush1.bf16.msra.mxu0 0
    %1216 = vmatprep.subr.bf16.mxu0 0
    %1217 = vmatpush1.bf16.msra.mxu0 %v1197
    %1218 = vmatprep.subr.bf16.mxu0 0
    %1219 = vmatpush1.bf16.msra.mxu0 %v1196
    %1220 = vmatprep.subr.bf16.mxu0 0
    %1221 = vmatpush1.bf16.msra.mxu0 %v1195
    %1222 = vmatprep.subr.bf16.mxu0 0
    %1223 = vmatpush1.bf16.msra.mxu0 %v1194
    %1224 = vmatprep.subr.bf16.mxu0 0
    %1225 = vmatpush2.bf16.msra.mxu0 0
    %1226 = vmatprep.subr.bf16.mxu0 0
    %1227 = vmatpush2.bf16.msra.mxu0 0
    %1228 = vmatprep.subr.bf16.mxu0 0
    %1229 = vmatpush2.bf16.msra.mxu0 0
    %1230 = vmatprep.subr.bf16.mxu0 0
    %1231 = vmatpush2.bf16.msra.mxu0 0
    %1232 = vmatprep.subr.bf16.mxu0 0
    %1233 = vmatpush2.bf16.msra.mxu0 0
    %1234 = vmatprep.subr.bf16.mxu0 0
    %1235 = vmatpush2.bf16.msra.mxu0 0
    %1236 = vmatprep.subr.bf16.mxu0 0
    %1237 = vmatpush2.bf16.msra.mxu0 0
    %1238 = vmatprep.subr.bf16.mxu0 0
    %1239 = vmatpush2.bf16.msra.mxu0 0
    %1240 = vmatprep.mubr.bf16.mxu0 0
    %1241 = vmatmul.mubr.bf16.gmra.mxu0 %v1203
    %v1242 = vpop.f32.mrf.mxu0
    %v1243 = vadd.f32 0.0, %v1242
    %v1244 = vpop.f32.mrf.mxu0
    %v1245 = vpop.f32.mrf.mxu0
    %v1246 = vadd.f32 0.0, %v1245
    %v1247 = vpop.f32.mrf.mxu0
    %1248 = vmatprep.mubr.bf16.mxu0 0
    %1249 = vmatmul.mubr.bf16.gmra.mxu0 %v1206
    %v1250 = vpop.f32.mrf.mxu0
    %v1251 = vadd.f32 0.0, %v1250
    %v1252 = vpop.f32.mrf.mxu0
    %v1253 = vpop.f32.mrf.mxu0
    %v1254 = vpop.f32.mrf.mxu0
    %1255 = vdwg.mxu0
    %v1256 = vadd.f32 %v237, %v1243
    %v1257 = vadd.f32 %v240, %v1246
    %v1258 = vadd.f32 %v245, %v1251
    %v1259 = vld [vmem:[%s9] sm:$0x1]
    %v1261 = vlaneseq
    %v1262 = vshrl.u32 %v1261, 7
    %v1263 = vsub.s32 0, %v1262
    %v1264 = vrot.slane %v1259, %v1263
    %v1266 = vadd.f32 %v1256, %v1264
    %v1267 = vadd.f32 %v1257, %v1264
    %v1268 = vadd.f32 %v1258, %v1264
    %v1269 = vld [vmem:[%s10] sm:$0x1]
    %v1270 = vld [vmem:[%s11] sm:$0x1]
    %v1271 = vsel %vm255, %v1266, 0.0
    %1272 = vadd.xlane.f32.xlu0 %v1271
    %v1273 = vpop.xlane.xlu0 %1272
    %v1274 = vsel %vm255, %v1267, 0.0
    %1275 = vadd.xlane.f32.xlu0 %v1274
    %v1276 = vpop.xlane.xlu0 %1275
    %v1277 = vsel %vm262, %v1268, 0.0
    %1278 = vadd.xlane.f32.xlu0 %v1277
    %v1279 = vpop.xlane.xlu0 %1278
    %v1280 = vmul.f32 %v1273, %v266
    %v1281 = vmul.f32 %v1276, %v266
    %v1282 = vmul.f32 %v1279, %v266
    %v1283 = vsub.f32 %v1266, %v1280
    %v1284 = vsub.f32 %v1267, %v1281
    %v1285 = vsub.f32 %v1268, %v1282
    %v1286 = vmul.f32 %v1283, %v1283
    %v1287 = vmul.f32 %v1284, %v1284
    %v1288 = vmul.f32 %v1285, %v1285
    %v1289 = vsel %vm255, %v1286, 0.0
    %1290 = vadd.xlane.f32.xlu0 %v1289
    %v1291 = vpop.xlane.xlu0 %1290
    %v1292 = vsel %vm255, %v1287, 0.0
    %1293 = vadd.xlane.f32.xlu0 %v1292
    %v1294 = vpop.xlane.xlu0 %1293
    %v1295 = vsel %vm262, %v1288, 0.0
    %1296 = vadd.xlane.f32.xlu0 %v1295
    %v1297 = vpop.xlane.xlu0 %1296
    %v1298 = vmul.f32 %v1291, %v266
    %v1299 = vmul.f32 %v1294, %v266
    %v1300 = vmul.f32 %v1297, %v266
    %v1301 = vadd.f32 %v1298, 1e-06
    %v1302 = vadd.f32 %v1299, 1e-06
    %v1303 = vadd.f32 %v1300, 1e-06
    %v1304 = vrsqrt.pop %v1301
    %v1305 = vrsqrt.pop %v1302
    %v1306 = vrsqrt.pop %v1303
    %v1307 = vmul.f32 %v1283, %v1304
    %v1308 = vmul.f32 %v1284, %v1305
    %v1309 = vmul.f32 %v1285, %v1306
    %v1311 = vlaneseq
    %v1312 = vshrl.u32 %v1311, 7
    %v1313 = vsub.s32 0, %v1312
    %v1314 = vrot.slane %v1269, %v1313
    %v1316 = vmul.f32 %v1307, %v1314
    %v1317 = vmul.f32 %v1308, %v1314
    %v1318 = vmul.f32 %v1309, %v1314
    %v1320 = vlaneseq
    %v1321 = vshrl.u32 %v1320, 7
    %v1322 = vsub.s32 0, %v1321
    %v1323 = vrot.slane %v1270, %v1322
    %v1325 = vadd.f32 %v1316, %v1323
    %v1326 = vadd.f32 %v1317, %v1323
    %v1327 = vadd.f32 %v1318, %v1323
    %v1328 = vld [vmem:[%s12] sm:$0xff]
    %v1329 = vld [vmem:[%s12 + $0x8] sm:$0xff]
    %v1330 = vld [vmem:[%s12 + $0x10] sm:$0xff]
    %v1331 = vld [vmem:[%s12 + $0x18] sm:$0xff]
    %v1332 = vld [vmem:[%s12 + $0x20] sm:$0xff]
    %v1333 = vld [vmem:[%s12 + $0x28] sm:$0xff]
    %v1334 = vld [vmem:[%s12 + $0x30] sm:$0xff]
    %v1335 = vld [vmem:[%s12 + $0x38] sm:$0xff]
    %v1336 = vpack.c.bf16 %v1326, %v1325
    %v1337 = vpack.c.bf16 %v1327, %v1327
    %v1338 = vld [vmem:[%s13] sm:$0x3]
    %v1340 = vlaneseq
    %v1341 = vshrl.u32 %v1340, 7
    %v1342 = vsub.s32 0, %v1341
    %v1343 = vrot.slane %v1338, %v1342
    %v1344 = vlaneseq
    %v1345 = vshrl.u32 %v1344, 7
    %v1346 = vsub.s32 1, %v1345
    %v1347 = vrot.slane %v1338, %v1346
    %v1358 = vunpack.c.l.b16 %v1328
    %v1359 = vunpack.c.h.b16 %v1328
    %v1360 = vunpack.c.l.b16 %v1329
    %v1361 = vunpack.c.h.b16 %v1329
    %v1362 = vunpack.c.l.b16 %v1330
    %v1363 = vunpack.c.h.b16 %v1330
    %v1364 = vunpack.c.l.b16 %v1331
    %v1365 = vunpack.c.h.b16 %v1331
    %v1366 = vunpack.c.l.b16 %v1332
    %v1367 = vunpack.c.h.b16 %v1332
    %v1368 = vunpack.c.l.b16 %v1333
    %v1369 = vunpack.c.h.b16 %v1333
    %v1370 = vunpack.c.l.b16 %v1334
    %v1371 = vunpack.c.h.b16 %v1334
    %v1372 = vunpack.c.l.b16 %v1335
    %v1373 = vunpack.c.h.b16 %v1335
    %v1374 = vpack.c.b16 %v1360, %v1358
    %v1375 = vpack.c.b16 %v1361, %v1359
    %v1376 = vpack.c.b16 %v1364, %v1362
    %v1377 = vpack.c.b16 %v1365, %v1363
    %v1378 = vpack.c.b16 %v1368, %v1366
    %v1379 = vpack.c.b16 %v1369, %v1367
    %v1380 = vpack.c.b16 %v1372, %v1370
    %v1381 = vpack.c.b16 %v1373, %v1371
    %v1391 = vsel %vm255, %v1336, 0
    %v1394 = vsel %vm255, %v1337, 0
    %1396 = vmatprep.subr.bf16.mxu0 0
    %1397 = vmatpush1.bf16.msra.mxu0 0
    %1398 = vmatprep.subr.bf16.mxu0 0
    %1399 = vmatpush1.bf16.msra.mxu0 0
    %1400 = vmatprep.subr.bf16.mxu0 0
    %1401 = vmatpush1.bf16.msra.mxu0 0
    %1402 = vmatprep.subr.bf16.mxu0 0
    %1403 = vmatpush1.bf16.msra.mxu0 0
    %1404 = vmatprep.subr.bf16.mxu0 %v1381
    %1405 = vmatpush1.bf16.msra.mxu0 %v1380
    %1406 = vmatprep.subr.bf16.mxu0 %v1379
    %1407 = vmatpush1.bf16.msra.mxu0 %v1378
    %1408 = vmatprep.subr.bf16.mxu0 %v1377
    %1409 = vmatpush1.bf16.msra.mxu0 %v1376
    %1410 = vmatprep.subr.bf16.mxu0 %v1375
    %1411 = vmatpush1.bf16.msra.mxu0 %v1374
    %1412 = vmatprep.subr.bf16.mxu0 0
    %1413 = vmatpush2.bf16.msra.mxu0 0
    %1414 = vmatprep.subr.bf16.mxu0 0
    %1415 = vmatpush2.bf16.msra.mxu0 0
    %1416 = vmatprep.subr.bf16.mxu0 0
    %1417 = vmatpush2.bf16.msra.mxu0 0
    %1418 = vmatprep.subr.bf16.mxu0 0
    %1419 = vmatpush2.bf16.msra.mxu0 0
    %1420 = vmatprep.subr.bf16.mxu0 0
    %1421 = vmatpush2.bf16.msra.mxu0 0
    %1422 = vmatprep.subr.bf16.mxu0 0
    %1423 = vmatpush2.bf16.msra.mxu0 0
    %1424 = vmatprep.subr.bf16.mxu0 0
    %1425 = vmatpush2.bf16.msra.mxu0 0
    %1426 = vmatprep.subr.bf16.mxu0 0
    %1427 = vmatpush2.bf16.msra.mxu0 0
    %1428 = vmatprep.mubr.bf16.mxu0 0
    %1429 = vmatmul.mubr.bf16.gmra.mxu0 %v1391
    %v1430 = vpop.f32.mrf.mxu0
    %v1431 = vadd.f32 %v1343, %v1430
    %v1432 = vpop.f32.mrf.mxu0
    %v1433 = vadd.f32 %v1347, %v1432
    %v1434 = vpop.f32.mrf.mxu0
    %v1435 = vadd.f32 %v1343, %v1434
    %v1436 = vpop.f32.mrf.mxu0
    %v1437 = vadd.f32 %v1347, %v1436
    %1438 = vmatprep.mubr.bf16.mxu0 0
    %1439 = vmatmul.mubr.bf16.gmra.mxu0 %v1394
    %v1440 = vpop.f32.mrf.mxu0
    %v1441 = vadd.f32 %v1343, %v1440
    %v1442 = vpop.f32.mrf.mxu0
    %v1443 = vadd.f32 %v1347, %v1442
    %v1444 = vpop.f32.mrf.mxu0
    %v1445 = vpop.f32.mrf.mxu0
    %1446 = vdwg.mxu0
    %v1447 = vmul.f32 %v1431, 0.5
    %v1448 = vmul.f32 %v1433, 0.5
    %v1449 = vmul.f32 %v1435, 0.5
    %v1450 = vmul.f32 %v1437, 0.5
    %v1451 = vmul.f32 %v1441, 0.5
    %v1452 = vmul.f32 %v1443, 0.5
    %v1453 = vmul.f32 %v1431, 0.044715
    %v1454 = vmul.f32 %v1433, 0.044715
    %v1455 = vmul.f32 %v1435, 0.044715
    %v1456 = vmul.f32 %v1437, 0.044715
    %v1457 = vmul.f32 %v1441, 0.044715
    %v1458 = vmul.f32 %v1443, 0.044715
    %v1459 = vmul.f32 %v1453, %v1431
    %v1460 = vmul.f32 %v1454, %v1433
    %v1461 = vmul.f32 %v1455, %v1435
    %v1462 = vmul.f32 %v1456, %v1437
    %v1463 = vmul.f32 %v1457, %v1441
    %v1464 = vmul.f32 %v1458, %v1443
    %v1465 = vmul.f32 %v1459, %v1431
    %v1466 = vmul.f32 %v1460, %v1433
    %v1467 = vmul.f32 %v1461, %v1435
    %v1468 = vmul.f32 %v1462, %v1437
    %v1469 = vmul.f32 %v1463, %v1441
    %v1470 = vmul.f32 %v1464, %v1443
    %v1471 = vadd.f32 %v1431, %v1465
    %v1472 = vadd.f32 %v1433, %v1466
    %v1473 = vadd.f32 %v1435, %v1467
    %v1474 = vadd.f32 %v1437, %v1468
    %v1475 = vadd.f32 %v1441, %v1469
    %v1476 = vadd.f32 %v1443, %v1470
    %v1477 = vmul.f32 %v1471, 0.7978846
    %v1478 = vmul.f32 %v1472, 0.7978846
    %v1479 = vmul.f32 %v1473, 0.7978846
    %v1480 = vmul.f32 %v1474, 0.7978846
    %v1481 = vmul.f32 %v1475, 0.7978846
    %v1482 = vmul.f32 %v1476, 0.7978846
    %v1483 = vtanh.pop %v1477
    %v1484 = vtanh.pop %v1478
    %v1485 = vtanh.pop %v1479
    %v1486 = vtanh.pop %v1480
    %v1487 = vtanh.pop %v1481
    %v1488 = vtanh.pop %v1482
    %v1489 = vadd.f32 %v1483, 1.0
    %v1490 = vadd.f32 %v1484, 1.0
    %v1491 = vadd.f32 %v1485, 1.0
    %v1492 = vadd.f32 %v1486, 1.0
    %v1493 = vadd.f32 %v1487, 1.0
    %v1494 = vadd.f32 %v1488, 1.0
    %v1495 = vmul.f32 %v1447, %v1489
    %v1496 = vmul.f32 %v1448, %v1490
    %v1497 = vmul.f32 %v1449, %v1491
    %v1498 = vmul.f32 %v1450, %v1492
    %v1499 = vmul.f32 %v1451, %v1493
    %v1500 = vmul.f32 %v1452, %v1494
    %v1501 = vld [vmem:[%s14] sm:$0xf]
    %v1502 = vld [vmem:[%s14 + $0x4] sm:$0xf]
    %v1503 = vld [vmem:[%s14 + $0x8] sm:$0xf]
    %v1504 = vld [vmem:[%s14 + $0xc] sm:$0xf]
    %v1505 = vld [vmem:[%s14 + $0x10] sm:$0xf]
    %v1506 = vld [vmem:[%s14 + $0x14] sm:$0xf]
    %v1507 = vld [vmem:[%s14 + $0x18] sm:$0xf]
    %v1508 = vld [vmem:[%s14 + $0x1c] sm:$0xf]
    %v1509 = vld [vmem:[%s14 + $0x20] sm:$0xf]
    %v1510 = vld [vmem:[%s14 + $0x24] sm:$0xf]
    %v1511 = vld [vmem:[%s14 + $0x28] sm:$0xf]
    %v1512 = vld [vmem:[%s14 + $0x2c] sm:$0xf]
    %v1513 = vld [vmem:[%s14 + $0x30] sm:$0xf]
    %v1514 = vld [vmem:[%s14 + $0x34] sm:$0xf]
    %v1515 = vld [vmem:[%s14 + $0x38] sm:$0xf]
    %v1516 = vld [vmem:[%s14 + $0x3c] sm:$0xf]
    %v1517 = vld [vmem:[%s14 + $0x40] sm:$0xf]
    %v1518 = vld [vmem:[%s14 + $0x44] sm:$0xf]
    %v1519 = vld [vmem:[%s14 + $0x48] sm:$0xf]
    %v1520 = vld [vmem:[%s14 + $0x4c] sm:$0xf]
    %v1521 = vld [vmem:[%s14 + $0x50] sm:$0xf]
    %v1522 = vld [vmem:[%s14 + $0x54] sm:$0xf]
    %v1523 = vld [vmem:[%s14 + $0x58] sm:$0xf]
    %v1524 = vld [vmem:[%s14 + $0x5c] sm:$0xf]
    %v1525 = vld [vmem:[%s14 + $0x60] sm:$0xf]
    %v1526 = vld [vmem:[%s14 + $0x64] sm:$0xf]
    %v1527 = vld [vmem:[%s14 + $0x68] sm:$0xf]
    %v1528 = vld [vmem:[%s14 + $0x6c] sm:$0xf]
    %v1529 = vld [vmem:[%s14 + $0x70] sm:$0xf]
    %v1530 = vld [vmem:[%s14 + $0x74] sm:$0xf]
    %v1531 = vld [vmem:[%s14 + $0x78] sm:$0xf]
    %v1532 = vld [vmem:[%s14 + $0x7c] sm:$0xf]
    %v1533 = vpack.c.bf16 %v1497, %v1495
    %v1534 = vpack.c.bf16 %v1498, %v1496
    %v1535 = vpack.c.bf16 %v1499, %v1499
    %v1536 = vpack.c.bf16 %v1500, %v1500
    %v1537 = vld [vmem:[%s15] sm:$0x1]
    %v1539 = vlaneseq
    %v1540 = vshrl.u32 %v1539, 7
    %v1541 = vsub.s32 0, %v1540
    %v1542 = vrot.slane %v1537, %v1541
    %v1576 = vunpack.c.l.b16 %v1501
    %v1577 = vunpack.c.l.b16 %v1502
    %v1578 = vunpack.c.l.b16 %v1503
    %v1579 = vunpack.c.l.b16 %v1504
    %v1580 = vunpack.c.l.b16 %v1505
    %v1581 = vunpack.c.l.b16 %v1506
    %v1582 = vunpack.c.l.b16 %v1507
    %v1583 = vunpack.c.l.b16 %v1508
    %v1584 = vunpack.c.l.b16 %v1509
    %v1585 = vunpack.c.l.b16 %v1510
    %v1586 = vunpack.c.l.b16 %v1511
    %v1587 = vunpack.c.l.b16 %v1512
    %v1588 = vunpack.c.l.b16 %v1513
    %v1589 = vunpack.c.l.b16 %v1514
    %v1590 = vunpack.c.l.b16 %v1515
    %v1591 = vunpack.c.l.b16 %v1516
    %v1592 = vunpack.c.l.b16 %v1517
    %v1593 = vunpack.c.l.b16 %v1518
    %v1594 = vunpack.c.l.b16 %v1519
    %v1595 = vunpack.c.l.b16 %v1520
    %v1596 = vunpack.c.l.b16 %v1521
    %v1597 = vunpack.c.l.b16 %v1522
    %v1598 = vunpack.c.l.b16 %v1523
    %v1599 = vunpack.c.l.b16 %v1524
    %v1600 = vunpack.c.l.b16 %v1525
    %v1601 = vunpack.c.l.b16 %v1526
    %v1602 = vunpack.c.l.b16 %v1527
    %v1603 = vunpack.c.l.b16 %v1528
    %v1604 = vunpack.c.l.b16 %v1529
    %v1605 = vunpack.c.l.b16 %v1530
    %v1606 = vunpack.c.l.b16 %v1531
    %v1607 = vunpack.c.l.b16 %v1532
    %v1608 = vpack.c.b16 %v1577, %v1576
    %v1609 = vpack.c.b16 %v1579, %v1578
    %v1610 = vpack.c.b16 %v1581, %v1580
    %v1611 = vpack.c.b16 %v1583, %v1582
    %v1612 = vpack.c.b16 %v1585, %v1584
    %v1613 = vpack.c.b16 %v1587, %v1586
    %v1614 = vpack.c.b16 %v1589, %v1588
    %v1615 = vpack.c.b16 %v1591, %v1590
    %v1616 = vpack.c.b16 %v1593, %v1592
    %v1617 = vpack.c.b16 %v1595, %v1594
    %v1618 = vpack.c.b16 %v1597, %v1596
    %v1619 = vpack.c.b16 %v1599, %v1598
    %v1620 = vpack.c.b16 %v1601, %v1600
    %v1621 = vpack.c.b16 %v1603, %v1602
    %v1622 = vpack.c.b16 %v1605, %v1604
    %v1623 = vpack.c.b16 %v1607, %v1606
    %1640 = vmatprep.subr.bf16.mxu0 0
    %1641 = vmatpush1.bf16.msra.mxu0 %v1615
    %1642 = vmatprep.subr.bf16.mxu0 0
    %1643 = vmatpush1.bf16.msra.mxu0 %v1614
    %1644 = vmatprep.subr.bf16.mxu0 0
    %1645 = vmatpush1.bf16.msra.mxu0 %v1613
    %1646 = vmatprep.subr.bf16.mxu0 0
    %1647 = vmatpush1.bf16.msra.mxu0 %v1612
    %1648 = vmatprep.subr.bf16.mxu0 0
    %1649 = vmatpush1.bf16.msra.mxu0 %v1611
    %1650 = vmatprep.subr.bf16.mxu0 0
    %1651 = vmatpush1.bf16.msra.mxu0 %v1610
    %1652 = vmatprep.subr.bf16.mxu0 0
    %1653 = vmatpush1.bf16.msra.mxu0 %v1609
    %1654 = vmatprep.subr.bf16.mxu0 0
    %1655 = vmatpush1.bf16.msra.mxu0 %v1608
    %1656 = vmatprep.subr.bf16.mxu0 0
    %1657 = vmatpush2.bf16.msra.mxu0 %v1623
    %1658 = vmatprep.subr.bf16.mxu0 0
    %1659 = vmatpush2.bf16.msra.mxu0 %v1622
    %1660 = vmatprep.subr.bf16.mxu0 0
    %1661 = vmatpush2.bf16.msra.mxu0 %v1621
    %1662 = vmatprep.subr.bf16.mxu0 0
    %1663 = vmatpush2.bf16.msra.mxu0 %v1620
    %1664 = vmatprep.subr.bf16.mxu0 0
    %1665 = vmatpush2.bf16.msra.mxu0 %v1619
    %1666 = vmatprep.subr.bf16.mxu0 0
    %1667 = vmatpush2.bf16.msra.mxu0 %v1618
    %1668 = vmatprep.subr.bf16.mxu0 0
    %1669 = vmatpush2.bf16.msra.mxu0 %v1617
    %1670 = vmatprep.subr.bf16.mxu0 0
    %1671 = vmatpush2.bf16.msra.mxu0 %v1616
    %1672 = vmatprep.mubr.bf16.mxu0 %v1534
    %1673 = vmatmul.mubr.bf16.gmra.mxu0 %v1533
    %v1674 = vpop.f32.mrf.mxu0
    %v1675 = vadd.f32 %v1542, %v1674
    %v1676 = vpop.f32.mrf.mxu0
    %v1677 = vpop.f32.mrf.mxu0
    %v1678 = vadd.f32 %v1542, %v1677
    %v1679 = vpop.f32.mrf.mxu0
    %1680 = vmatprep.mubr.bf16.mxu0 %v1536
    %1681 = vmatmul.mubr.bf16.gmra.mxu0 %v1535
    %v1682 = vpop.f32.mrf.mxu0
    %v1683 = vadd.f32 %v1542, %v1682
    %v1684 = vpop.f32.mrf.mxu0
    %v1685 = vpop.f32.mrf.mxu0
    %v1686 = vpop.f32.mrf.mxu0
    %1687 = vdwg.mxu0
    %v1688 = vadd.f32 %v1266, %v1675
    %v1689 = vadd.f32 %v1267, %v1678
    %v1690 = vadd.f32 %v1268, %v1683
    %s1691 = scalar_lea.vmem %s4, 1
    %v1692 = vld [vmem:[%s1691] sm:$0x1]
    %s1693 = scalar_lea.vmem %s5, 1
    %v1694 = vld [vmem:[%s1693] sm:$0x1]
    %v1695 = vsel %vm255, %v1688, 0.0
    %1696 = vadd.xlane.f32.xlu0 %v1695
    %v1697 = vpop.xlane.xlu0 %1696
    %v1698 = vsel %vm255, %v1689, 0.0
    %1699 = vadd.xlane.f32.xlu0 %v1698
    %v1700 = vpop.xlane.xlu0 %1699
    %v1701 = vsel %vm262, %v1690, 0.0
    %1702 = vadd.xlane.f32.xlu0 %v1701
    %v1703 = vpop.xlane.xlu0 %1702
    %v1704 = vmul.f32 %v1697, %v266
    %v1705 = vmul.f32 %v1700, %v266
    %v1706 = vmul.f32 %v1703, %v266
    %v1707 = vsub.f32 %v1688, %v1704
    %v1708 = vsub.f32 %v1689, %v1705
    %v1709 = vsub.f32 %v1690, %v1706
    %v1710 = vmul.f32 %v1707, %v1707
    %v1711 = vmul.f32 %v1708, %v1708
    %v1712 = vmul.f32 %v1709, %v1709
    %v1713 = vsel %vm255, %v1710, 0.0
    %1714 = vadd.xlane.f32.xlu0 %v1713
    %v1715 = vpop.xlane.xlu0 %1714
    %v1716 = vsel %vm255, %v1711, 0.0
    %1717 = vadd.xlane.f32.xlu0 %v1716
    %v1718 = vpop.xlane.xlu0 %1717
    %v1719 = vsel %vm262, %v1712, 0.0
    %1720 = vadd.xlane.f32.xlu0 %v1719
    %v1721 = vpop.xlane.xlu0 %1720
    %v1722 = vmul.f32 %v1715, %v266
    %v1723 = vmul.f32 %v1718, %v266
    %v1724 = vmul.f32 %v1721, %v266
    %v1725 = vadd.f32 %v1722, 1e-06
    %v1726 = vadd.f32 %v1723, 1e-06
    %v1727 = vadd.f32 %v1724, 1e-06
    %v1728 = vrsqrt.pop %v1725
    %v1729 = vrsqrt.pop %v1726
    %v1730 = vrsqrt.pop %v1727
    %v1731 = vmul.f32 %v1707, %v1728
    %v1732 = vmul.f32 %v1708, %v1729
    %v1733 = vmul.f32 %v1709, %v1730
    %v1735 = vlaneseq
    %v1736 = vshrl.u32 %v1735, 7
    %v1737 = vsub.s32 0, %v1736
    %v1738 = vrot.slane %v1692, %v1737
    %v1740 = vmul.f32 %v1731, %v1738
    %v1741 = vmul.f32 %v1732, %v1738
    %v1742 = vmul.f32 %v1733, %v1738
    %v1744 = vlaneseq
    %v1745 = vshrl.u32 %v1744, 7
    %v1746 = vsub.s32 0, %v1745
    %v1747 = vrot.slane %v1694, %v1746
    %v1749 = vadd.f32 %v1740, %v1747
    %v1750 = vadd.f32 %v1741, %v1747
    %v1751 = vadd.f32 %v1742, %v1747
    %s1752 = scalar_lea.vmem %s6, 64
    %v1753 = vld [vmem:[%s1752] sm:$0xff]
    %v1754 = vld [vmem:[%s1752 + $0x8] sm:$0xff]
    %v1755 = vld [vmem:[%s1752 + $0x10] sm:$0xff]
    %v1756 = vld [vmem:[%s1752 + $0x18] sm:$0xff]
    %v1757 = vld [vmem:[%s1752 + $0x20] sm:$0xff]
    %v1758 = vld [vmem:[%s1752 + $0x28] sm:$0xff]
    %v1759 = vld [vmem:[%s1752 + $0x30] sm:$0xff]
    %v1760 = vld [vmem:[%s1752 + $0x38] sm:$0xff]
    %v1761 = vpack.c.bf16 %v1750, %v1749
    %v1762 = vpack.c.bf16 %v1751, %v1751
    %s1763 = scalar_lea.vmem %s7, 2
    %v1764 = vld [vmem:[%s1763] sm:$0x3]
    %v1766 = vlaneseq
    %v1767 = vshrl.u32 %v1766, 7
    %v1768 = vsub.s32 0, %v1767
    %v1769 = vrot.slane %v1764, %v1768
    %v1770 = vlaneseq
    %v1771 = vshrl.u32 %v1770, 7
    %v1772 = vsub.s32 1, %v1771
    %v1773 = vrot.slane %v1764, %v1772
    %v1784 = vunpack.c.l.b16 %v1753
    %v1785 = vunpack.c.h.b16 %v1753
    %v1786 = vunpack.c.l.b16 %v1754
    %v1787 = vunpack.c.h.b16 %v1754
    %v1788 = vunpack.c.l.b16 %v1755
    %v1789 = vunpack.c.h.b16 %v1755
    %v1790 = vunpack.c.l.b16 %v1756
    %v1791 = vunpack.c.h.b16 %v1756
    %v1792 = vunpack.c.l.b16 %v1757
    %v1793 = vunpack.c.h.b16 %v1757
    %v1794 = vunpack.c.l.b16 %v1758
    %v1795 = vunpack.c.h.b16 %v1758
    %v1796 = vunpack.c.l.b16 %v1759
    %v1797 = vunpack.c.h.b16 %v1759
    %v1798 = vunpack.c.l.b16 %v1760
    %v1799 = vunpack.c.h.b16 %v1760
    %v1800 = vpack.c.b16 %v1786, %v1784
    %v1801 = vpack.c.b16 %v1787, %v1785
    %v1802 = vpack.c.b16 %v1790, %v1788
    %v1803 = vpack.c.b16 %v1791, %v1789
    %v1804 = vpack.c.b16 %v1794, %v1792
    %v1805 = vpack.c.b16 %v1795, %v1793
    %v1806 = vpack.c.b16 %v1798, %v1796
    %v1807 = vpack.c.b16 %v1799, %v1797
    %v1817 = vsel %vm255, %v1761, 0
    %v1820 = vsel %vm255, %v1762, 0
    %1822 = vmatprep.subr.bf16.mxu0 0
    %1823 = vmatpush1.bf16.msra.mxu0 0
    %1824 = vmatprep.subr.bf16.mxu0 0
    %1825 = vmatpush1.bf16.msra.mxu0 0
    %1826 = vmatprep.subr.bf16.mxu0 0
    %1827 = vmatpush1.bf16.msra.mxu0 0
    %1828 = vmatprep.subr.bf16.mxu0 0
    %1829 = vmatpush1.bf16.msra.mxu0 0
    %1830 = vmatprep.subr.bf16.mxu0 %v1807
    %1831 = vmatpush1.bf16.msra.mxu0 %v1806
    %1832 = vmatprep.subr.bf16.mxu0 %v1805
    %1833 = vmatpush1.bf16.msra.mxu0 %v1804
    %1834 = vmatprep.subr.bf16.mxu0 %v1803
    %1835 = vmatpush1.bf16.msra.mxu0 %v1802
    %1836 = vmatprep.subr.bf16.mxu0 %v1801
    %1837 = vmatpush1.bf16.msra.mxu0 %v1800
    %1838 = vmatprep.subr.bf16.mxu0 0
    %1839 = vmatpush2.bf16.msra.mxu0 0
    %1840 = vmatprep.subr.bf16.mxu0 0
    %1841 = vmatpush2.bf16.msra.mxu0 0
    %1842 = vmatprep.subr.bf16.mxu0 0
    %1843 = vmatpush2.bf16.msra.mxu0 0
    %1844 = vmatprep.subr.bf16.mxu0 0
    %1845 = vmatpush2.bf16.msra.mxu0 0
    %1846 = vmatprep.subr.bf16.mxu0 0
    %1847 = vmatpush2.bf16.msra.mxu0 0
    %1848 = vmatprep.subr.bf16.mxu0 0
    %1849 = vmatpush2.bf16.msra.mxu0 0
    %1850 = vmatprep.subr.bf16.mxu0 0
    %1851 = vmatpush2.bf16.msra.mxu0 0
    %1852 = vmatprep.subr.bf16.mxu0 0
    %1853 = vmatpush2.bf16.msra.mxu0 0
    %1854 = vmatprep.mubr.bf16.mxu0 0
    %1855 = vmatmul.mubr.bf16.gmra.mxu0 %v1817
    %v1856 = vpop.f32.mrf.mxu0
    %v1857 = vadd.f32 %v1769, %v1856
    %v1858 = vpop.f32.mrf.mxu0
    %v1859 = vadd.f32 %v1773, %v1858
    %v1860 = vpop.f32.mrf.mxu0
    %v1861 = vadd.f32 %v1769, %v1860
    %v1862 = vpop.f32.mrf.mxu0
    %v1863 = vadd.f32 %v1773, %v1862
    %1864 = vmatprep.mubr.bf16.mxu0 0
    %1865 = vmatmul.mubr.bf16.gmra.mxu0 %v1820
    %v1866 = vpop.f32.mrf.mxu0
    %v1867 = vadd.f32 %v1769, %v1866
    %v1868 = vpop.f32.mrf.mxu0
    %v1869 = vadd.f32 %v1773, %v1868
    %v1870 = vpop.f32.mrf.mxu0
    %v1871 = vpop.f32.mrf.mxu0
    %1872 = vdwg.mxu0
    %v1873 = vpack.c.bf16 %v1861, %v1857
    %v1874 = vpack.c.bf16 %v1867, %v1867
    %1877 = vrot.lane.b32.xlu0 %v1873, 64
    %v1878 = vpop.permute.xlu0 %1877
    %1879 = vrot.lane.b32.xlu0 %v1874, 64
    %v1880 = vpop.permute.xlu0 %1879
    %v1882 = vsel %vm442, %v1873, 0
    %v1885 = vsel %vm442, %v1874, 0
    %v1888 = vsel %vm442, %v1878, 0
    %v1891 = vsel %vm442, %v1880, 0
    %1893 = vmatprep.subr.bf16.mxu0 0
    %1894 = vmatpush1.bf16.xpose.msra.mxu0 0
    %1895 = vmatprep.subr.bf16.mxu0 0
    %1896 = vmatpush1.bf16.xpose.msra.mxu0 0
    %1897 = vmatprep.subr.bf16.mxu0 0
    %1898 = vmatpush1.bf16.xpose.msra.mxu0 0
    %1899 = vmatprep.subr.bf16.mxu0 0
    %1900 = vmatpush1.bf16.xpose.msra.mxu0 0
    %1901 = vmatprep.subr.bf16.mxu0 0
    %1902 = vmatpush1.bf16.xpose.msra.mxu0 0
    %1903 = vmatprep.subr.bf16.mxu0 0
    %1904 = vmatpush1.bf16.xpose.msra.mxu0 0
    %1905 = vmatprep.subr.bf16.mxu0 0
    %1906 = vmatpush1.bf16.xpose.msra.mxu0 %v1891
    %1907 = vmatprep.subr.bf16.mxu0 0
    %1908 = vmatpush1.bf16.xpose.msra.mxu0 %v1888
    %1909 = vmatprep.subr.bf16.mxu0 0
    %1910 = vmatpush2.bf16.xpose.msra.mxu0 0
    %1911 = vmatprep.subr.bf16.mxu0 0
    %1912 = vmatpush2.bf16.xpose.msra.mxu0 0
    %1913 = vmatprep.subr.bf16.mxu0 0
    %1914 = vmatpush2.bf16.xpose.msra.mxu0 0
    %1915 = vmatprep.subr.bf16.mxu0 0
    %1916 = vmatpush2.bf16.xpose.msra.mxu0 0
    %1917 = vmatprep.subr.bf16.mxu0 0
    %1918 = vmatpush2.bf16.xpose.msra.mxu0 0
    %1919 = vmatprep.subr.bf16.mxu0 0
    %1920 = vmatpush2.bf16.xpose.msra.mxu0 0
    %1921 = vmatprep.subr.bf16.mxu0 0
    %1922 = vmatpush2.bf16.xpose.msra.mxu0 0
    %1923 = vmatprep.subr.bf16.mxu0 0
    %1924 = vmatpush2.bf16.xpose.msra.mxu0 0
    %1925 = vmatprep.mubr.bf16.mxu0 0
    %1926 = vmatmul.mubr.bf16.gmra.mxu0 %v1882
    %v1927 = vpop.f32.mrf.mxu0
    %v1928 = vadd.f32 0.0, %v1927
    %v1929 = vpop.f32.mrf.mxu0
    %v1930 = vpop.f32.mrf.mxu0
    %v1931 = vadd.f32 0.0, %v1930
    %v1932 = vpop.f32.mrf.mxu0
    %1933 = vmatprep.mubr.bf16.mxu0 0
    %1934 = vmatmul.mubr.bf16.gmra.mxu0 %v1885
    %v1935 = vpop.f32.mrf.mxu0
    %v1936 = vadd.f32 0.0, %v1935
    %v1937 = vpop.f32.mrf.mxu0
    %v1938 = vpop.f32.mrf.mxu0
    %v1939 = vpop.f32.mrf.mxu0
    %1940 = vdwg.mxu0
    %v1941 = vmul.f32 %v1928, 0.25
    %v1942 = vmul.f32 %v1931, 0.25
    %v1943 = vmul.f32 %v1936, 0.25
    %v1944 = vadd.f32 %v1941, %v250
    %v1945 = vadd.f32 %v1942, %v251
    %v1946 = vadd.f32 %v1943, %v252
    %v1947 = vsel %vm509, %v1944, -inf
    %1948 = vmax.xlane.f32.xlu0 %v1947
    %v1949 = vpop.xlane.xlu0 %1948
    %v1950 = vsel %vm509, %v1945, -inf
    %1951 = vmax.xlane.f32.xlu0 %v1950
    %v1952 = vpop.xlane.xlu0 %1951
    %v1953 = vsel %vm516, %v1946, -inf
    %1954 = vmax.xlane.f32.xlu0 %v1953
    %v1955 = vpop.xlane.xlu0 %1954
    %v1956 = vsub.f32 %v1944, %v1949
    %v1957 = vsub.f32 %v1945, %v1952
    %v1958 = vsub.f32 %v1946, %v1955
    %v1959 = vmul.f32 %v1956, 1.442695
    %v1960 = vpow.pop %v1959
    %v1961 = vmul.f32 %v1957, 1.442695
    %v1962 = vpow.pop %v1961
    %v1963 = vmul.f32 %v1958, 1.442695
    %v1964 = vpow.pop %v1963
    %v1965 = vsel %vm509, %v1960, 0.0
    %1966 = vadd.xlane.f32.xlu0 %v1965
    %v1967 = vpop.xlane.xlu0 %1966
    %v1968 = vsel %vm509, %v1962, 0.0
    %1969 = vadd.xlane.f32.xlu0 %v1968
    %v1970 = vpop.xlane.xlu0 %1969
    %v1971 = vsel %vm516, %v1964, 0.0
    %1972 = vadd.xlane.f32.xlu0 %v1971
    %v1973 = vpop.xlane.xlu0 %1972
    %v1974 = vrcp.pop %v1967
    %v1975 = vrcp.pop %v1970
    %v1976 = vrcp.pop %v1973
    %v1977 = vmul.f32 %v1960, %v1974
    %v1978 = vmul.f32 %v1962, %v1975
    %v1979 = vmul.f32 %v1964, %v1976
    %v1980 = vpack.c.bf16 %v1978, %v1977
    %v1981 = vpack.c.bf16 %v1979, %v1979
    %v1982 = vpack.c.bf16 %v1863, %v1859
    %v1983 = vpack.c.bf16 %v1869, %v1869
    %v1985 = vsel %vm509, %v1980, 0
    %v1988 = vsel %vm509, %v1981, 0
    %v1991 = vsel %vm554, %v1983, 0
    %1993 = vmatprep.subr.bf16.mxu0 0
    %1994 = vmatpush1.bf16.msra.mxu0 0
    %1995 = vmatprep.subr.bf16.mxu0 0
    %1996 = vmatpush1.bf16.msra.mxu0 0
    %1997 = vmatprep.subr.bf16.mxu0 0
    %1998 = vmatpush1.bf16.msra.mxu0 0
    %1999 = vmatprep.subr.bf16.mxu0 0
    %2000 = vmatpush1.bf16.msra.mxu0 0
    %2001 = vmatprep.subr.bf16.mxu0 0
    %2002 = vmatpush1.bf16.msra.mxu0 0
    %2003 = vmatprep.subr.bf16.mxu0 0
    %2004 = vmatpush1.bf16.msra.mxu0 0
    %2005 = vmatprep.subr.bf16.mxu0 0
    %2006 = vmatpush1.bf16.msra.mxu0 %v1991
    %2007 = vmatprep.subr.bf16.mxu0 0
    %2008 = vmatpush1.bf16.msra.mxu0 %v1982
    %2009 = vmatprep.subr.bf16.mxu0 0
    %2010 = vmatpush2.bf16.msra.mxu0 0
    %2011 = vmatprep.subr.bf16.mxu0 0
    %2012 = vmatpush2.bf16.msra.mxu0 0
    %2013 = vmatprep.subr.bf16.mxu0 0
    %2014 = vmatpush2.bf16.msra.mxu0 0
    %2015 = vmatprep.subr.bf16.mxu0 0
    %2016 = vmatpush2.bf16.msra.mxu0 0
    %2017 = vmatprep.subr.bf16.mxu0 0
    %2018 = vmatpush2.bf16.msra.mxu0 0
    %2019 = vmatprep.subr.bf16.mxu0 0
    %2020 = vmatpush2.bf16.msra.mxu0 0
    %2021 = vmatprep.subr.bf16.mxu0 0
    %2022 = vmatpush2.bf16.msra.mxu0 0
    %2023 = vmatprep.subr.bf16.mxu0 0
    %2024 = vmatpush2.bf16.msra.mxu0 0
    %2025 = vmatprep.mubr.bf16.mxu0 0
    %2026 = vmatmul.mubr.bf16.gmra.mxu0 %v1985
    %v2027 = vpop.f32.mrf.mxu0
    %v2028 = vadd.f32 0.0, %v2027
    %v2029 = vpop.f32.mrf.mxu0
    %v2030 = vpop.f32.mrf.mxu0
    %v2031 = vadd.f32 0.0, %v2030
    %v2032 = vpop.f32.mrf.mxu0
    %2033 = vmatprep.mubr.bf16.mxu0 0
    %2034 = vmatmul.mubr.bf16.gmra.mxu0 %v1988
    %v2035 = vpop.f32.mrf.mxu0
    %v2036 = vadd.f32 0.0, %v2035
    %v2037 = vpop.f32.mrf.mxu0
    %v2038 = vpop.f32.mrf.mxu0
    %v2039 = vpop.f32.mrf.mxu0
    %2040 = vdwg.mxu0
    %2041 = vrot.lane.b32.xlu0 %v1873, 112
    %v2042 = vpop.permute.xlu0 %2041
    %2043 = vrot.lane.b32.xlu0 %v1874, 112
    %v2044 = vpop.permute.xlu0 %2043
    %2045 = vrot.lane.b32.xlu0 %v1873, 48
    %v2046 = vpop.permute.xlu0 %2045
    %2047 = vrot.lane.b32.xlu0 %v1874, 48
    %v2048 = vpop.permute.xlu0 %2047
    %v2050 = vsel %vm442, %v2042, 0
    %v2053 = vsel %vm442, %v2044, 0
    %v2056 = vsel %vm442, %v2046, 0
    %v2059 = vsel %vm442, %v2048, 0
    %2061 = vmatprep.subr.bf16.mxu0 0
    %2062 = vmatpush1.bf16.xpose.msra.mxu0 0
    %2063 = vmatprep.subr.bf16.mxu0 0
    %2064 = vmatpush1.bf16.xpose.msra.mxu0 0
    %2065 = vmatprep.subr.bf16.mxu0 0
    %2066 = vmatpush1.bf16.xpose.msra.mxu0 0
    %2067 = vmatprep.subr.bf16.mxu0 0
    %2068 = vmatpush1.bf16.xpose.msra.mxu0 0
    %2069 = vmatprep.subr.bf16.mxu0 0
    %2070 = vmatpush1.bf16.xpose.msra.mxu0 0
    %2071 = vmatprep.subr.bf16.mxu0 0
    %2072 = vmatpush1.bf16.xpose.msra.mxu0 0
    %2073 = vmatprep.subr.bf16.mxu0 0
    %2074 = vmatpush1.bf16.xpose.msra.mxu0 %v2059
    %2075 = vmatprep.subr.bf16.mxu0 0
    %2076 = vmatpush1.bf16.xpose.msra.mxu0 %v2056
    %2077 = vmatprep.subr.bf16.mxu0 0
    %2078 = vmatpush2.bf16.xpose.msra.mxu0 0
    %2079 = vmatprep.subr.bf16.mxu0 0
    %2080 = vmatpush2.bf16.xpose.msra.mxu0 0
    %2081 = vmatprep.subr.bf16.mxu0 0
    %2082 = vmatpush2.bf16.xpose.msra.mxu0 0
    %2083 = vmatprep.subr.bf16.mxu0 0
    %2084 = vmatpush2.bf16.xpose.msra.mxu0 0
    %2085 = vmatprep.subr.bf16.mxu0 0
    %2086 = vmatpush2.bf16.xpose.msra.mxu0 0
    %2087 = vmatprep.subr.bf16.mxu0 0
    %2088 = vmatpush2.bf16.xpose.msra.mxu0 0
    %2089 = vmatprep.subr.bf16.mxu0 0
    %2090 = vmatpush2.bf16.xpose.msra.mxu0 0
    %2091 = vmatprep.subr.bf16.mxu0 0
    %2092 = vmatpush2.bf16.xpose.msra.mxu0 0
    %2093 = vmatprep.mubr.bf16.mxu0 0
    %2094 = vmatmul.mubr.bf16.gmra.mxu0 %v2050
    %v2095 = vpop.f32.mrf.mxu0
    %v2096 = vadd.f32 0.0, %v2095
    %v2097 = vpop.f32.mrf.mxu0
    %v2098 = vpop.f32.mrf.mxu0
    %v2099 = vadd.f32 0.0, %v2098
    %v2100 = vpop.f32.mrf.mxu0
    %2101 = vmatprep.mubr.bf16.mxu0 0
    %2102 = vmatmul.mubr.bf16.gmra.mxu0 %v2053
    %v2103 = vpop.f32.mrf.mxu0
    %v2104 = vadd.f32 0.0, %v2103
    %v2105 = vpop.f32.mrf.mxu0
    %v2106 = vpop.f32.mrf.mxu0
    %v2107 = vpop.f32.mrf.mxu0
    %2108 = vdwg.mxu0
    %v2109 = vmul.f32 %v2096, 0.25
    %v2110 = vmul.f32 %v2099, 0.25
    %v2111 = vmul.f32 %v2104, 0.25
    %v2112 = vadd.f32 %v2109, %v250
    %v2113 = vadd.f32 %v2110, %v251
    %v2114 = vadd.f32 %v2111, %v252
    %v2115 = vsel %vm509, %v2112, -inf
    %2116 = vmax.xlane.f32.xlu0 %v2115
    %v2117 = vpop.xlane.xlu0 %2116
    %v2118 = vsel %vm509, %v2113, -inf
    %2119 = vmax.xlane.f32.xlu0 %v2118
    %v2120 = vpop.xlane.xlu0 %2119
    %v2121 = vsel %vm516, %v2114, -inf
    %2122 = vmax.xlane.f32.xlu0 %v2121
    %v2123 = vpop.xlane.xlu0 %2122
    %v2124 = vsub.f32 %v2112, %v2117
    %v2125 = vsub.f32 %v2113, %v2120
    %v2126 = vsub.f32 %v2114, %v2123
    %v2127 = vmul.f32 %v2124, 1.442695
    %v2128 = vpow.pop %v2127
    %v2129 = vmul.f32 %v2125, 1.442695
    %v2130 = vpow.pop %v2129
    %v2131 = vmul.f32 %v2126, 1.442695
    %v2132 = vpow.pop %v2131
    %v2133 = vsel %vm509, %v2128, 0.0
    %2134 = vadd.xlane.f32.xlu0 %v2133
    %v2135 = vpop.xlane.xlu0 %2134
    %v2136 = vsel %vm509, %v2130, 0.0
    %2137 = vadd.xlane.f32.xlu0 %v2136
    %v2138 = vpop.xlane.xlu0 %2137
    %v2139 = vsel %vm516, %v2132, 0.0
    %2140 = vadd.xlane.f32.xlu0 %v2139
    %v2141 = vpop.xlane.xlu0 %2140
    %v2142 = vrcp.pop %v2135
    %v2143 = vrcp.pop %v2138
    %v2144 = vrcp.pop %v2141
    %v2145 = vmul.f32 %v2128, %v2142
    %v2146 = vmul.f32 %v2130, %v2143
    %v2147 = vmul.f32 %v2132, %v2144
    %v2148 = vpack.c.bf16 %v2146, %v2145
    %v2149 = vpack.c.bf16 %v2147, %v2147
    %2152 = vrot.lane.b32.xlu0 %v1982, 112
    %v2153 = vpop.permute.xlu0 %2152
    %2154 = vrot.lane.b32.xlu0 %v1983, 112
    %v2155 = vpop.permute.xlu0 %2154
    %v2158 = vsel %vm509, %v2148, 0
    %v2161 = vsel %vm509, %v2149, 0
    %v2164 = vsel %vm554, %v2155, 0
    %2166 = vmatprep.subr.bf16.mxu0 0
    %2167 = vmatpush1.bf16.msra.mxu0 0
    %2168 = vmatprep.subr.bf16.mxu0 0
    %2169 = vmatpush1.bf16.msra.mxu0 0
    %2170 = vmatprep.subr.bf16.mxu0 0
    %2171 = vmatpush1.bf16.msra.mxu0 0
    %2172 = vmatprep.subr.bf16.mxu0 0
    %2173 = vmatpush1.bf16.msra.mxu0 0
    %2174 = vmatprep.subr.bf16.mxu0 0
    %2175 = vmatpush1.bf16.msra.mxu0 0
    %2176 = vmatprep.subr.bf16.mxu0 0
    %2177 = vmatpush1.bf16.msra.mxu0 0
    %2178 = vmatprep.subr.bf16.mxu0 0
    %2179 = vmatpush1.bf16.msra.mxu0 %v2164
    %2180 = vmatprep.subr.bf16.mxu0 0
    %2181 = vmatpush1.bf16.msra.mxu0 %v2153
    %2182 = vmatprep.subr.bf16.mxu0 0
    %2183 = vmatpush2.bf16.msra.mxu0 0
    %2184 = vmatprep.subr.bf16.mxu0 0
    %2185 = vmatpush2.bf16.msra.mxu0 0
    %2186 = vmatprep.subr.bf16.mxu0 0
    %2187 = vmatpush2.bf16.msra.mxu0 0
    %2188 = vmatprep.subr.bf16.mxu0 0
    %2189 = vmatpush2.bf16.msra.mxu0 0
    %2190 = vmatprep.subr.bf16.mxu0 0
    %2191 = vmatpush2.bf16.msra.mxu0 0
    %2192 = vmatprep.subr.bf16.mxu0 0
    %2193 = vmatpush2.bf16.msra.mxu0 0
    %2194 = vmatprep.subr.bf16.mxu0 0
    %2195 = vmatpush2.bf16.msra.mxu0 0
    %2196 = vmatprep.subr.bf16.mxu0 0
    %2197 = vmatpush2.bf16.msra.mxu0 0
    %2198 = vmatprep.mubr.bf16.mxu0 0
    %2199 = vmatmul.mubr.bf16.gmra.mxu0 %v2158
    %v2200 = vpop.f32.mrf.mxu0
    %v2201 = vadd.f32 0.0, %v2200
    %v2202 = vpop.f32.mrf.mxu0
    %v2203 = vpop.f32.mrf.mxu0
    %v2204 = vadd.f32 0.0, %v2203
    %v2205 = vpop.f32.mrf.mxu0
    %2206 = vmatprep.mubr.bf16.mxu0 0
    %2207 = vmatmul.mubr.bf16.gmra.mxu0 %v2161
    %v2208 = vpop.f32.mrf.mxu0
    %v2209 = vadd.f32 0.0, %v2208
    %v2210 = vpop.f32.mrf.mxu0
    %v2211 = vpop.f32.mrf.mxu0
    %v2212 = vpop.f32.mrf.mxu0
    %2213 = vdwg.mxu0
    %2214 = vrot.lane.b32.xlu0 %v1873, 96
    %v2215 = vpop.permute.xlu0 %2214
    %2216 = vrot.lane.b32.xlu0 %v1874, 96
    %v2217 = vpop.permute.xlu0 %2216
    %2218 = vrot.lane.b32.xlu0 %v1873, 32
    %v2219 = vpop.permute.xlu0 %2218
    %2220 = vrot.lane.b32.xlu0 %v1874, 32
    %v2221 = vpop.permute.xlu0 %2220
    %v2223 = vsel %vm442, %v2215, 0
    %v2226 = vsel %vm442, %v2217, 0
    %v2229 = vsel %vm442, %v2219, 0
    %v2232 = vsel %vm442, %v2221, 0
    %2234 = vmatprep.subr.bf16.mxu0 0
    %2235 = vmatpush1.bf16.xpose.msra.mxu0 0
    %2236 = vmatprep.subr.bf16.mxu0 0
    %2237 = vmatpush1.bf16.xpose.msra.mxu0 0
    %2238 = vmatprep.subr.bf16.mxu0 0
    %2239 = vmatpush1.bf16.xpose.msra.mxu0 0
    %2240 = vmatprep.subr.bf16.mxu0 0
    %2241 = vmatpush1.bf16.xpose.msra.mxu0 0
    %2242 = vmatprep.subr.bf16.mxu0 0
    %2243 = vmatpush1.bf16.xpose.msra.mxu0 0
    %2244 = vmatprep.subr.bf16.mxu0 0
    %2245 = vmatpush1.bf16.xpose.msra.mxu0 0
    %2246 = vmatprep.subr.bf16.mxu0 0
    %2247 = vmatpush1.bf16.xpose.msra.mxu0 %v2232
    %2248 = vmatprep.subr.bf16.mxu0 0
    %2249 = vmatpush1.bf16.xpose.msra.mxu0 %v2229
    %2250 = vmatprep.subr.bf16.mxu0 0
    %2251 = vmatpush2.bf16.xpose.msra.mxu0 0
    %2252 = vmatprep.subr.bf16.mxu0 0
    %2253 = vmatpush2.bf16.xpose.msra.mxu0 0
    %2254 = vmatprep.subr.bf16.mxu0 0
    %2255 = vmatpush2.bf16.xpose.msra.mxu0 0
    %2256 = vmatprep.subr.bf16.mxu0 0
    %2257 = vmatpush2.bf16.xpose.msra.mxu0 0
    %2258 = vmatprep.subr.bf16.mxu0 0
    %2259 = vmatpush2.bf16.xpose.msra.mxu0 0
    %2260 = vmatprep.subr.bf16.mxu0 0
    %2261 = vmatpush2.bf16.xpose.msra.mxu0 0
    %2262 = vmatprep.subr.bf16.mxu0 0
    %2263 = vmatpush2.bf16.xpose.msra.mxu0 0
    %2264 = vmatprep.subr.bf16.mxu0 0
    %2265 = vmatpush2.bf16.xpose.msra.mxu0 0
    %2266 = vmatprep.mubr.bf16.mxu0 0
    %2267 = vmatmul.mubr.bf16.gmra.mxu0 %v2223
    %v2268 = vpop.f32.mrf.mxu0
    %v2269 = vadd.f32 0.0, %v2268
    %v2270 = vpop.f32.mrf.mxu0
    %v2271 = vpop.f32.mrf.mxu0
    %v2272 = vadd.f32 0.0, %v2271
    %v2273 = vpop.f32.mrf.mxu0
    %2274 = vmatprep.mubr.bf16.mxu0 0
    %2275 = vmatmul.mubr.bf16.gmra.mxu0 %v2226
    %v2276 = vpop.f32.mrf.mxu0
    %v2277 = vadd.f32 0.0, %v2276
    %v2278 = vpop.f32.mrf.mxu0
    %v2279 = vpop.f32.mrf.mxu0
    %v2280 = vpop.f32.mrf.mxu0
    %2281 = vdwg.mxu0
    %v2282 = vmul.f32 %v2269, 0.25
    %v2283 = vmul.f32 %v2272, 0.25
    %v2284 = vmul.f32 %v2277, 0.25
    %v2285 = vadd.f32 %v2282, %v250
    %v2286 = vadd.f32 %v2283, %v251
    %v2287 = vadd.f32 %v2284, %v252
    %v2288 = vsel %vm509, %v2285, -inf
    %2289 = vmax.xlane.f32.xlu0 %v2288
    %v2290 = vpop.xlane.xlu0 %2289
    %v2291 = vsel %vm509, %v2286, -inf
    %2292 = vmax.xlane.f32.xlu0 %v2291
    %v2293 = vpop.xlane.xlu0 %2292
    %v2294 = vsel %vm516, %v2287, -inf
    %2295 = vmax.xlane.f32.xlu0 %v2294
    %v2296 = vpop.xlane.xlu0 %2295
    %v2297 = vsub.f32 %v2285, %v2290
    %v2298 = vsub.f32 %v2286, %v2293
    %v2299 = vsub.f32 %v2287, %v2296
    %v2300 = vmul.f32 %v2297, 1.442695
    %v2301 = vpow.pop %v2300
    %v2302 = vmul.f32 %v2298, 1.442695
    %v2303 = vpow.pop %v2302
    %v2304 = vmul.f32 %v2299, 1.442695
    %v2305 = vpow.pop %v2304
    %v2306 = vsel %vm509, %v2301, 0.0
    %2307 = vadd.xlane.f32.xlu0 %v2306
    %v2308 = vpop.xlane.xlu0 %2307
    %v2309 = vsel %vm509, %v2303, 0.0
    %2310 = vadd.xlane.f32.xlu0 %v2309
    %v2311 = vpop.xlane.xlu0 %2310
    %v2312 = vsel %vm516, %v2305, 0.0
    %2313 = vadd.xlane.f32.xlu0 %v2312
    %v2314 = vpop.xlane.xlu0 %2313
    %v2315 = vrcp.pop %v2308
    %v2316 = vrcp.pop %v2311
    %v2317 = vrcp.pop %v2314
    %v2318 = vmul.f32 %v2301, %v2315
    %v2319 = vmul.f32 %v2303, %v2316
    %v2320 = vmul.f32 %v2305, %v2317
    %v2321 = vpack.c.bf16 %v2319, %v2318
    %v2322 = vpack.c.bf16 %v2320, %v2320
    %2323 = vrot.lane.b32.xlu0 %v1982, 96
    %v2324 = vpop.permute.xlu0 %2323
    %2325 = vrot.lane.b32.xlu0 %v1983, 96
    %v2326 = vpop.permute.xlu0 %2325
    %v2329 = vsel %vm509, %v2321, 0
    %v2332 = vsel %vm509, %v2322, 0
    %v2335 = vsel %vm554, %v2326, 0
    %2337 = vmatprep.subr.bf16.mxu0 0
    %2338 = vmatpush1.bf16.msra.mxu0 0
    %2339 = vmatprep.subr.bf16.mxu0 0
    %2340 = vmatpush1.bf16.msra.mxu0 0
    %2341 = vmatprep.subr.bf16.mxu0 0
    %2342 = vmatpush1.bf16.msra.mxu0 0
    %2343 = vmatprep.subr.bf16.mxu0 0
    %2344 = vmatpush1.bf16.msra.mxu0 0
    %2345 = vmatprep.subr.bf16.mxu0 0
    %2346 = vmatpush1.bf16.msra.mxu0 0
    %2347 = vmatprep.subr.bf16.mxu0 0
    %2348 = vmatpush1.bf16.msra.mxu0 0
    %2349 = vmatprep.subr.bf16.mxu0 0
    %2350 = vmatpush1.bf16.msra.mxu0 %v2335
    %2351 = vmatprep.subr.bf16.mxu0 0
    %2352 = vmatpush1.bf16.msra.mxu0 %v2324
    %2353 = vmatprep.subr.bf16.mxu0 0
    %2354 = vmatpush2.bf16.msra.mxu0 0
    %2355 = vmatprep.subr.bf16.mxu0 0
    %2356 = vmatpush2.bf16.msra.mxu0 0
    %2357 = vmatprep.subr.bf16.mxu0 0
    %2358 = vmatpush2.bf16.msra.mxu0 0
    %2359 = vmatprep.subr.bf16.mxu0 0
    %2360 = vmatpush2.bf16.msra.mxu0 0
    %2361 = vmatprep.subr.bf16.mxu0 0
    %2362 = vmatpush2.bf16.msra.mxu0 0
    %2363 = vmatprep.subr.bf16.mxu0 0
    %2364 = vmatpush2.bf16.msra.mxu0 0
    %2365 = vmatprep.subr.bf16.mxu0 0
    %2366 = vmatpush2.bf16.msra.mxu0 0
    %2367 = vmatprep.subr.bf16.mxu0 0
    %2368 = vmatpush2.bf16.msra.mxu0 0
    %2369 = vmatprep.mubr.bf16.mxu0 0
    %2370 = vmatmul.mubr.bf16.gmra.mxu0 %v2329
    %v2371 = vpop.f32.mrf.mxu0
    %v2372 = vadd.f32 0.0, %v2371
    %v2373 = vpop.f32.mrf.mxu0
    %v2374 = vpop.f32.mrf.mxu0
    %v2375 = vadd.f32 0.0, %v2374
    %v2376 = vpop.f32.mrf.mxu0
    %2377 = vmatprep.mubr.bf16.mxu0 0
    %2378 = vmatmul.mubr.bf16.gmra.mxu0 %v2332
    %v2379 = vpop.f32.mrf.mxu0
    %v2380 = vadd.f32 0.0, %v2379
    %v2381 = vpop.f32.mrf.mxu0
    %v2382 = vpop.f32.mrf.mxu0
    %v2383 = vpop.f32.mrf.mxu0
    %2384 = vdwg.mxu0
    %2385 = vrot.lane.b32.xlu0 %v1873, 80
    %v2386 = vpop.permute.xlu0 %2385
    %2387 = vrot.lane.b32.xlu0 %v1874, 80
    %v2388 = vpop.permute.xlu0 %2387
    %2389 = vrot.lane.b32.xlu0 %v1873, 16
    %v2390 = vpop.permute.xlu0 %2389
    %2391 = vrot.lane.b32.xlu0 %v1874, 16
    %v2392 = vpop.permute.xlu0 %2391
    %v2394 = vsel %vm442, %v2386, 0
    %v2397 = vsel %vm442, %v2388, 0
    %v2400 = vsel %vm442, %v2390, 0
    %v2403 = vsel %vm442, %v2392, 0
    %2405 = vmatprep.subr.bf16.mxu0 0
    %2406 = vmatpush1.bf16.xpose.msra.mxu0 0
    %2407 = vmatprep.subr.bf16.mxu0 0
    %2408 = vmatpush1.bf16.xpose.msra.mxu0 0
    %2409 = vmatprep.subr.bf16.mxu0 0
    %2410 = vmatpush1.bf16.xpose.msra.mxu0 0
    %2411 = vmatprep.subr.bf16.mxu0 0
    %2412 = vmatpush1.bf16.xpose.msra.mxu0 0
    %2413 = vmatprep.subr.bf16.mxu0 0
    %2414 = vmatpush1.bf16.xpose.msra.mxu0 0
    %2415 = vmatprep.subr.bf16.mxu0 0
    %2416 = vmatpush1.bf16.xpose.msra.mxu0 0
    %2417 = vmatprep.subr.bf16.mxu0 0
    %2418 = vmatpush1.bf16.xpose.msra.mxu0 %v2403
    %2419 = vmatprep.subr.bf16.mxu0 0
    %2420 = vmatpush1.bf16.xpose.msra.mxu0 %v2400
    %2421 = vmatprep.subr.bf16.mxu0 0
    %2422 = vmatpush2.bf16.xpose.msra.mxu0 0
    %2423 = vmatprep.subr.bf16.mxu0 0
    %2424 = vmatpush2.bf16.xpose.msra.mxu0 0
    %2425 = vmatprep.subr.bf16.mxu0 0
    %2426 = vmatpush2.bf16.xpose.msra.mxu0 0
    %2427 = vmatprep.subr.bf16.mxu0 0
    %2428 = vmatpush2.bf16.xpose.msra.mxu0 0
    %2429 = vmatprep.subr.bf16.mxu0 0
    %2430 = vmatpush2.bf16.xpose.msra.mxu0 0
    %2431 = vmatprep.subr.bf16.mxu0 0
    %2432 = vmatpush2.bf16.xpose.msra.mxu0 0
    %2433 = vmatprep.subr.bf16.mxu0 0
    %2434 = vmatpush2.bf16.xpose.msra.mxu0 0
    %2435 = vmatprep.subr.bf16.mxu0 0
    %2436 = vmatpush2.bf16.xpose.msra.mxu0 0
    %2437 = vmatprep.mubr.bf16.mxu0 0
    %2438 = vmatmul.mubr.bf16.gmra.mxu0 %v2394
    %v2439 = vpop.f32.mrf.mxu0
    %v2440 = vadd.f32 0.0, %v2439
    %v2441 = vpop.f32.mrf.mxu0
    %v2442 = vpop.f32.mrf.mxu0
    %v2443 = vadd.f32 0.0, %v2442
    %v2444 = vpop.f32.mrf.mxu0
    %2445 = vmatprep.mubr.bf16.mxu0 0
    %2446 = vmatmul.mubr.bf16.gmra.mxu0 %v2397
    %v2447 = vpop.f32.mrf.mxu0
    %v2448 = vadd.f32 0.0, %v2447
    %v2449 = vpop.f32.mrf.mxu0
    %v2450 = vpop.f32.mrf.mxu0
    %v2451 = vpop.f32.mrf.mxu0
    %2452 = vdwg.mxu0
    %v2453 = vmul.f32 %v2440, 0.25
    %v2454 = vmul.f32 %v2443, 0.25
    %v2455 = vmul.f32 %v2448, 0.25
    %v2456 = vadd.f32 %v2453, %v250
    %v2457 = vadd.f32 %v2454, %v251
    %v2458 = vadd.f32 %v2455, %v252
    %v2459 = vsel %vm509, %v2456, -inf
    %2460 = vmax.xlane.f32.xlu0 %v2459
    %v2461 = vpop.xlane.xlu0 %2460
    %v2462 = vsel %vm509, %v2457, -inf
    %2463 = vmax.xlane.f32.xlu0 %v2462
    %v2464 = vpop.xlane.xlu0 %2463
    %v2465 = vsel %vm516, %v2458, -inf
    %2466 = vmax.xlane.f32.xlu0 %v2465
    %v2467 = vpop.xlane.xlu0 %2466
    %v2468 = vsub.f32 %v2456, %v2461
    %v2469 = vsub.f32 %v2457, %v2464
    %v2470 = vsub.f32 %v2458, %v2467
    %v2471 = vmul.f32 %v2468, 1.442695
    %v2472 = vpow.pop %v2471
    %v2473 = vmul.f32 %v2469, 1.442695
    %v2474 = vpow.pop %v2473
    %v2475 = vmul.f32 %v2470, 1.442695
    %v2476 = vpow.pop %v2475
    %v2477 = vsel %vm509, %v2472, 0.0
    %2478 = vadd.xlane.f32.xlu0 %v2477
    %v2479 = vpop.xlane.xlu0 %2478
    %v2480 = vsel %vm509, %v2474, 0.0
    %2481 = vadd.xlane.f32.xlu0 %v2480
    %v2482 = vpop.xlane.xlu0 %2481
    %v2483 = vsel %vm516, %v2476, 0.0
    %2484 = vadd.xlane.f32.xlu0 %v2483
    %v2485 = vpop.xlane.xlu0 %2484
    %v2486 = vrcp.pop %v2479
    %v2487 = vrcp.pop %v2482
    %v2488 = vrcp.pop %v2485
    %v2489 = vmul.f32 %v2472, %v2486
    %v2490 = vmul.f32 %v2474, %v2487
    %v2491 = vmul.f32 %v2476, %v2488
    %v2492 = vpack.c.bf16 %v2490, %v2489
    %v2493 = vpack.c.bf16 %v2491, %v2491
    %2494 = vrot.lane.b32.xlu0 %v1982, 80
    %v2495 = vpop.permute.xlu0 %2494
    %2496 = vrot.lane.b32.xlu0 %v1983, 80
    %v2497 = vpop.permute.xlu0 %2496
    %v2500 = vsel %vm509, %v2492, 0
    %v2503 = vsel %vm509, %v2493, 0
    %v2506 = vsel %vm554, %v2497, 0
    %2508 = vmatprep.subr.bf16.mxu0 0
    %2509 = vmatpush1.bf16.msra.mxu0 0
    %2510 = vmatprep.subr.bf16.mxu0 0
    %2511 = vmatpush1.bf16.msra.mxu0 0
    %2512 = vmatprep.subr.bf16.mxu0 0
    %2513 = vmatpush1.bf16.msra.mxu0 0
    %2514 = vmatprep.subr.bf16.mxu0 0
    %2515 = vmatpush1.bf16.msra.mxu0 0
    %2516 = vmatprep.subr.bf16.mxu0 0
    %2517 = vmatpush1.bf16.msra.mxu0 0
    %2518 = vmatprep.subr.bf16.mxu0 0
    %2519 = vmatpush1.bf16.msra.mxu0 0
    %2520 = vmatprep.subr.bf16.mxu0 0
    %2521 = vmatpush1.bf16.msra.mxu0 %v2506
    %2522 = vmatprep.subr.bf16.mxu0 0
    %2523 = vmatpush1.bf16.msra.mxu0 %v2495
    %2524 = vmatprep.subr.bf16.mxu0 0
    %2525 = vmatpush2.bf16.msra.mxu0 0
    %2526 = vmatprep.subr.bf16.mxu0 0
    %2527 = vmatpush2.bf16.msra.mxu0 0
    %2528 = vmatprep.subr.bf16.mxu0 0
    %2529 = vmatpush2.bf16.msra.mxu0 0
    %2530 = vmatprep.subr.bf16.mxu0 0
    %2531 = vmatpush2.bf16.msra.mxu0 0
    %2532 = vmatprep.subr.bf16.mxu0 0
    %2533 = vmatpush2.bf16.msra.mxu0 0
    %2534 = vmatprep.subr.bf16.mxu0 0
    %2535 = vmatpush2.bf16.msra.mxu0 0
    %2536 = vmatprep.subr.bf16.mxu0 0
    %2537 = vmatpush2.bf16.msra.mxu0 0
    %2538 = vmatprep.subr.bf16.mxu0 0
    %2539 = vmatpush2.bf16.msra.mxu0 0
    %2540 = vmatprep.mubr.bf16.mxu0 0
    %2541 = vmatmul.mubr.bf16.gmra.mxu0 %v2500
    %v2542 = vpop.f32.mrf.mxu0
    %v2543 = vadd.f32 0.0, %v2542
    %v2544 = vpop.f32.mrf.mxu0
    %v2545 = vpop.f32.mrf.mxu0
    %v2546 = vadd.f32 0.0, %v2545
    %v2547 = vpop.f32.mrf.mxu0
    %2548 = vmatprep.mubr.bf16.mxu0 0
    %2549 = vmatmul.mubr.bf16.gmra.mxu0 %v2503
    %v2550 = vpop.f32.mrf.mxu0
    %v2551 = vadd.f32 0.0, %v2550
    %v2552 = vpop.f32.mrf.mxu0
    %v2553 = vpop.f32.mrf.mxu0
    %v2554 = vpop.f32.mrf.mxu0
    %2555 = vdwg.mxu0
    %2559 = vrot.lane.b32.xlu0 %v2201, 16
    %v2560 = vpop.permute.xlu0 %2559
    %2561 = vrot.lane.b32.xlu0 %v2204, 16
    %v2562 = vpop.permute.xlu0 %2561
    %2563 = vrot.lane.b32.xlu0 %v2209, 16
    %v2564 = vpop.permute.xlu0 %2563
    %2571 = vrot.lane.b32.xlu0 %v2372, 32
    %v2572 = vpop.permute.xlu0 %2571
    %2573 = vrot.lane.b32.xlu0 %v2375, 32
    %v2574 = vpop.permute.xlu0 %2573
    %2575 = vrot.lane.b32.xlu0 %v2380, 32
    %v2576 = vpop.permute.xlu0 %2575
    %2583 = vrot.lane.b32.xlu0 %v2543, 48
    %v2584 = vpop.permute.xlu0 %2583
    %2585 = vrot.lane.b32.xlu0 %v2546, 48
    %v2586 = vpop.permute.xlu0 %2585
    %2587 = vrot.lane.b32.xlu0 %v2551, 48
    %v2588 = vpop.permute.xlu0 %2587
    %v2592 = vsel %vm442, %v2028, %v2560
    %v2593 = vsel %vm442, %v2031, %v2562
    %v2594 = vsel %vm442, %v2036, %v2564
    %v2595 = vsel %vm1160, %v2592, %v2572
    %v2596 = vsel %vm1160, %v2593, %v2574
    %v2597 = vsel %vm1160, %v2594, %v2576
    %v2598 = vsel %vm1164, %v2595, %v2584
    %v2599 = vsel %vm1164, %v2596, %v2586
    %v2600 = vsel %vm1164, %v2597, %v2588
    %s2601 = scalar_lea.vmem %s8, 32
    %v2602 = vld [vmem:[%s2601] sm:$0xf]
    %v2603 = vld [vmem:[%s2601 + $0x4] sm:$0xf]
    %v2604 = vld [vmem:[%s2601 + $0x8] sm:$0xf]
    %v2605 = vld [vmem:[%s2601 + $0xc] sm:$0xf]
    %v2606 = vld [vmem:[%s2601 + $0x10] sm:$0xf]
    %v2607 = vld [vmem:[%s2601 + $0x14] sm:$0xf]
    %v2608 = vld [vmem:[%s2601 + $0x18] sm:$0xf]
    %v2609 = vld [vmem:[%s2601 + $0x1c] sm:$0xf]
    %v2610 = vpack.c.bf16 %v2599, %v2598
    %v2611 = vpack.c.bf16 %v2600, %v2600
    %v2620 = vunpack.c.l.b16 %v2602
    %v2621 = vunpack.c.l.b16 %v2603
    %v2622 = vunpack.c.l.b16 %v2604
    %v2623 = vunpack.c.l.b16 %v2605
    %v2624 = vunpack.c.l.b16 %v2606
    %v2625 = vunpack.c.l.b16 %v2607
    %v2626 = vunpack.c.l.b16 %v2608
    %v2627 = vunpack.c.l.b16 %v2609
    %v2628 = vpack.c.b16 %v2621, %v2620
    %v2629 = vpack.c.b16 %v2623, %v2622
    %v2630 = vpack.c.b16 %v2625, %v2624
    %v2631 = vpack.c.b16 %v2627, %v2626
    %v2637 = vsel %vm255, %v2610, 0
    %v2640 = vsel %vm255, %v2611, 0
    %2642 = vmatprep.subr.bf16.mxu0 0
    %2643 = vmatpush1.bf16.msra.mxu0 0
    %2644 = vmatprep.subr.bf16.mxu0 0
    %2645 = vmatpush1.bf16.msra.mxu0 0
    %2646 = vmatprep.subr.bf16.mxu0 0
    %2647 = vmatpush1.bf16.msra.mxu0 0
    %2648 = vmatprep.subr.bf16.mxu0 0
    %2649 = vmatpush1.bf16.msra.mxu0 0
    %2650 = vmatprep.subr.bf16.mxu0 0
    %2651 = vmatpush1.bf16.msra.mxu0 %v2631
    %2652 = vmatprep.subr.bf16.mxu0 0
    %2653 = vmatpush1.bf16.msra.mxu0 %v2630
    %2654 = vmatprep.subr.bf16.mxu0 0
    %2655 = vmatpush1.bf16.msra.mxu0 %v2629
    %2656 = vmatprep.subr.bf16.mxu0 0
    %2657 = vmatpush1.bf16.msra.mxu0 %v2628
    %2658 = vmatprep.subr.bf16.mxu0 0
    %2659 = vmatpush2.bf16.msra.mxu0 0
    %2660 = vmatprep.subr.bf16.mxu0 0
    %2661 = vmatpush2.bf16.msra.mxu0 0
    %2662 = vmatprep.subr.bf16.mxu0 0
    %2663 = vmatpush2.bf16.msra.mxu0 0
    %2664 = vmatprep.subr.bf16.mxu0 0
    %2665 = vmatpush2.bf16.msra.mxu0 0
    %2666 = vmatprep.subr.bf16.mxu0 0
    %2667 = vmatpush2.bf16.msra.mxu0 0
    %2668 = vmatprep.subr.bf16.mxu0 0
    %2669 = vmatpush2.bf16.msra.mxu0 0
    %2670 = vmatprep.subr.bf16.mxu0 0
    %2671 = vmatpush2.bf16.msra.mxu0 0
    %2672 = vmatprep.subr.bf16.mxu0 0
    %2673 = vmatpush2.bf16.msra.mxu0 0
    %2674 = vmatprep.mubr.bf16.mxu0 0
    %2675 = vmatmul.mubr.bf16.gmra.mxu0 %v2637
    %v2676 = vpop.f32.mrf.mxu0
    %v2677 = vadd.f32 0.0, %v2676
    %v2678 = vpop.f32.mrf.mxu0
    %v2679 = vpop.f32.mrf.mxu0
    %v2680 = vadd.f32 0.0, %v2679
    %v2681 = vpop.f32.mrf.mxu0
    %2682 = vmatprep.mubr.bf16.mxu0 0
    %2683 = vmatmul.mubr.bf16.gmra.mxu0 %v2640
    %v2684 = vpop.f32.mrf.mxu0
    %v2685 = vadd.f32 0.0, %v2684
    %v2686 = vpop.f32.mrf.mxu0
    %v2687 = vpop.f32.mrf.mxu0
    %v2688 = vpop.f32.mrf.mxu0
    %2689 = vdwg.mxu0
    %v2690 = vadd.f32 %v1688, %v2677
    %v2691 = vadd.f32 %v1689, %v2680
    %v2692 = vadd.f32 %v1690, %v2685
    %s2693 = scalar_lea.vmem %s9, 1
    %v2694 = vld [vmem:[%s2693] sm:$0x1]
    %v2696 = vlaneseq
    %v2697 = vshrl.u32 %v2696, 7
    %v2698 = vsub.s32 0, %v2697
    %v2699 = vrot.slane %v2694, %v2698
    %v2701 = vadd.f32 %v2690, %v2699
    %v2702 = vadd.f32 %v2691, %v2699
    %v2703 = vadd.f32 %v2692, %v2699
    %s2704 = scalar_lea.vmem %s10, 1
    %v2705 = vld [vmem:[%s2704] sm:$0x1]
    %s2706 = scalar_lea.vmem %s11, 1
    %v2707 = vld [vmem:[%s2706] sm:$0x1]
    %v2708 = vsel %vm255, %v2701, 0.0
    %2709 = vadd.xlane.f32.xlu0 %v2708
    %v2710 = vpop.xlane.xlu0 %2709
    %v2711 = vsel %vm255, %v2702, 0.0
    %2712 = vadd.xlane.f32.xlu0 %v2711
    %v2713 = vpop.xlane.xlu0 %2712
    %v2714 = vsel %vm262, %v2703, 0.0
    %2715 = vadd.xlane.f32.xlu0 %v2714
    %v2716 = vpop.xlane.xlu0 %2715
    %v2717 = vmul.f32 %v2710, %v266
    %v2718 = vmul.f32 %v2713, %v266
    %v2719 = vmul.f32 %v2716, %v266
    %v2720 = vsub.f32 %v2701, %v2717
    %v2721 = vsub.f32 %v2702, %v2718
    %v2722 = vsub.f32 %v2703, %v2719
    %v2723 = vmul.f32 %v2720, %v2720
    %v2724 = vmul.f32 %v2721, %v2721
    %v2725 = vmul.f32 %v2722, %v2722
    %v2726 = vsel %vm255, %v2723, 0.0
    %2727 = vadd.xlane.f32.xlu0 %v2726
    %v2728 = vpop.xlane.xlu0 %2727
    %v2729 = vsel %vm255, %v2724, 0.0
    %2730 = vadd.xlane.f32.xlu0 %v2729
    %v2731 = vpop.xlane.xlu0 %2730
    %v2732 = vsel %vm262, %v2725, 0.0
    %2733 = vadd.xlane.f32.xlu0 %v2732
    %v2734 = vpop.xlane.xlu0 %2733
    %v2735 = vmul.f32 %v2728, %v266
    %v2736 = vmul.f32 %v2731, %v266
    %v2737 = vmul.f32 %v2734, %v266
    %v2738 = vadd.f32 %v2735, 1e-06
    %v2739 = vadd.f32 %v2736, 1e-06
    %v2740 = vadd.f32 %v2737, 1e-06
    %v2741 = vrsqrt.pop %v2738
    %v2742 = vrsqrt.pop %v2739
    %v2743 = vrsqrt.pop %v2740
    %v2744 = vmul.f32 %v2720, %v2741
    %v2745 = vmul.f32 %v2721, %v2742
    %v2746 = vmul.f32 %v2722, %v2743
    %v2748 = vlaneseq
    %v2749 = vshrl.u32 %v2748, 7
    %v2750 = vsub.s32 0, %v2749
    %v2751 = vrot.slane %v2705, %v2750
    %v2753 = vmul.f32 %v2744, %v2751
    %v2754 = vmul.f32 %v2745, %v2751
    %v2755 = vmul.f32 %v2746, %v2751
    %v2757 = vlaneseq
    %v2758 = vshrl.u32 %v2757, 7
    %v2759 = vsub.s32 0, %v2758
    %v2760 = vrot.slane %v2707, %v2759
    %v2762 = vadd.f32 %v2753, %v2760
    %v2763 = vadd.f32 %v2754, %v2760
    %v2764 = vadd.f32 %v2755, %v2760
    %s2765 = scalar_lea.vmem %s12, 64
    %v2766 = vld [vmem:[%s2765] sm:$0xff]
    %v2767 = vld [vmem:[%s2765 + $0x8] sm:$0xff]
    %v2768 = vld [vmem:[%s2765 + $0x10] sm:$0xff]
    %v2769 = vld [vmem:[%s2765 + $0x18] sm:$0xff]
    %v2770 = vld [vmem:[%s2765 + $0x20] sm:$0xff]
    %v2771 = vld [vmem:[%s2765 + $0x28] sm:$0xff]
    %v2772 = vld [vmem:[%s2765 + $0x30] sm:$0xff]
    %v2773 = vld [vmem:[%s2765 + $0x38] sm:$0xff]
    %v2774 = vpack.c.bf16 %v2763, %v2762
    %v2775 = vpack.c.bf16 %v2764, %v2764
    %s2776 = scalar_lea.vmem %s13, 2
    %v2777 = vld [vmem:[%s2776] sm:$0x3]
    %v2779 = vlaneseq
    %v2780 = vshrl.u32 %v2779, 7
    %v2781 = vsub.s32 0, %v2780
    %v2782 = vrot.slane %v2777, %v2781
    %v2783 = vlaneseq
    %v2784 = vshrl.u32 %v2783, 7
    %v2785 = vsub.s32 1, %v2784
    %v2786 = vrot.slane %v2777, %v2785
    %v2797 = vunpack.c.l.b16 %v2766
    %v2798 = vunpack.c.h.b16 %v2766
    %v2799 = vunpack.c.l.b16 %v2767
    %v2800 = vunpack.c.h.b16 %v2767
    %v2801 = vunpack.c.l.b16 %v2768
    %v2802 = vunpack.c.h.b16 %v2768
    %v2803 = vunpack.c.l.b16 %v2769
    %v2804 = vunpack.c.h.b16 %v2769
    %v2805 = vunpack.c.l.b16 %v2770
    %v2806 = vunpack.c.h.b16 %v2770
    %v2807 = vunpack.c.l.b16 %v2771
    %v2808 = vunpack.c.h.b16 %v2771
    %v2809 = vunpack.c.l.b16 %v2772
    %v2810 = vunpack.c.h.b16 %v2772
    %v2811 = vunpack.c.l.b16 %v2773
    %v2812 = vunpack.c.h.b16 %v2773
    %v2813 = vpack.c.b16 %v2799, %v2797
    %v2814 = vpack.c.b16 %v2800, %v2798
    %v2815 = vpack.c.b16 %v2803, %v2801
    %v2816 = vpack.c.b16 %v2804, %v2802
    %v2817 = vpack.c.b16 %v2807, %v2805
    %v2818 = vpack.c.b16 %v2808, %v2806
    %v2819 = vpack.c.b16 %v2811, %v2809
    %v2820 = vpack.c.b16 %v2812, %v2810
    %v2830 = vsel %vm255, %v2774, 0
    %v2833 = vsel %vm255, %v2775, 0
    %2835 = vmatprep.subr.bf16.mxu0 0
    %2836 = vmatpush1.bf16.msra.mxu0 0
    %2837 = vmatprep.subr.bf16.mxu0 0
    %2838 = vmatpush1.bf16.msra.mxu0 0
    %2839 = vmatprep.subr.bf16.mxu0 0
    %2840 = vmatpush1.bf16.msra.mxu0 0
    %2841 = vmatprep.subr.bf16.mxu0 0
    %2842 = vmatpush1.bf16.msra.mxu0 0
    %2843 = vmatprep.subr.bf16.mxu0 %v2820
    %2844 = vmatpush1.bf16.msra.mxu0 %v2819
    %2845 = vmatprep.subr.bf16.mxu0 %v2818
    %2846 = vmatpush1.bf16.msra.mxu0 %v2817
    %2847 = vmatprep.subr.bf16.mxu0 %v2816
    %2848 = vmatpush1.bf16.msra.mxu0 %v2815
    %2849 = vmatprep.subr.bf16.mxu0 %v2814
    %2850 = vmatpush1.bf16.msra.mxu0 %v2813
    %2851 = vmatprep.subr.bf16.mxu0 0
    %2852 = vmatpush2.bf16.msra.mxu0 0
    %2853 = vmatprep.subr.bf16.mxu0 0
    %2854 = vmatpush2.bf16.msra.mxu0 0
    %2855 = vmatprep.subr.bf16.mxu0 0
    %2856 = vmatpush2.bf16.msra.mxu0 0
    %2857 = vmatprep.subr.bf16.mxu0 0
    %2858 = vmatpush2.bf16.msra.mxu0 0
    %2859 = vmatprep.subr.bf16.mxu0 0
    %2860 = vmatpush2.bf16.msra.mxu0 0
    %2861 = vmatprep.subr.bf16.mxu0 0
    %2862 = vmatpush2.bf16.msra.mxu0 0
    %2863 = vmatprep.subr.bf16.mxu0 0
    %2864 = vmatpush2.bf16.msra.mxu0 0
    %2865 = vmatprep.subr.bf16.mxu0 0
    %2866 = vmatpush2.bf16.msra.mxu0 0
    %2867 = vmatprep.mubr.bf16.mxu0 0
    %2868 = vmatmul.mubr.bf16.gmra.mxu0 %v2830
    %v2869 = vpop.f32.mrf.mxu0
    %v2870 = vadd.f32 %v2782, %v2869
    %v2871 = vpop.f32.mrf.mxu0
    %v2872 = vadd.f32 %v2786, %v2871
    %v2873 = vpop.f32.mrf.mxu0
    %v2874 = vadd.f32 %v2782, %v2873
    %v2875 = vpop.f32.mrf.mxu0
    %v2876 = vadd.f32 %v2786, %v2875
    %2877 = vmatprep.mubr.bf16.mxu0 0
    %2878 = vmatmul.mubr.bf16.gmra.mxu0 %v2833
    %v2879 = vpop.f32.mrf.mxu0
    %v2880 = vadd.f32 %v2782, %v2879
    %v2881 = vpop.f32.mrf.mxu0
    %v2882 = vadd.f32 %v2786, %v2881
    %v2883 = vpop.f32.mrf.mxu0
    %v2884 = vpop.f32.mrf.mxu0
    %2885 = vdwg.mxu0
    %v2886 = vmul.f32 %v2870, 0.5
    %v2887 = vmul.f32 %v2872, 0.5
    %v2888 = vmul.f32 %v2874, 0.5
    %v2889 = vmul.f32 %v2876, 0.5
    %v2890 = vmul.f32 %v2880, 0.5
    %v2891 = vmul.f32 %v2882, 0.5
    %v2892 = vmul.f32 %v2870, 0.044715
    %v2893 = vmul.f32 %v2872, 0.044715
    %v2894 = vmul.f32 %v2874, 0.044715
    %v2895 = vmul.f32 %v2876, 0.044715
    %v2896 = vmul.f32 %v2880, 0.044715
    %v2897 = vmul.f32 %v2882, 0.044715
    %v2898 = vmul.f32 %v2892, %v2870
    %v2899 = vmul.f32 %v2893, %v2872
    %v2900 = vmul.f32 %v2894, %v2874
    %v2901 = vmul.f32 %v2895, %v2876
    %v2902 = vmul.f32 %v2896, %v2880
    %v2903 = vmul.f32 %v2897, %v2882
    %v2904 = vmul.f32 %v2898, %v2870
    %v2905 = vmul.f32 %v2899, %v2872
    %v2906 = vmul.f32 %v2900, %v2874
    %v2907 = vmul.f32 %v2901, %v2876
    %v2908 = vmul.f32 %v2902, %v2880
    %v2909 = vmul.f32 %v2903, %v2882
    %v2910 = vadd.f32 %v2870, %v2904
    %v2911 = vadd.f32 %v2872, %v2905
    %v2912 = vadd.f32 %v2874, %v2906
    %v2913 = vadd.f32 %v2876, %v2907
    %v2914 = vadd.f32 %v2880, %v2908
    %v2915 = vadd.f32 %v2882, %v2909
    %v2916 = vmul.f32 %v2910, 0.7978846
    %v2917 = vmul.f32 %v2911, 0.7978846
    %v2918 = vmul.f32 %v2912, 0.7978846
    %v2919 = vmul.f32 %v2913, 0.7978846
    %v2920 = vmul.f32 %v2914, 0.7978846
    %v2921 = vmul.f32 %v2915, 0.7978846
    %v2922 = vtanh.pop %v2916
    %v2923 = vtanh.pop %v2917
    %v2924 = vtanh.pop %v2918
    %v2925 = vtanh.pop %v2919
    %v2926 = vtanh.pop %v2920
    %v2927 = vtanh.pop %v2921
    %v2928 = vadd.f32 %v2922, 1.0
    %v2929 = vadd.f32 %v2923, 1.0
    %v2930 = vadd.f32 %v2924, 1.0
    %v2931 = vadd.f32 %v2925, 1.0
    %v2932 = vadd.f32 %v2926, 1.0
    %v2933 = vadd.f32 %v2927, 1.0
    %v2934 = vmul.f32 %v2886, %v2928
    %v2935 = vmul.f32 %v2887, %v2929
    %v2936 = vmul.f32 %v2888, %v2930
    %v2937 = vmul.f32 %v2889, %v2931
    %v2938 = vmul.f32 %v2890, %v2932
    %v2939 = vmul.f32 %v2891, %v2933
    %s2940 = scalar_lea.vmem %s14, 128
    %v2941 = vld [vmem:[%s2940] sm:$0xf]
    %v2942 = vld [vmem:[%s2940 + $0x4] sm:$0xf]
    %v2943 = vld [vmem:[%s2940 + $0x8] sm:$0xf]
    %v2944 = vld [vmem:[%s2940 + $0xc] sm:$0xf]
    %v2945 = vld [vmem:[%s2940 + $0x10] sm:$0xf]
    %v2946 = vld [vmem:[%s2940 + $0x14] sm:$0xf]
    %v2947 = vld [vmem:[%s2940 + $0x18] sm:$0xf]
    %v2948 = vld [vmem:[%s2940 + $0x1c] sm:$0xf]
    %v2949 = vld [vmem:[%s2940 + $0x20] sm:$0xf]
    %v2950 = vld [vmem:[%s2940 + $0x24] sm:$0xf]
    %v2951 = vld [vmem:[%s2940 + $0x28] sm:$0xf]
    %v2952 = vld [vmem:[%s2940 + $0x2c] sm:$0xf]
    %v2953 = vld [vmem:[%s2940 + $0x30] sm:$0xf]
    %v2954 = vld [vmem:[%s2940 + $0x34] sm:$0xf]
    %v2955 = vld [vmem:[%s2940 + $0x38] sm:$0xf]
    %v2956 = vld [vmem:[%s2940 + $0x3c] sm:$0xf]
    %v2957 = vld [vmem:[%s2940 + $0x40] sm:$0xf]
    %v2958 = vld [vmem:[%s2940 + $0x44] sm:$0xf]
    %v2959 = vld [vmem:[%s2940 + $0x48] sm:$0xf]
    %v2960 = vld [vmem:[%s2940 + $0x4c] sm:$0xf]
    %v2961 = vld [vmem:[%s2940 + $0x50] sm:$0xf]
    %v2962 = vld [vmem:[%s2940 + $0x54] sm:$0xf]
    %v2963 = vld [vmem:[%s2940 + $0x58] sm:$0xf]
    %v2964 = vld [vmem:[%s2940 + $0x5c] sm:$0xf]
    %v2965 = vld [vmem:[%s2940 + $0x60] sm:$0xf]
    %v2966 = vld [vmem:[%s2940 + $0x64] sm:$0xf]
    %v2967 = vld [vmem:[%s2940 + $0x68] sm:$0xf]
    %v2968 = vld [vmem:[%s2940 + $0x6c] sm:$0xf]
    %v2969 = vld [vmem:[%s2940 + $0x70] sm:$0xf]
    %v2970 = vld [vmem:[%s2940 + $0x74] sm:$0xf]
    %v2971 = vld [vmem:[%s2940 + $0x78] sm:$0xf]
    %v2972 = vld [vmem:[%s2940 + $0x7c] sm:$0xf]
    %v2973 = vpack.c.bf16 %v2936, %v2934
    %v2974 = vpack.c.bf16 %v2937, %v2935
    %v2975 = vpack.c.bf16 %v2938, %v2938
    %v2976 = vpack.c.bf16 %v2939, %v2939
    %s2977 = scalar_lea.vmem %s15, 1
    %v2978 = vld [vmem:[%s2977] sm:$0x1]
    %v2980 = vlaneseq
    %v2981 = vshrl.u32 %v2980, 7
    %v2982 = vsub.s32 0, %v2981
    %v2983 = vrot.slane %v2978, %v2982
    %v3017 = vunpack.c.l.b16 %v2941
    %v3018 = vunpack.c.l.b16 %v2942
    %v3019 = vunpack.c.l.b16 %v2943
    %v3020 = vunpack.c.l.b16 %v2944
    %v3021 = vunpack.c.l.b16 %v2945
    %v3022 = vunpack.c.l.b16 %v2946
    %v3023 = vunpack.c.l.b16 %v2947
    %v3024 = vunpack.c.l.b16 %v2948
    %v3025 = vunpack.c.l.b16 %v2949
    %v3026 = vunpack.c.l.b16 %v2950
    %v3027 = vunpack.c.l.b16 %v2951
    %v3028 = vunpack.c.l.b16 %v2952
    %v3029 = vunpack.c.l.b16 %v2953
    %v3030 = vunpack.c.l.b16 %v2954
    %v3031 = vunpack.c.l.b16 %v2955
    %v3032 = vunpack.c.l.b16 %v2956
    %v3033 = vunpack.c.l.b16 %v2957
    %v3034 = vunpack.c.l.b16 %v2958
    %v3035 = vunpack.c.l.b16 %v2959
    %v3036 = vunpack.c.l.b16 %v2960
    %v3037 = vunpack.c.l.b16 %v2961
    %v3038 = vunpack.c.l.b16 %v2962
    %v3039 = vunpack.c.l.b16 %v2963
    %v3040 = vunpack.c.l.b16 %v2964
    %v3041 = vunpack.c.l.b16 %v2965
    %v3042 = vunpack.c.l.b16 %v2966
    %v3043 = vunpack.c.l.b16 %v2967
    %v3044 = vunpack.c.l.b16 %v2968
    %v3045 = vunpack.c.l.b16 %v2969
    %v3046 = vunpack.c.l.b16 %v2970
    %v3047 = vunpack.c.l.b16 %v2971
    %v3048 = vunpack.c.l.b16 %v2972
    %v3049 = vpack.c.b16 %v3018, %v3017
    %v3050 = vpack.c.b16 %v3020, %v3019
    %v3051 = vpack.c.b16 %v3022, %v3021
    %v3052 = vpack.c.b16 %v3024, %v3023
    %v3053 = vpack.c.b16 %v3026, %v3025
    %v3054 = vpack.c.b16 %v3028, %v3027
    %v3055 = vpack.c.b16 %v3030, %v3029
    %v3056 = vpack.c.b16 %v3032, %v3031
    %v3057 = vpack.c.b16 %v3034, %v3033
    %v3058 = vpack.c.b16 %v3036, %v3035
    %v3059 = vpack.c.b16 %v3038, %v3037
    %v3060 = vpack.c.b16 %v3040, %v3039
    %v3061 = vpack.c.b16 %v3042, %v3041
    %v3062 = vpack.c.b16 %v3044, %v3043
    %v3063 = vpack.c.b16 %v3046, %v3045
    %v3064 = vpack.c.b16 %v3048, %v3047
    %3081 = vmatprep.subr.bf16.mxu0 0
    %3082 = vmatpush1.bf16.msra.mxu0 %v3056
    %3083 = vmatprep.subr.bf16.mxu0 0
    %3084 = vmatpush1.bf16.msra.mxu0 %v3055
    %3085 = vmatprep.subr.bf16.mxu0 0
    %3086 = vmatpush1.bf16.msra.mxu0 %v3054
    %3087 = vmatprep.subr.bf16.mxu0 0
    %3088 = vmatpush1.bf16.msra.mxu0 %v3053
    %3089 = vmatprep.subr.bf16.mxu0 0
    %3090 = vmatpush1.bf16.msra.mxu0 %v3052
    %3091 = vmatprep.subr.bf16.mxu0 0
    %3092 = vmatpush1.bf16.msra.mxu0 %v3051
    %3093 = vmatprep.subr.bf16.mxu0 0
    %3094 = vmatpush1.bf16.msra.mxu0 %v3050
    %3095 = vmatprep.subr.bf16.mxu0 0
    %3096 = vmatpush1.bf16.msra.mxu0 %v3049
    %3097 = vmatprep.subr.bf16.mxu0 0
    %3098 = vmatpush2.bf16.msra.mxu0 %v3064
    %3099 = vmatprep.subr.bf16.mxu0 0
    %3100 = vmatpush2.bf16.msra.mxu0 %v3063
    %3101 = vmatprep.subr.bf16.mxu0 0
    %3102 = vmatpush2.bf16.msra.mxu0 %v3062
    %3103 = vmatprep.subr.bf16.mxu0 0
    %3104 = vmatpush2.bf16.msra.mxu0 %v3061
    %3105 = vmatprep.subr.bf16.mxu0 0
    %3106 = vmatpush2.bf16.msra.mxu0 %v3060
    %3107 = vmatprep.subr.bf16.mxu0 0
    %3108 = vmatpush2.bf16.msra.mxu0 %v3059
    %3109 = vmatprep.subr.bf16.mxu0 0
    %3110 = vmatpush2.bf16.msra.mxu0 %v3058
    %3111 = vmatprep.subr.bf16.mxu0 0
    %3112 = vmatpush2.bf16.msra.mxu0 %v3057
    %3113 = vmatprep.mubr.bf16.mxu0 %v2974
    %3114 = vmatmul.mubr.bf16.gmra.mxu0 %v2973
    %v3115 = vpop.f32.mrf.mxu0
    %v3116 = vadd.f32 %v2983, %v3115
    %v3117 = vpop.f32.mrf.mxu0
    %v3118 = vpop.f32.mrf.mxu0
    %v3119 = vadd.f32 %v2983, %v3118
    %v3120 = vpop.f32.mrf.mxu0
    %3121 = vmatprep.mubr.bf16.mxu0 %v2976
    %3122 = vmatmul.mubr.bf16.gmra.mxu0 %v2975
    %v3123 = vpop.f32.mrf.mxu0
    %v3124 = vpop.f32.mrf.mxu0
    %v3125 = vpop.f32.mrf.mxu0
    %v3126 = vpop.f32.mrf.mxu0
    %3127 = vdwg.mxu0
    %v3128 = vadd.f32 %v2701, %v3116
    %v3129 = vadd.f32 %v2702, %v3119
    %v3131 = vrot.slane %v3128, 4
    %v3134 = vrot.slane %v3129, 4
    %vm3136 = vcmask 1040384
    %v3137 = vsel %vm3136, %v3128, %v3131
    %v3138 = vsel %vm554, %v3137, %v3129
    %vm3139 = vcmask 1042432
    %v3140 = vsel %vm3139, %v3138, %v3134
    %v3141 = vld [vmem:[%s16] sm:$0x1]
    %v3142 = vld [vmem:[%s17] sm:$0x1]
    %v3143 = vsel %vm262, %v3140, 0.0
    %3144 = vadd.xlane.f32.xlu0 %v3143
    %v3145 = vpop.xlane.xlu0 %3144
    %v3146 = vmul.f32 %v3145, %v266
    %v3147 = vsub.f32 %v3140, %v3146
    %v3148 = vmul.f32 %v3147, %v3147
    %v3149 = vsel %vm262, %v3148, 0.0
    %3150 = vadd.xlane.f32.xlu0 %v3149
    %v3151 = vpop.xlane.xlu0 %3150
    %v3152 = vmul.f32 %v3151, %v266
    %v3153 = vadd.f32 %v3152, 1e-06
    %v3154 = vrsqrt.pop %v3153
    %v3155 = vmul.f32 %v3147, %v3154
    %v3157 = vlaneseq
    %v3158 = vshrl.u32 %v3157, 7
    %v3159 = vsub.s32 0, %v3158
    %v3160 = vrot.slane %v3141, %v3159
    %v3162 = vmul.f32 %v3155, %v3160
    %v3164 = vlaneseq
    %v3165 = vshrl.u32 %v3164, 7
    %v3166 = vsub.s32 0, %v3165
    %v3167 = vrot.slane %v3142, %v3166
    %v3169 = vadd.f32 %v3162, %v3167
    %v3171 = vrot.slane %v3169, 2
    %v3173 = vsub.f32 %v3169, %v3171
    %v3174 = vmul.f32 %v3173, %v3173
    %vm3175 = vcmask 517120
    %v3176 = vsel %vm3175, %v3174, 0.0
    %3177 = vadd.xlane.f32.xlu0 %v3176
    %v3178 = vpop.xlane.xlu0 %3177
    %v3179 = vsel %vm554, %v3178, 0.0
    %v3180 = vrot.slane %v3179, 4
    %v3181 = vadd.f32 %v3179, %v3180
    %v3182 = vrot.slane %v3181, 2
    %v3183 = vadd.f32 %v3181, %v3182
    %v3184 = vrot.slane %v3183, 1
    %v3185 = vadd.f32 %v3183, %v3184
    %v3186 = vmul.f32 %v3185, 0.0078125
    %vm3187 = vcmask 0
    %3188 = vst.msk [vmem:[#allocation2] sm:$0x1] %vm3187, %v3186
    // Predicated region
    $region74: #{vit_dino_loss.1} parent=1 // pred_check
      _
    $region75: #{vit_dino_loss.1} parent=1 // pred_check_branch
      %3190 = sbr.rel (0) target = $region77
    $region76: #{vit_dino_loss.1} parent=1 // pred_region
      %s3192 = ssub.s32 16, 16
      %3193 = vsyncadd [#allocation3], %s3192
      %s3195 = sshll.u32 [#allocation2], 4
      %s3196 = int_to_ptr.vmem [resolvable:$true] %s3195
      %3198 = dma.vmem_to_hbm [thread:$0]  %s3196, 16, %s18, [#allocation3]
    $region77: #{vit_dino_loss.1} parent=1 // pred_fallthru
      _
    // Predicated region
    $region78: #{vit_dino_loss.1} parent=1 // pred_check
      _
    $region79: #{vit_dino_loss.1} parent=1 // pred_check_branch
      %3200 = sbr.rel (0) target = $region81
    $region80: #{vit_dino_loss.1} parent=1 // pred_region
      %3201 = dma.done [#allocation3], 16
    $region81: #{vit_dino_loss.1} parent=1 // pred_fallthru
      _
    %3202 = vsyncpa [#allocation3], 1

</llo_original>
